<compile_context>
chip_gen: v7x
topology: tpu7x:2x2x1
jax: 0.10.0
libtpu: 0.0.40
codegen_flags: <defaults>
</compile_context>

<pallas_src>
import functools

import jax
import jax.numpy as jnp
from jax.experimental import pallas as pl
from jax.experimental.pallas import tpu as pltpu


def _round_up(n, m):
    return ((n + m - 1) // m) * m


def _pad2(a, rows, cols):
    r, c = a.shape
    return jnp.pad(a, ((0, rows - r), (0, cols - c)))


def _pack_heads_cols(w, b, num_heads, depth, dp, rows_out):
    """Pack a (d_in, H*depth) projection into (rows_out, H*dp) with each head's
    `depth` real columns placed at lane offset h*dp (dp = depth padded to 128)."""
    d_in = w.shape[0]
    w3 = w.reshape(d_in, num_heads, depth)
    w3 = jnp.pad(w3, ((0, rows_out - d_in), (0, 0), (0, dp - depth)))
    b3 = jnp.pad(b.reshape(1, num_heads, depth), ((0, 0), (0, 0), (0, dp - depth)))
    return w3.reshape(rows_out, num_heads * dp), b3.reshape(1, num_heads * dp)


def _pack_heads_rows(w, num_heads, depth, dp, cols_out):
    """Pack a (H*depth, d_out) projection into (H*dp, cols_out) with each head's
    `depth` real rows placed at sublane offset h*dp."""
    d_out = w.shape[1]
    w3 = w.reshape(num_heads, depth, d_out)
    w3 = jnp.pad(w3, ((0, 0), (0, dp - depth), (0, cols_out - d_out)))
    return w3.reshape(num_heads * dp, cols_out)


def _default_tile_n():
    # v6e / v7x have 256-wide MXUs -> 256-row query tiles help fill; v5e's 128-wide MXU
    # is already filled at 128 rows (spend its VMEM headroom elsewhere).
    try:
        kind = jax.devices()[0].device_kind.lower()
    except Exception:
        return 128
    if ("v2" in kind) or ("v3" in kind) or ("v4" in kind) or ("v5" in kind):
        return 128
    return 256


def sentence_attention_kernel(
    xq_ref, kT_ref, v_ref,
    wq_ref, bq_ref, wo_ref, bo_ref,
    g1_ref, be1_ref, w1_ref, b1_ref, w2_ref, b2_ref, g2_ref, be2_ref,
    o_ref,
    *, num_heads, dp, d_model, n_real,
):
    f32 = jnp.float32
    bf16 = jnp.bfloat16

    x_q = xq_ref[...]                          # (tile, Dp) f32 — residual path stays f32
    tile_n, d_pad = x_q.shape
    kT = kT_ref[...]                           # (Dh, Nk) bf16, pre-transposed, grid-invariant
    v = v_ref[...]                             # (Nk, Dh) bf16, grid-invariant
    n_kv = kT.shape[1]

    # ---- query projection: bf16 operands on the MXU, f32 accumulation; scale pre-folded ----
    q = (jnp.dot(x_q.astype(bf16), wq_ref[...], preferred_element_type=f32)
         + bq_ref[...]).astype(bf16)           # (tile, Dh)

    # additive -inf bias for padded key rows (statically skipped when no padding)
    key_bias = None
    if n_kv != n_real:
        key_bias = jnp.where(
            jax.lax.broadcasted_iota(jnp.int32, (1, n_kv), 1) < n_real,
            jnp.float32(0.0), jnp.float32(-1e30))

    # ---- per-head attention; all head slices are lane-aligned (dp % 128 == 0) ----
    # TODO(synk): for very long sequences (notably v7x's 64 MiB VMEM) a flash-style
    # online softmax over K/V tiles would bound the (tile, n_kv) score matrix; full
    # (pre-projected) K/V is resident here.
    ctx_heads = []
    for h in range(num_heads):
        sl = slice(h * dp, (h + 1) * dp)
        scores = jnp.dot(q[:, sl], kT[sl, :], preferred_element_type=f32)   # NN matmul
        if key_bias is not None:
            scores = scores + key_bias
        m = jnp.max(scores, axis=-1, keepdims=True)
        e = jnp.exp(scores - m)
        denom = jnp.sum(e, axis=-1, keepdims=True)
        w = (e * pl.reciprocal(denom, approx=False)).astype(bf16)           # softmax
        ctx_heads.append(jnp.dot(w, v[:, sl], preferred_element_type=f32))  # (tile, dp)

    # concat-then-project: one matmul with contraction K = Dh instead of H small matmuls
    concat = jnp.concatenate(ctx_heads, axis=-1).astype(bf16)               # (tile, Dh)
    attn = jnp.dot(concat, wo_ref[...], preferred_element_type=f32) + bo_ref[...]

    # ---- layernorm over the real d_model columns only (padding stays exactly zero) ----
    col_mask = None
    if d_pad != d_model:
        col_mask = (jax.lax.broadcasted_iota(jnp.int32, (1, d_pad), 1)
                    < d_model).astype(f32)
    inv_d = 1.0 / float(d_model)

    def _layernorm(t, gamma, beta):
        mean = jnp.sum(t, axis=-1, keepdims=True) * inv_d
        c = t - mean
        if col_mask is not None:
            c = c * col_mask
        var = jnp.sum(c * c, axis=-1, keepdims=True) * inv_d            # biased, like nn.LayerNorm
        return c * jax.lax.rsqrt(var + 1e-5) * gamma + beta

    # dropout1 is identity in eval mode
    out1 = _layernorm(x_q + attn, g1_ref[...], be1_ref[...])

    # ---- feed-forward ----
    # TODO(synk): optional int8 (v5e/v6e) / fp8 (v7x) quantization of w1/w2 not attempted.
    h1 = jnp.maximum(
        jnp.dot(out1.astype(bf16), w1_ref[...], preferred_element_type=f32) + b1_ref[...],
        0.0)
    ffn = jnp.dot(h1.astype(bf16), w2_ref[...], preferred_element_type=f32) + b2_ref[...]

    # dropout2 is identity in eval mode
    out2 = _layernorm(out1 + ffn, g2_ref[...], be2_ref[...])
    o_ref[...] = out2.astype(o_ref.dtype)


def _invariant_spec(a, single_buffer):
    nd = a.ndim
    idx = lambda i, _n=nd: (0,) * _n            # bind ndim (avoid late-binding closure bug)
    if single_buffer and hasattr(pl, "Buffered"):
        # grid-invariant block: no need to double-buffer -> halves weight VMEM residency
        return pl.BlockSpec(a.shape, idx, pipeline_mode=pl.Buffered(1))
    return pl.BlockSpec(a.shape, idx)


def sentence_attention_layer(x, params, num_heads, tile_n=None):
    """x: (N, d_model) float32. params: weights in (in, out) layout, (1, dim) biases."""
    N, D = x.shape
    assert D % num_heads == 0
    depth = D // num_heads
    scale = 1.0 / (float(depth) ** 0.5)
    dff = params["w1"].shape[1]
    if tile_n is None:
        tile_n = _default_tile_n()

    f32, bf16 = jnp.float32, jnp.bfloat16
    dp = _round_up(depth, 128)                  # lane-aligned per-head slices
    Dh = num_heads * dp
    Dp = _round_up(D, 128)
    Fp = _round_up(dff, 128)
    Nk = _round_up(max(N, 8), 128)              # lane-dense kv axis for the score matrix

    Np8 = _round_up(max(N, 8), 8)
    if Np8 > tile_n:
        tile = tile_n
        Np = _round_up(N, tile)
    else:
        tile = Np8
        Np = Np8
    grid = (Np // tile,)

    # ---- parameter packing (per-head lane padding, scale folded into Q, bf16 MXU operands) ----
    wq_p, bq_p = _pack_heads_cols(params["wq"] * scale, params["bq"] * scale,
                                  num_heads, depth, dp, Dp)
    wk_p, bk_p = _pack_heads_cols(params["wk"], params["bk"], num_heads, depth, dp, D)
    wv_p, bv_p = _pack_heads_cols(params["wv"], params["bv"], num_heads, depth, dp, D)
    wo_p = _pack_heads_rows(params["wo"], num_heads, depth, dp, Dp)

    wq = wq_p.astype(bf16)
    bq = bq_p.astype(f32)
    wo = wo_p.astype(bf16)
    bo = _pad2(params["bo"], 1, Dp).astype(f32)
    g1 = _pad2(params["g1"], 1, Dp).astype(f32)
    be1 = _pad2(params["be1"], 1, Dp).astype(f32)
    w1 = _pad2(params["w1"], Dp, Fp).astype(bf16)
    b1 = _pad2(params["bf1"], 1, Fp).astype(f32)
    w2 = _pad2(params["w2"], Fp, Dp).astype(bf16)
    b2 = _pad2(params["bf2"], 1, Dp).astype(f32)
    g2 = _pad2(params["g2"], 1, Dp).astype(f32)
    be2 = _pad2(params["be2"], 1, Dp).astype(f32)

    # ---- K/V projection hoisted: computed ONCE (not per query tile) with XLA matmuls ----
    x_bf = x.astype(bf16)
    kfull = jnp.dot(x_bf, wk_p.astype(bf16), preferred_element_type=f32) + bk_p   # (N, Dh)
    vfull = jnp.dot(x_bf, wv_p.astype(bf16), preferred_element_type=f32) + bv_p   # (N, Dh)
    kT = jnp.pad(kfull, ((0, Nk - N), (0, 0))).T.astype(bf16)                     # (Dh, Nk)
    vv = jnp.pad(vfull, ((0, Nk - N), (0, 0))).astype(bf16)                       # (Nk, Dh)

    xp = _pad2(x.astype(f32), Np, Dp)

    args = (xp, kT, vv, wq, bq, wo, bo, g1, be1, w1, b1, w2, b2, g2, be2)

    # ---- explicit VMEM budget: invariant weights + K/V + tiled IO + per-step temps ----
    weight_bytes = sum(int(a.size) * a.dtype.itemsize for a in args[1:])
    io_bytes = 2 * (2 * tile * Dp * 4)                       # x / out tiles, double-buffered f32
    temp_bytes = tile * (6 * Dh + 2 * Nk * 4 + Fp * 4 + 8 * Dp * 4)
    est = weight_bytes + io_bytes + temp_bytes
    vmem_limit = int(min(64 << 20, max(32 << 20, 2 * est)))  # capped for v7x's 64 MiB VMEM

    kernel = functools.partial(
        sentence_attention_kernel,
        num_heads=num_heads, dp=dp, d_model=D, n_real=N,
    )

    def _call(single_buffer):
        in_specs = [pl.BlockSpec((tile, Dp), lambda i: (i, 0))]      # query tile
        in_specs += [_invariant_spec(a, single_buffer) for a in args[1:]]
        return pl.pallas_call(
            kernel,
            out_shape=jax.ShapeDtypeStruct((Np, Dp), x.dtype),
            grid=grid,
            in_specs=in_specs,
            out_specs=pl.BlockSpec((tile, Dp), lambda i: (i, 0)),
            compiler_params=pltpu.CompilerParams(
                dimension_semantics=("parallel",),
                vmem_limit_bytes=vmem_limit,
            ),
        )(*args)

    try:
        out_p = _call(True)
    except Exception:
        # pipeline_mode=pl.Buffered(1) not supported on this jax version -> default buffering
        out_p = _call(False)
    return out_p[:N, :D]


def _ref_forward(x, p, num_heads):
    """Pure-JAX f32 reference mirroring the PyTorch forward (eval mode)."""
    N, D = x.shape
    depth = D // num_heads
    q = x @ p["wq"] + p["bq"][0]
    k = x @ p["wk"] + p["bk"][0]
    v = x @ p["wv"] + p["bv"][0]

    def split(t):
        return jnp.transpose(t.reshape(N, num_heads, depth), (1, 0, 2))

    qh, kh, vh = split(q), split(k), split(v)
    scores = jnp.einsum("hnd,hmd->hnm", qh, kh) / (depth ** 0.5)
    w = jax.nn.softmax(scores, axis=-1)
    o = jnp.einsum("hnm,hmd->hnd", w, vh)
    concat = jnp.transpose(o, (1, 0, 2)).reshape(N, D)
    attn_out = concat @ p["wo"] + p["bo"][0]

    def ln(t, g, b):
        m = jnp.mean(t, -1, keepdims=True)
        var = jnp.mean((t - m) ** 2, -1, keepdims=True)
        return (t - m) * jax.lax.rsqrt(var + 1e-5) * g[0] + b[0]

    out1 = ln(x + attn_out, p["g1"], p["be1"])
    ffn = jnp.maximum(out1 @ p["w1"] + p["bf1"][0], 0.0) @ p["w2"] + p["bf2"][0]
    return ln(out1 + ffn, p["g2"], p["be2"])


if __name__ == "__main__":
    seq, d_model, num_heads, dff = 8, 32, 4, 64
    key = jax.random.PRNGKey(0)
    keys = jax.random.split(key, 20)

    def w(k, shape, scale=0.1):
        return (scale * jax.random.normal(k, shape)).astype(jnp.float32)

    params = {
        "wq": w(keys[0], (d_model, d_model)), "bq": w(keys[1], (1, d_model)),
        "wk": w(keys[2], (d_model, d_model)), "bk": w(keys[3], (1, d_model)),
        "wv": w(keys[4], (d_model, d_model)), "bv": w(keys[5], (1, d_model)),
        "wo": w(keys[6], (d_model, d_model)), "bo": w(keys[7], (1, d_model)),
        "g1": 1.0 + w(keys[8], (1, d_model)), "be1": w(keys[9], (1, d_model)),
        "w1": w(keys[10], (d_model, dff)),    "bf1": w(keys[11], (1, dff)),
        "w2": w(keys[12], (dff, d_model)),    "bf2": w(keys[13], (1, d_model)),
        "g2": 1.0 + w(keys[14], (1, d_model)), "be2": w(keys[15], (1, d_model)),
    }
    x = w(keys[16], (seq, d_model), scale=1.0)

    out = sentence_attention_layer(x, params, num_heads)
    out = jax.block_until_ready(out)

    ref = _ref_forward(x, params, num_heads)
    assert out.shape == (seq, d_model)
    max_err = float(jnp.max(jnp.abs(out - ref)))
    # bf16 matmul operands (f32 accumulation) -> loosened tolerance
    assert jnp.allclose(out, ref, atol=3e-2, rtol=3e-2), f"mismatch vs reference (max abs err {max_err})"

    # TODO(synk): dropout1 / dropout2 are treated as identity (eval mode); no
    # stochastic-dropout equivalent to torch's RNG is attempted.
    print("KERNEL_OK")
</pallas_src>

<mosaic_0001>
module attributes {stable_mosaic.version = 11 : i64} {
  func.func @sentence_attention_kernel(%arg0: i32, %arg1: memref<8x128xf32, #tpu.memory_space<vmem>>, %arg2: memref<512x128xbf16, #tpu.memory_space<vmem>>, %arg3: memref<128x512xbf16, #tpu.memory_space<vmem>>, %arg4: memref<128x512xbf16, #tpu.memory_space<vmem>>, %arg5: memref<1x512xf32, #tpu.memory_space<vmem>>, %arg6: memref<512x128xbf16, #tpu.memory_space<vmem>>, %arg7: memref<1x128xf32, #tpu.memory_space<vmem>>, %arg8: memref<1x128xf32, #tpu.memory_space<vmem>>, %arg9: memref<1x128xf32, #tpu.memory_space<vmem>>, %arg10: memref<128x128xbf16, #tpu.memory_space<vmem>>, %arg11: memref<1x128xf32, #tpu.memory_space<vmem>>, %arg12: memref<128x128xbf16, #tpu.memory_space<vmem>>, %arg13: memref<1x128xf32, #tpu.memory_space<vmem>>, %arg14: memref<1x128xf32, #tpu.memory_space<vmem>>, %arg15: memref<1x128xf32, #tpu.memory_space<vmem>>, %arg16: memref<8x128xf32, #tpu.memory_space<vmem>>) attributes {dimension_semantics = [#tpu.dimension_semantics<parallel>], iteration_bounds = array<i64: 1>, scalar_prefetch = 0 : i64, scratch_operands = 0 : i64, tpu.core_type = #tpu.core_type<tc>, window_params = [{transform_indices = @transform_0, window_bounds = array<i64: 8, 128>}, {pipeline_mode = #tpu.pipeline_mode<synchronous>, transform_indices = @transform_1, window_bounds = array<i64: 512, 128>}, {pipeline_mode = #tpu.pipeline_mode<synchronous>, transform_indices = @transform_2, window_bounds = array<i64: 128, 512>}, {pipeline_mode = #tpu.pipeline_mode<synchronous>, transform_indices = @transform_3, window_bounds = array<i64: 128, 512>}, {pipeline_mode = #tpu.pipeline_mode<synchronous>, transform_indices = @transform_4, window_bounds = array<i64: 1, 512>}, {pipeline_mode = #tpu.pipeline_mode<synchronous>, transform_indices = @transform_5, window_bounds = array<i64: 512, 128>}, {pipeline_mode = #tpu.pipeline_mode<synchronous>, transform_indices = @transform_6, window_bounds = array<i64: 1, 128>}, {pipeline_mode = #tpu.pipeline_mode<synchronous>, transform_indices = @transform_7, window_bounds = array<i64: 1, 128>}, {pipeline_mode = #tpu.pipeline_mode<synchronous>, transform_indices = @transform_8, window_bounds = array<i64: 1, 128>}, {pipeline_mode = #tpu.pipeline_mode<synchronous>, transform_indices = @transform_9, window_bounds = array<i64: 128, 128>}, {pipeline_mode = #tpu.pipeline_mode<synchronous>, transform_indices = @transform_10, window_bounds = array<i64: 1, 128>}, {pipeline_mode = #tpu.pipeline_mode<synchronous>, transform_indices = @transform_11, window_bounds = array<i64: 128, 128>}, {pipeline_mode = #tpu.pipeline_mode<synchronous>, transform_indices = @transform_12, window_bounds = array<i64: 1, 128>}, {pipeline_mode = #tpu.pipeline_mode<synchronous>, transform_indices = @transform_13, window_bounds = array<i64: 1, 128>}, {pipeline_mode = #tpu.pipeline_mode<synchronous>, transform_indices = @transform_14, window_bounds = array<i64: 1, 128>}, {transform_indices = @transform_15, window_bounds = array<i64: 8, 128>}]} {
    %c0 = arith.constant 0 : index
    %c0_0 = arith.constant 0 : index
    %0 = vector.load %arg1[%c0, %c0_0] : memref<8x128xf32, #tpu.memory_space<vmem>>, vector<8x128xf32>
    %c0_1 = arith.constant 0 : index
    %c0_2 = arith.constant 0 : index
    %1 = vector.load %arg2[%c0_1, %c0_2] : memref<512x128xbf16, #tpu.memory_space<vmem>>, vector<512x128xbf16>
    %c0_3 = arith.constant 0 : index
    %c0_4 = arith.constant 0 : index
    %2 = vector.load %arg3[%c0_3, %c0_4] : memref<128x512xbf16, #tpu.memory_space<vmem>>, vector<128x512xbf16>
    %3 = arith.truncf %0 : vector<8x128xf32> to vector<8x128xbf16>
    %c0_5 = arith.constant 0 : index
    %c0_6 = arith.constant 0 : index
    %4 = vector.load %arg4[%c0_5, %c0_6] : memref<128x512xbf16, #tpu.memory_space<vmem>>, vector<128x512xbf16>
    %cst = arith.constant dense<0.000000e+00> : vector<8x512xf32>
    %5 = tpu.matmul %3, %4, %cst {dimension_numbers = #tpu.dot_dimension_numbers<[1], [0], [0], [1], [0, 0, 1, 1], [], []>} : vector<8x128xbf16>, vector<128x512xbf16>, vector<8x512xf32> -> vector<8x512xf32>
    %c0_7 = arith.constant 0 : index
    %c0_8 = arith.constant 0 : index
    %6 = vector.load %arg5[%c0_7, %c0_8] : memref<1x512xf32, #tpu.memory_space<vmem>>, vector<1x512xf32>
    %7 = vector.broadcast %6 : vector<1x512xf32> to vector<8x512xf32>
    %8 = arith.addf %5, %7 : vector<8x512xf32>
    %9 = arith.truncf %8 : vector<8x512xf32> to vector<8x512xbf16>
    %10 = tpu.iota {dimensions = array<i32: 1>} : vector<1x128xi32>
    %c8_i32 = arith.constant 8 : i32
    %11 = vector.broadcast %c8_i32 : i32 to vector<1x128xi32>
    %12 = arith.cmpi slt, %10, %11 : vector<1x128xi32>
    %cst_9 = arith.constant 0.000000e+00 : f32
    %cst_10 = arith.constant -1.000000e+30 : f32
    %13 = vector.broadcast %cst_9 : f32 to vector<1x128xf32>
    %14 = vector.broadcast %cst_10 : f32 to vector<1x128xf32>
    %15 = arith.select %12, %13, %14 : vector<1x128xi1>, vector<1x128xf32>
    %16 = vector.extract_strided_slice %9 {offsets = [0, 0], sizes = [8, 128], strides = [1, 1]} : vector<8x512xbf16> to vector<8x128xbf16>
    %17 = vector.extract_strided_slice %1 {offsets = [0, 0], sizes = [128, 128], strides = [1, 1]} : vector<512x128xbf16> to vector<128x128xbf16>
    %cst_11 = arith.constant dense<0.000000e+00> : vector<8x128xf32>
    %18 = tpu.matmul %16, %17, %cst_11 {dimension_numbers = #tpu.dot_dimension_numbers<[1], [0], [0], [1], [0, 0, 1, 1], [], []>} : vector<8x128xbf16>, vector<128x128xbf16>, vector<8x128xf32> -> vector<8x128xf32>
    %19 = vector.broadcast %15 : vector<1x128xf32> to vector<8x128xf32>
    %20 = arith.addf %18, %19 : vector<8x128xf32>
    %cst_12 = arith.constant dense<0xFF800000> : vector<8xf32>
    %21 = vector.multi_reduction <maximumf>, %20, %cst_12 [1] : vector<8x128xf32> to vector<8xf32>
    %22 = vector.shape_cast %21 : vector<8xf32> to vector<8x1xf32>
    %23 = vector.broadcast %22 : vector<8x1xf32> to vector<8x128xf32>
    %24 = arith.subf %20, %23 : vector<8x128xf32>
    %25 = math.exp %24 : vector<8x128xf32>
    %cst_13 = arith.constant dense<0.000000e+00> : vector<8xf32>
    %26 = vector.multi_reduction <add>, %25, %cst_13 [1] : vector<8x128xf32> to vector<8xf32>
    %27 = vector.shape_cast %26 : vector<8xf32> to vector<8x1xf32>
    %28 = tpu.reciprocal %27 : vector<8x1xf32> -> vector<8x1xf32>
    %29 = vector.broadcast %28 : vector<8x1xf32> to vector<8x128xf32>
    %30 = arith.mulf %25, %29 : vector<8x128xf32>
    %31 = arith.truncf %30 : vector<8x128xf32> to vector<8x128xbf16>
    %32 = vector.extract_strided_slice %2 {offsets = [0, 0], sizes = [128, 128], strides = [1, 1]} : vector<128x512xbf16> to vector<128x128xbf16>
    %cst_14 = arith.constant dense<0.000000e+00> : vector<8x128xf32>
    %33 = tpu.matmul %31, %32, %cst_14 {dimension_numbers = #tpu.dot_dimension_numbers<[1], [0], [0], [1], [0, 0, 1, 1], [], []>} : vector<8x128xbf16>, vector<128x128xbf16>, vector<8x128xf32> -> vector<8x128xf32>
    %34 = vector.extract_strided_slice %9 {offsets = [0, 128], sizes = [8, 128], strides = [1, 1]} : vector<8x512xbf16> to vector<8x128xbf16>
    %35 = vector.extract_strided_slice %1 {offsets = [128, 0], sizes = [128, 128], strides = [1, 1]} : vector<512x128xbf16> to vector<128x128xbf16>
    %cst_15 = arith.constant dense<0.000000e+00> : vector<8x128xf32>
    %36 = tpu.matmul %34, %35, %cst_15 {dimension_numbers = #tpu.dot_dimension_numbers<[1], [0], [0], [1], [0, 0, 1, 1], [], []>} : vector<8x128xbf16>, vector<128x128xbf16>, vector<8x128xf32> -> vector<8x128xf32>
    %37 = vector.broadcast %15 : vector<1x128xf32> to vector<8x128xf32>
    %38 = arith.addf %36, %37 : vector<8x128xf32>
    %cst_16 = arith.constant dense<0xFF800000> : vector<8xf32>
    %39 = vector.multi_reduction <maximumf>, %38, %cst_16 [1] : vector<8x128xf32> to vector<8xf32>
    %40 = vector.shape_cast %39 : vector<8xf32> to vector<8x1xf32>
    %41 = vector.broadcast %40 : vector<8x1xf32> to vector<8x128xf32>
    %42 = arith.subf %38, %41 : vector<8x128xf32>
    %43 = math.exp %42 : vector<8x128xf32>
    %cst_17 = arith.constant dense<0.000000e+00> : vector<8xf32>
    %44 = vector.multi_reduction <add>, %43, %cst_17 [1] : vector<8x128xf32> to vector<8xf32>
    %45 = vector.shape_cast %44 : vector<8xf32> to vector<8x1xf32>
    %46 = tpu.reciprocal %45 : vector<8x1xf32> -> vector<8x1xf32>
    %47 = vector.broadcast %46 : vector<8x1xf32> to vector<8x128xf32>
    %48 = arith.mulf %43, %47 : vector<8x128xf32>
    %49 = arith.truncf %48 : vector<8x128xf32> to vector<8x128xbf16>
    %50 = vector.extract_strided_slice %2 {offsets = [0, 128], sizes = [128, 128], strides = [1, 1]} : vector<128x512xbf16> to vector<128x128xbf16>
    %cst_18 = arith.constant dense<0.000000e+00> : vector<8x128xf32>
    %51 = tpu.matmul %49, %50, %cst_18 {dimension_numbers = #tpu.dot_dimension_numbers<[1], [0], [0], [1], [0, 0, 1, 1], [], []>} : vector<8x128xbf16>, vector<128x128xbf16>, vector<8x128xf32> -> vector<8x128xf32>
    %52 = vector.extract_strided_slice %9 {offsets = [0, 256], sizes = [8, 128], strides = [1, 1]} : vector<8x512xbf16> to vector<8x128xbf16>
    %53 = vector.extract_strided_slice %1 {offsets = [256, 0], sizes = [128, 128], strides = [1, 1]} : vector<512x128xbf16> to vector<128x128xbf16>
    %cst_19 = arith.constant dense<0.000000e+00> : vector<8x128xf32>
    %54 = tpu.matmul %52, %53, %cst_19 {dimension_numbers = #tpu.dot_dimension_numbers<[1], [0], [0], [1], [0, 0, 1, 1], [], []>} : vector<8x128xbf16>, vector<128x128xbf16>, vector<8x128xf32> -> vector<8x128xf32>
    %55 = vector.broadcast %15 : vector<1x128xf32> to vector<8x128xf32>
    %56 = arith.addf %54, %55 : vector<8x128xf32>
    %cst_20 = arith.constant dense<0xFF800000> : vector<8xf32>
    %57 = vector.multi_reduction <maximumf>, %56, %cst_20 [1] : vector<8x128xf32> to vector<8xf32>
    %58 = vector.shape_cast %57 : vector<8xf32> to vector<8x1xf32>
    %59 = vector.broadcast %58 : vector<8x1xf32> to vector<8x128xf32>
    %60 = arith.subf %56, %59 : vector<8x128xf32>
    %61 = math.exp %60 : vector<8x128xf32>
    %cst_21 = arith.constant dense<0.000000e+00> : vector<8xf32>
    %62 = vector.multi_reduction <add>, %61, %cst_21 [1] : vector<8x128xf32> to vector<8xf32>
    %63 = vector.shape_cast %62 : vector<8xf32> to vector<8x1xf32>
    %64 = tpu.reciprocal %63 : vector<8x1xf32> -> vector<8x1xf32>
    %65 = vector.broadcast %64 : vector<8x1xf32> to vector<8x128xf32>
    %66 = arith.mulf %61, %65 : vector<8x128xf32>
    %67 = arith.truncf %66 : vector<8x128xf32> to vector<8x128xbf16>
    %68 = vector.extract_strided_slice %2 {offsets = [0, 256], sizes = [128, 128], strides = [1, 1]} : vector<128x512xbf16> to vector<128x128xbf16>
    %cst_22 = arith.constant dense<0.000000e+00> : vector<8x128xf32>
    %69 = tpu.matmul %67, %68, %cst_22 {dimension_numbers = #tpu.dot_dimension_numbers<[1], [0], [0], [1], [0, 0, 1, 1], [], []>} : vector<8x128xbf16>, vector<128x128xbf16>, vector<8x128xf32> -> vector<8x128xf32>
    %70 = vector.extract_strided_slice %9 {offsets = [0, 384], sizes = [8, 128], strides = [1, 1]} : vector<8x512xbf16> to vector<8x128xbf16>
    %71 = vector.extract_strided_slice %1 {offsets = [384, 0], sizes = [128, 128], strides = [1, 1]} : vector<512x128xbf16> to vector<128x128xbf16>
    %cst_23 = arith.constant dense<0.000000e+00> : vector<8x128xf32>
    %72 = tpu.matmul %70, %71, %cst_23 {dimension_numbers = #tpu.dot_dimension_numbers<[1], [0], [0], [1], [0, 0, 1, 1], [], []>} : vector<8x128xbf16>, vector<128x128xbf16>, vector<8x128xf32> -> vector<8x128xf32>
    %73 = vector.broadcast %15 : vector<1x128xf32> to vector<8x128xf32>
    %74 = arith.addf %72, %73 : vector<8x128xf32>
    %cst_24 = arith.constant dense<0xFF800000> : vector<8xf32>
    %75 = vector.multi_reduction <maximumf>, %74, %cst_24 [1] : vector<8x128xf32> to vector<8xf32>
    %76 = vector.shape_cast %75 : vector<8xf32> to vector<8x1xf32>
    %77 = vector.broadcast %76 : vector<8x1xf32> to vector<8x128xf32>
    %78 = arith.subf %74, %77 : vector<8x128xf32>
    %79 = math.exp %78 : vector<8x128xf32>
    %cst_25 = arith.constant dense<0.000000e+00> : vector<8xf32>
    %80 = vector.multi_reduction <add>, %79, %cst_25 [1] : vector<8x128xf32> to vector<8xf32>
    %81 = vector.shape_cast %80 : vector<8xf32> to vector<8x1xf32>
    %82 = tpu.reciprocal %81 : vector<8x1xf32> -> vector<8x1xf32>
    %83 = vector.broadcast %82 : vector<8x1xf32> to vector<8x128xf32>
    %84 = arith.mulf %79, %83 : vector<8x128xf32>
    %85 = arith.truncf %84 : vector<8x128xf32> to vector<8x128xbf16>
    %86 = vector.extract_strided_slice %2 {offsets = [0, 384], sizes = [128, 128], strides = [1, 1]} : vector<128x512xbf16> to vector<128x128xbf16>
    %cst_26 = arith.constant dense<0.000000e+00> : vector<8x128xf32>
    %87 = tpu.matmul %85, %86, %cst_26 {dimension_numbers = #tpu.dot_dimension_numbers<[1], [0], [0], [1], [0, 0, 1, 1], [], []>} : vector<8x128xbf16>, vector<128x128xbf16>, vector<8x128xf32> -> vector<8x128xf32>
    %88 = tpu.concatenate %33, %51, %69, %87 in 1 : vector<8x128xf32>, vector<8x128xf32>, vector<8x128xf32>, vector<8x128xf32> -> vector<8x512xf32>
    %89 = arith.truncf %88 : vector<8x512xf32> to vector<8x512xbf16>
    %c0_27 = arith.constant 0 : index
    %c0_28 = arith.constant 0 : index
    %90 = vector.load %arg6[%c0_27, %c0_28] : memref<512x128xbf16, #tpu.memory_space<vmem>>, vector<512x128xbf16>
    %cst_29 = arith.constant dense<0.000000e+00> : vector<8x128xf32>
    %91 = tpu.matmul %89, %90, %cst_29 {dimension_numbers = #tpu.dot_dimension_numbers<[1], [0], [0], [1], [0, 0, 1, 1], [], []>} : vector<8x512xbf16>, vector<512x128xbf16>, vector<8x128xf32> -> vector<8x128xf32>
    %c0_30 = arith.constant 0 : index
    %c0_31 = arith.constant 0 : index
    %92 = vector.load %arg7[%c0_30, %c0_31] : memref<1x128xf32, #tpu.memory_space<vmem>>, vector<1x128xf32>
    %93 = vector.broadcast %92 : vector<1x128xf32> to vector<8x128xf32>
    %94 = arith.addf %91, %93 : vector<8x128xf32>
    %95 = tpu.iota {dimensions = array<i32: 1>} : vector<1x128xi32>
    %c32_i32 = arith.constant 32 : i32
    %96 = vector.broadcast %c32_i32 : i32 to vector<1x128xi32>
    %97 = arith.cmpi slt, %95, %96 : vector<1x128xi32>
    %98 = arith.extui %97 : vector<1x128xi1> to vector<1x128xi32>
    %99 = arith.sitofp %98 : vector<1x128xi32> to vector<1x128xf32>
    %100 = arith.addf %0, %94 : vector<8x128xf32>
    %c0_32 = arith.constant 0 : index
    %c0_33 = arith.constant 0 : index
    %101 = vector.load %arg8[%c0_32, %c0_33] : memref<1x128xf32, #tpu.memory_space<vmem>>, vector<1x128xf32>
    %c0_34 = arith.constant 0 : index
    %c0_35 = arith.constant 0 : index
    %102 = vector.load %arg9[%c0_34, %c0_35] : memref<1x128xf32, #tpu.memory_space<vmem>>, vector<1x128xf32>
    %cst_36 = arith.constant dense<0.000000e+00> : vector<8xf32>
    %103 = vector.multi_reduction <add>, %100, %cst_36 [1] : vector<8x128xf32> to vector<8xf32>
    %104 = vector.shape_cast %103 : vector<8xf32> to vector<8x1xf32>
    %cst_37 = arith.constant 3.125000e-02 : f32
    %105 = vector.broadcast %cst_37 : f32 to vector<8x1xf32>
    %106 = arith.mulf %104, %105 : vector<8x1xf32>
    %107 = vector.broadcast %106 : vector<8x1xf32> to vector<8x128xf32>
    %108 = arith.subf %100, %107 : vector<8x128xf32>
    %109 = vector.broadcast %99 : vector<1x128xf32> to vector<8x128xf32>
    %110 = arith.mulf %108, %109 : vector<8x128xf32>
    %111 = arith.mulf %110, %110 : vector<8x128xf32>
    %cst_38 = arith.constant dense<0.000000e+00> : vector<8xf32>
    %112 = vector.multi_reduction <add>, %111, %cst_38 [1] : vector<8x128xf32> to vector<8xf32>
    %113 = vector.shape_cast %112 : vector<8xf32> to vector<8x1xf32>
    %cst_39 = arith.constant 3.125000e-02 : f32
    %114 = vector.broadcast %cst_39 : f32 to vector<8x1xf32>
    %115 = arith.mulf %113, %114 : vector<8x1xf32>
    %cst_40 = arith.constant 9.99999974E-6 : f32
    %116 = vector.broadcast %cst_40 : f32 to vector<8x1xf32>
    %117 = arith.addf %115, %116 : vector<8x1xf32>
    %118 = math.rsqrt %117 : vector<8x1xf32>
    %119 = vector.broadcast %118 : vector<8x1xf32> to vector<8x128xf32>
    %120 = arith.mulf %110, %119 : vector<8x128xf32>
    %121 = vector.broadcast %101 : vector<1x128xf32> to vector<8x128xf32>
    %122 = arith.mulf %120, %121 : vector<8x128xf32>
    %123 = vector.broadcast %102 : vector<1x128xf32> to vector<8x128xf32>
    %124 = arith.addf %122, %123 : vector<8x128xf32>
    %125 = arith.truncf %124 : vector<8x128xf32> to vector<8x128xbf16>
    %c0_41 = arith.constant 0 : index
    %c0_42 = arith.constant 0 : index
    %126 = vector.load %arg10[%c0_41, %c0_42] : memref<128x128xbf16, #tpu.memory_space<vmem>>, vector<128x128xbf16>
    %cst_43 = arith.constant dense<0.000000e+00> : vector<8x128xf32>
    %127 = tpu.matmul %125, %126, %cst_43 {dimension_numbers = #tpu.dot_dimension_numbers<[1], [0], [0], [1], [0, 0, 1, 1], [], []>} : vector<8x128xbf16>, vector<128x128xbf16>, vector<8x128xf32> -> vector<8x128xf32>
    %c0_44 = arith.constant 0 : index
    %c0_45 = arith.constant 0 : index
    %128 = vector.load %arg11[%c0_44, %c0_45] : memref<1x128xf32, #tpu.memory_space<vmem>>, vector<1x128xf32>
    %129 = vector.broadcast %128 : vector<1x128xf32> to vector<8x128xf32>
    %130 = arith.addf %127, %129 : vector<8x128xf32>
    %cst_46 = arith.constant 0.000000e+00 : f32
    %131 = vector.broadcast %cst_46 : f32 to vector<8x128xf32>
    %132 = arith.maximumf %130, %131 : vector<8x128xf32>
    %133 = arith.truncf %132 : vector<8x128xf32> to vector<8x128xbf16>
    %c0_47 = arith.constant 0 : index
    %c0_48 = arith.constant 0 : index
    %134 = vector.load %arg12[%c0_47, %c0_48] : memref<128x128xbf16, #tpu.memory_space<vmem>>, vector<128x128xbf16>
    %cst_49 = arith.constant dense<0.000000e+00> : vector<8x128xf32>
    %135 = tpu.matmul %133, %134, %cst_49 {dimension_numbers = #tpu.dot_dimension_numbers<[1], [0], [0], [1], [0, 0, 1, 1], [], []>} : vector<8x128xbf16>, vector<128x128xbf16>, vector<8x128xf32> -> vector<8x128xf32>
    %c0_50 = arith.constant 0 : index
    %c0_51 = arith.constant 0 : index
    %136 = vector.load %arg13[%c0_50, %c0_51] : memref<1x128xf32, #tpu.memory_space<vmem>>, vector<1x128xf32>
    %137 = vector.broadcast %136 : vector<1x128xf32> to vector<8x128xf32>
    %138 = arith.addf %135, %137 : vector<8x128xf32>
    %139 = arith.addf %124, %138 : vector<8x128xf32>
    %c0_52 = arith.constant 0 : index
    %c0_53 = arith.constant 0 : index
    %140 = vector.load %arg14[%c0_52, %c0_53] : memref<1x128xf32, #tpu.memory_space<vmem>>, vector<1x128xf32>
    %c0_54 = arith.constant 0 : index
    %c0_55 = arith.constant 0 : index
    %141 = vector.load %arg15[%c0_54, %c0_55] : memref<1x128xf32, #tpu.memory_space<vmem>>, vector<1x128xf32>
    %cst_56 = arith.constant dense<0.000000e+00> : vector<8xf32>
    %142 = vector.multi_reduction <add>, %139, %cst_56 [1] : vector<8x128xf32> to vector<8xf32>
    %143 = vector.shape_cast %142 : vector<8xf32> to vector<8x1xf32>
    %cst_57 = arith.constant 3.125000e-02 : f32
    %144 = vector.broadcast %cst_57 : f32 to vector<8x1xf32>
    %145 = arith.mulf %143, %144 : vector<8x1xf32>
    %146 = vector.broadcast %145 : vector<8x1xf32> to vector<8x128xf32>
    %147 = arith.subf %139, %146 : vector<8x128xf32>
    %148 = vector.broadcast %99 : vector<1x128xf32> to vector<8x128xf32>
    %149 = arith.mulf %147, %148 : vector<8x128xf32>
    %150 = arith.mulf %149, %149 : vector<8x128xf32>
    %cst_58 = arith.constant dense<0.000000e+00> : vector<8xf32>
    %151 = vector.multi_reduction <add>, %150, %cst_58 [1] : vector<8x128xf32> to vector<8xf32>
    %152 = vector.shape_cast %151 : vector<8xf32> to vector<8x1xf32>
    %cst_59 = arith.constant 3.125000e-02 : f32
    %153 = vector.broadcast %cst_59 : f32 to vector<8x1xf32>
    %154 = arith.mulf %152, %153 : vector<8x1xf32>
    %cst_60 = arith.constant 9.99999974E-6 : f32
    %155 = vector.broadcast %cst_60 : f32 to vector<8x1xf32>
    %156 = arith.addf %154, %155 : vector<8x1xf32>
    %157 = math.rsqrt %156 : vector<8x1xf32>
    %158 = vector.broadcast %157 : vector<8x1xf32> to vector<8x128xf32>
    %159 = arith.mulf %149, %158 : vector<8x128xf32>
    %160 = vector.broadcast %140 : vector<1x128xf32> to vector<8x128xf32>
    %161 = arith.mulf %159, %160 : vector<8x128xf32>
    %162 = vector.broadcast %141 : vector<1x128xf32> to vector<8x128xf32>
    %163 = arith.addf %161, %162 : vector<8x128xf32>
    %c0_61 = arith.constant 0 : index
    %c0_62 = arith.constant 0 : index
    %164 = vector.load %arg16[%c0_61, %c0_62] : memref<8x128xf32, #tpu.memory_space<vmem>>, vector<8x128xf32>
    tpu.vector_store %arg16[%c0_61, %c0_62], %163 {strides = array<i32>} : memref<8x128xf32, #tpu.memory_space<vmem>>, vector<8x128xf32>,
    return
  }
  func.func @transform_0(%arg0: i32) -> (i32, i32) {
    %c0_i32 = arith.constant 0 : i32
    %c0_i32_0 = arith.constant 0 : i32
    return %arg0, %c0_i32 : i32, i32
  }
  func.func @transform_1(%arg0: i32) -> (i32, i32) {
    %c0_i32 = arith.constant 0 : i32
    %c0_i32_0 = arith.constant 0 : i32
    %c0_i32_1 = arith.constant 0 : i32
    return %c0_i32, %c0_i32_0 : i32, i32
  }
  func.func @transform_2(%arg0: i32) -> (i32, i32) {
    %c0_i32 = arith.constant 0 : i32
    %c0_i32_0 = arith.constant 0 : i32
    %c0_i32_1 = arith.constant 0 : i32
    return %c0_i32, %c0_i32_0 : i32, i32
  }
  func.func @transform_3(%arg0: i32) -> (i32, i32) {
    %c0_i32 = arith.constant 0 : i32
    %c0_i32_0 = arith.constant 0 : i32
    %c0_i32_1 = arith.constant 0 : i32
    return %c0_i32, %c0_i32_0 : i32, i32
  }
  func.func @transform_4(%arg0: i32) -> (i32, i32) {
    %c0_i32 = arith.constant 0 : i32
    %c0_i32_0 = arith.constant 0 : i32
    %c0_i32_1 = arith.constant 0 : i32
    return %c0_i32, %c0_i32_0 : i32, i32
  }
  func.func @transform_5(%arg0: i32) -> (i32, i32) {
    %c0_i32 = arith.constant 0 : i32
    %c0_i32_0 = arith.constant 0 : i32
    %c0_i32_1 = arith.constant 0 : i32
    return %c0_i32, %c0_i32_0 : i32, i32
  }
  func.func @transform_6(%arg0: i32) -> (i32, i32) {
    %c0_i32 = arith.constant 0 : i32
    %c0_i32_0 = arith.constant 0 : i32
    %c0_i32_1 = arith.constant 0 : i32
    return %c0_i32, %c0_i32_0 : i32, i32
  }
  func.func @transform_7(%arg0: i32) -> (i32, i32) {
    %c0_i32 = arith.constant 0 : i32
    %c0_i32_0 = arith.constant 0 : i32
    %c0_i32_1 = arith.constant 0 : i32
    return %c0_i32, %c0_i32_0 : i32, i32
  }
  func.func @transform_8(%arg0: i32) -> (i32, i32) {
    %c0_i32 = arith.constant 0 : i32
    %c0_i32_0 = arith.constant 0 : i32
    %c0_i32_1 = arith.constant 0 : i32
    return %c0_i32, %c0_i32_0 : i32, i32
  }
  func.func @transform_9(%arg0: i32) -> (i32, i32) {
    %c0_i32 = arith.constant 0 : i32
    %c0_i32_0 = arith.constant 0 : i32
    %c0_i32_1 = arith.constant 0 : i32
    return %c0_i32, %c0_i32_0 : i32, i32
  }
  func.func @transform_10(%arg0: i32) -> (i32, i32) {
    %c0_i32 = arith.constant 0 : i32
    %c0_i32_0 = arith.constant 0 : i32
    %c0_i32_1 = arith.constant 0 : i32
    return %c0_i32, %c0_i32_0 : i32, i32
  }
  func.func @transform_11(%arg0: i32) -> (i32, i32) {
    %c0_i32 = arith.constant 0 : i32
    %c0_i32_0 = arith.constant 0 : i32
    %c0_i32_1 = arith.constant 0 : i32
    return %c0_i32, %c0_i32_0 : i32, i32
  }
  func.func @transform_12(%arg0: i32) -> (i32, i32) {
    %c0_i32 = arith.constant 0 : i32
    %c0_i32_0 = arith.constant 0 : i32
    %c0_i32_1 = arith.constant 0 : i32
    return %c0_i32, %c0_i32_0 : i32, i32
  }
  func.func @transform_13(%arg0: i32) -> (i32, i32) {
    %c0_i32 = arith.constant 0 : i32
    %c0_i32_0 = arith.constant 0 : i32
    %c0_i32_1 = arith.constant 0 : i32
    return %c0_i32, %c0_i32_0 : i32, i32
  }
  func.func @transform_14(%arg0: i32) -> (i32, i32) {
    %c0_i32 = arith.constant 0 : i32
    %c0_i32_0 = arith.constant 0 : i32
    %c0_i32_1 = arith.constant 0 : i32
    return %c0_i32, %c0_i32_0 : i32, i32
  }
  func.func @transform_15(%arg0: i32) -> (i32, i32) {
    %c0_i32 = arith.constant 0 : i32
    %c0_i32_0 = arith.constant 0 : i32
    return %arg0, %c0_i32 : i32, i32
  }
}

module attributes {stable_mosaic.version = 11 : i64} {
  func.func @sentence_attention_kernel(%arg0: i32, %arg1: memref<8x128xf32, #tpu.memory_space<vmem>>, %arg2: memref<512x128xbf16, #tpu.memory_space<vmem>>, %arg3: memref<128x512xbf16, #tpu.memory_space<vmem>>, %arg4: memref<128x512xbf16, #tpu.memory_space<vmem>>, %arg5: memref<1x512xf32, #tpu.memory_space<vmem>>, %arg6: memref<512x128xbf16, #tpu.memory_space<vmem>>, %arg7: memref<1x128xf32, #tpu.memory_space<vmem>>, %arg8: memref<1x128xf32, #tpu.memory_space<vmem>>, %arg9: memref<1x128xf32, #tpu.memory_space<vmem>>, %arg10: memref<128x128xbf16, #tpu.memory_space<vmem>>, %arg11: memref<1x128xf32, #tpu.memory_space<vmem>>, %arg12: memref<128x128xbf16, #tpu.memory_space<vmem>>, %arg13: memref<1x128xf32, #tpu.memory_space<vmem>>, %arg14: memref<1x128xf32, #tpu.memory_space<vmem>>, %arg15: memref<1x128xf32, #tpu.memory_space<vmem>>, %arg16: memref<8x128xf32, #tpu.memory_space<vmem>>) attributes {dimension_semantics = [#tpu.dimension_semantics<parallel>], iteration_bounds = array<i64: 1>, scalar_prefetch = 0 : i64, scratch_operands = 0 : i64, tpu.core_type = #tpu.core_type<tc>, window_params = [{transform_indices = @transform_0, window_bounds = array<i64: 8, 128>}, {pipeline_mode = #tpu.pipeline_mode<synchronous>, transform_indices = @transform_1, window_bounds = array<i64: 512, 128>}, {pipeline_mode = #tpu.pipeline_mode<synchronous>, transform_indices = @transform_2, window_bounds = array<i64: 128, 512>}, {pipeline_mode = #tpu.pipeline_mode<synchronous>, transform_indices = @transform_3, window_bounds = array<i64: 128, 512>}, {pipeline_mode = #tpu.pipeline_mode<synchronous>, transform_indices = @transform_4, window_bounds = array<i64: 1, 512>}, {pipeline_mode = #tpu.pipeline_mode<synchronous>, transform_indices = @transform_5, window_bounds = array<i64: 512, 128>}, {pipeline_mode = #tpu.pipeline_mode<synchronous>, transform_indices = @transform_6, window_bounds = array<i64: 1, 128>}, {pipeline_mode = #tpu.pipeline_mode<synchronous>, transform_indices = @transform_7, window_bounds = array<i64: 1, 128>}, {pipeline_mode = #tpu.pipeline_mode<synchronous>, transform_indices = @transform_8, window_bounds = array<i64: 1, 128>}, {pipeline_mode = #tpu.pipeline_mode<synchronous>, transform_indices = @transform_9, window_bounds = array<i64: 128, 128>}, {pipeline_mode = #tpu.pipeline_mode<synchronous>, transform_indices = @transform_10, window_bounds = array<i64: 1, 128>}, {pipeline_mode = #tpu.pipeline_mode<synchronous>, transform_indices = @transform_11, window_bounds = array<i64: 128, 128>}, {pipeline_mode = #tpu.pipeline_mode<synchronous>, transform_indices = @transform_12, window_bounds = array<i64: 1, 128>}, {pipeline_mode = #tpu.pipeline_mode<synchronous>, transform_indices = @transform_13, window_bounds = array<i64: 1, 128>}, {pipeline_mode = #tpu.pipeline_mode<synchronous>, transform_indices = @transform_14, window_bounds = array<i64: 1, 128>}, {transform_indices = @transform_15, window_bounds = array<i64: 8, 128>}]} {
    %c0 = arith.constant 0 : index
    %c0_0 = arith.constant 0 : index
    %0 = vector.load %arg1[%c0, %c0_0] : memref<8x128xf32, #tpu.memory_space<vmem>>, vector<8x128xf32>
    %c0_1 = arith.constant 0 : index
    %c0_2 = arith.constant 0 : index
    %1 = vector.load %arg2[%c0_1, %c0_2] : memref<512x128xbf16, #tpu.memory_space<vmem>>, vector<512x128xbf16>
    %c0_3 = arith.constant 0 : index
    %c0_4 = arith.constant 0 : index
    %2 = vector.load %arg3[%c0_3, %c0_4] : memref<128x512xbf16, #tpu.memory_space<vmem>>, vector<128x512xbf16>
    %3 = arith.truncf %0 : vector<8x128xf32> to vector<8x128xbf16>
    %c0_5 = arith.constant 0 : index
    %c0_6 = arith.constant 0 : index
    %4 = vector.load %arg4[%c0_5, %c0_6] : memref<128x512xbf16, #tpu.memory_space<vmem>>, vector<128x512xbf16>
    %cst = arith.constant dense<0.000000e+00> : vector<8x512xf32>
    %5 = tpu.matmul %3, %4, %cst {dimension_numbers = #tpu.dot_dimension_numbers<[1], [0], [0], [1], [0, 0, 1, 1], [], []>} : vector<8x128xbf16>, vector<128x512xbf16>, vector<8x512xf32> -> vector<8x512xf32>
    %c0_7 = arith.constant 0 : index
    %c0_8 = arith.constant 0 : index
    %6 = vector.load %arg5[%c0_7, %c0_8] : memref<1x512xf32, #tpu.memory_space<vmem>>, vector<1x512xf32>
    %7 = vector.broadcast %6 : vector<1x512xf32> to vector<8x512xf32>
    %8 = arith.addf %5, %7 : vector<8x512xf32>
    %9 = arith.truncf %8 : vector<8x512xf32> to vector<8x512xbf16>
    %10 = tpu.iota {dimensions = array<i32: 1>} : vector<1x128xi32>
    %c8_i32 = arith.constant 8 : i32
    %11 = vector.broadcast %c8_i32 : i32 to vector<1x128xi32>
    %12 = arith.cmpi slt, %10, %11 : vector<1x128xi32>
    %cst_9 = arith.constant 0.000000e+00 : f32
    %cst_10 = arith.constant -1.000000e+30 : f32
    %13 = vector.broadcast %cst_9 : f32 to vector<1x128xf32>
    %14 = vector.broadcast %cst_10 : f32 to vector<1x128xf32>
    %15 = arith.select %12, %13, %14 : vector<1x128xi1>, vector<1x128xf32>
    %16 = vector.extract_strided_slice %9 {offsets = [0, 0], sizes = [8, 128], strides = [1, 1]} : vector<8x512xbf16> to vector<8x128xbf16>
    %17 = vector.extract_strided_slice %1 {offsets = [0, 0], sizes = [128, 128], strides = [1, 1]} : vector<512x128xbf16> to vector<128x128xbf16>
    %cst_11 = arith.constant dense<0.000000e+00> : vector<8x128xf32>
    %18 = tpu.matmul %16, %17, %cst_11 {dimension_numbers = #tpu.dot_dimension_numbers<[1], [0], [0], [1], [0, 0, 1, 1], [], []>} : vector<8x128xbf16>, vector<128x128xbf16>, vector<8x128xf32> -> vector<8x128xf32>
    %19 = vector.broadcast %15 : vector<1x128xf32> to vector<8x128xf32>
    %20 = arith.addf %18, %19 : vector<8x128xf32>
    %cst_12 = arith.constant dense<0xFF800000> : vector<8xf32>
    %21 = vector.multi_reduction <maximumf>, %20, %cst_12 [1] : vector<8x128xf32> to vector<8xf32>
    %22 = vector.shape_cast %21 : vector<8xf32> to vector<8x1xf32>
    %23 = vector.broadcast %22 : vector<8x1xf32> to vector<8x128xf32>
    %24 = arith.subf %20, %23 : vector<8x128xf32>
    %25 = math.exp %24 : vector<8x128xf32>
    %cst_13 = arith.constant dense<0.000000e+00> : vector<8xf32>
    %26 = vector.multi_reduction <add>, %25, %cst_13 [1] : vector<8x128xf32> to vector<8xf32>
    %27 = vector.shape_cast %26 : vector<8xf32> to vector<8x1xf32>
    %28 = tpu.reciprocal %27 : vector<8x1xf32> -> vector<8x1xf32>
    %29 = vector.broadcast %28 : vector<8x1xf32> to vector<8x128xf32>
    %30 = arith.mulf %25, %29 : vector<8x128xf32>
    %31 = arith.truncf %30 : vector<8x128xf32> to vector<8x128xbf16>
    %32 = vector.extract_strided_slice %2 {offsets = [0, 0], sizes = [128, 128], strides = [1, 1]} : vector<128x512xbf16> to vector<128x128xbf16>
    %cst_14 = arith.constant dense<0.000000e+00> : vector<8x128xf32>
    %33 = tpu.matmul %31, %32, %cst_14 {dimension_numbers = #tpu.dot_dimension_numbers<[1], [0], [0], [1], [0, 0, 1, 1], [], []>} : vector<8x128xbf16>, vector<128x128xbf16>, vector<8x128xf32> -> vector<8x128xf32>
    %34 = vector.extract_strided_slice %9 {offsets = [0, 128], sizes = [8, 128], strides = [1, 1]} : vector<8x512xbf16> to vector<8x128xbf16>
    %35 = vector.extract_strided_slice %1 {offsets = [128, 0], sizes = [128, 128], strides = [1, 1]} : vector<512x128xbf16> to vector<128x128xbf16>
    %cst_15 = arith.constant dense<0.000000e+00> : vector<8x128xf32>
    %36 = tpu.matmul %34, %35, %cst_15 {dimension_numbers = #tpu.dot_dimension_numbers<[1], [0], [0], [1], [0, 0, 1, 1], [], []>} : vector<8x128xbf16>, vector<128x128xbf16>, vector<8x128xf32> -> vector<8x128xf32>
    %37 = vector.broadcast %15 : vector<1x128xf32> to vector<8x128xf32>
    %38 = arith.addf %36, %37 : vector<8x128xf32>
    %cst_16 = arith.constant dense<0xFF800000> : vector<8xf32>
    %39 = vector.multi_reduction <maximumf>, %38, %cst_16 [1] : vector<8x128xf32> to vector<8xf32>
    %40 = vector.shape_cast %39 : vector<8xf32> to vector<8x1xf32>
    %41 = vector.broadcast %40 : vector<8x1xf32> to vector<8x128xf32>
    %42 = arith.subf %38, %41 : vector<8x128xf32>
    %43 = math.exp %42 : vector<8x128xf32>
    %cst_17 = arith.constant dense<0.000000e+00> : vector<8xf32>
    %44 = vector.multi_reduction <add>, %43, %cst_17 [1] : vector<8x128xf32> to vector<8xf32>
    %45 = vector.shape_cast %44 : vector<8xf32> to vector<8x1xf32>
    %46 = tpu.reciprocal %45 : vector<8x1xf32> -> vector<8x1xf32>
    %47 = vector.broadcast %46 : vector<8x1xf32> to vector<8x128xf32>
    %48 = arith.mulf %43, %47 : vector<8x128xf32>
    %49 = arith.truncf %48 : vector<8x128xf32> to vector<8x128xbf16>
    %50 = vector.extract_strided_slice %2 {offsets = [0, 128], sizes = [128, 128], strides = [1, 1]} : vector<128x512xbf16> to vector<128x128xbf16>
    %cst_18 = arith.constant dense<0.000000e+00> : vector<8x128xf32>
    %51 = tpu.matmul %49, %50, %cst_18 {dimension_numbers = #tpu.dot_dimension_numbers<[1], [0], [0], [1], [0, 0, 1, 1], [], []>} : vector<8x128xbf16>, vector<128x128xbf16>, vector<8x128xf32> -> vector<8x128xf32>
    %52 = vector.extract_strided_slice %9 {offsets = [0, 256], sizes = [8, 128], strides = [1, 1]} : vector<8x512xbf16> to vector<8x128xbf16>
    %53 = vector.extract_strided_slice %1 {offsets = [256, 0], sizes = [128, 128], strides = [1, 1]} : vector<512x128xbf16> to vector<128x128xbf16>
    %cst_19 = arith.constant dense<0.000000e+00> : vector<8x128xf32>
    %54 = tpu.matmul %52, %53, %cst_19 {dimension_numbers = #tpu.dot_dimension_numbers<[1], [0], [0], [1], [0, 0, 1, 1], [], []>} : vector<8x128xbf16>, vector<128x128xbf16>, vector<8x128xf32> -> vector<8x128xf32>
    %55 = vector.broadcast %15 : vector<1x128xf32> to vector<8x128xf32>
    %56 = arith.addf %54, %55 : vector<8x128xf32>
    %cst_20 = arith.constant dense<0xFF800000> : vector<8xf32>
    %57 = vector.multi_reduction <maximumf>, %56, %cst_20 [1] : vector<8x128xf32> to vector<8xf32>
    %58 = vector.shape_cast %57 : vector<8xf32> to vector<8x1xf32>
    %59 = vector.broadcast %58 : vector<8x1xf32> to vector<8x128xf32>
    %60 = arith.subf %56, %59 : vector<8x128xf32>
    %61 = math.exp %60 : vector<8x128xf32>
    %cst_21 = arith.constant dense<0.000000e+00> : vector<8xf32>
    %62 = vector.multi_reduction <add>, %61, %cst_21 [1] : vector<8x128xf32> to vector<8xf32>
    %63 = vector.shape_cast %62 : vector<8xf32> to vector<8x1xf32>
    %64 = tpu.reciprocal %63 : vector<8x1xf32> -> vector<8x1xf32>
    %65 = vector.broadcast %64 : vector<8x1xf32> to vector<8x128xf32>
    %66 = arith.mulf %61, %65 : vector<8x128xf32>
    %67 = arith.truncf %66 : vector<8x128xf32> to vector<8x128xbf16>
    %68 = vector.extract_strided_slice %2 {offsets = [0, 256], sizes = [128, 128], strides = [1, 1]} : vector<128x512xbf16> to vector<128x128xbf16>
    %cst_22 = arith.constant dense<0.000000e+00> : vector<8x128xf32>
    %69 = tpu.matmul %67, %68, %cst_22 {dimension_numbers = #tpu.dot_dimension_numbers<[1], [0], [0], [1], [0, 0, 1, 1], [], []>} : vector<8x128xbf16>, vector<128x128xbf16>, vector<8x128xf32> -> vector<8x128xf32>
    %70 = vector.extract_strided_slice %9 {offsets = [0, 384], sizes = [8, 128], strides = [1, 1]} : vector<8x512xbf16> to vector<8x128xbf16>
    %71 = vector.extract_strided_slice %1 {offsets = [384, 0], sizes = [128, 128], strides = [1, 1]} : vector<512x128xbf16> to vector<128x128xbf16>
    %cst_23 = arith.constant dense<0.000000e+00> : vector<8x128xf32>
    %72 = tpu.matmul %70, %71, %cst_23 {dimension_numbers = #tpu.dot_dimension_numbers<[1], [0], [0], [1], [0, 0, 1, 1], [], []>} : vector<8x128xbf16>, vector<128x128xbf16>, vector<8x128xf32> -> vector<8x128xf32>
    %73 = vector.broadcast %15 : vector<1x128xf32> to vector<8x128xf32>
    %74 = arith.addf %72, %73 : vector<8x128xf32>
    %cst_24 = arith.constant dense<0xFF800000> : vector<8xf32>
    %75 = vector.multi_reduction <maximumf>, %74, %cst_24 [1] : vector<8x128xf32> to vector<8xf32>
    %76 = vector.shape_cast %75 : vector<8xf32> to vector<8x1xf32>
    %77 = vector.broadcast %76 : vector<8x1xf32> to vector<8x128xf32>
    %78 = arith.subf %74, %77 : vector<8x128xf32>
    %79 = math.exp %78 : vector<8x128xf32>
    %cst_25 = arith.constant dense<0.000000e+00> : vector<8xf32>
    %80 = vector.multi_reduction <add>, %79, %cst_25 [1] : vector<8x128xf32> to vector<8xf32>
    %81 = vector.shape_cast %80 : vector<8xf32> to vector<8x1xf32>
    %82 = tpu.reciprocal %81 : vector<8x1xf32> -> vector<8x1xf32>
    %83 = vector.broadcast %82 : vector<8x1xf32> to vector<8x128xf32>
    %84 = arith.mulf %79, %83 : vector<8x128xf32>
    %85 = arith.truncf %84 : vector<8x128xf32> to vector<8x128xbf16>
    %86 = vector.extract_strided_slice %2 {offsets = [0, 384], sizes = [128, 128], strides = [1, 1]} : vector<128x512xbf16> to vector<128x128xbf16>
    %cst_26 = arith.constant dense<0.000000e+00> : vector<8x128xf32>
    %87 = tpu.matmul %85, %86, %cst_26 {dimension_numbers = #tpu.dot_dimension_numbers<[1], [0], [0], [1], [0, 0, 1, 1], [], []>} : vector<8x128xbf16>, vector<128x128xbf16>, vector<8x128xf32> -> vector<8x128xf32>
    %88 = tpu.concatenate %33, %51, %69, %87 in 1 : vector<8x128xf32>, vector<8x128xf32>, vector<8x128xf32>, vector<8x128xf32> -> vector<8x512xf32>
    %89 = arith.truncf %88 : vector<8x512xf32> to vector<8x512xbf16>
    %c0_27 = arith.constant 0 : index
    %c0_28 = arith.constant 0 : index
    %90 = vector.load %arg6[%c0_27, %c0_28] : memref<512x128xbf16, #tpu.memory_space<vmem>>, vector<512x128xbf16>
    %cst_29 = arith.constant dense<0.000000e+00> : vector<8x128xf32>
    %91 = tpu.matmul %89, %90, %cst_29 {dimension_numbers = #tpu.dot_dimension_numbers<[1], [0], [0], [1], [0, 0, 1, 1], [], []>} : vector<8x512xbf16>, vector<512x128xbf16>, vector<8x128xf32> -> vector<8x128xf32>
    %c0_30 = arith.constant 0 : index
    %c0_31 = arith.constant 0 : index
    %92 = vector.load %arg7[%c0_30, %c0_31] : memref<1x128xf32, #tpu.memory_space<vmem>>, vector<1x128xf32>
    %93 = vector.broadcast %92 : vector<1x128xf32> to vector<8x128xf32>
    %94 = arith.addf %91, %93 : vector<8x128xf32>
    %95 = tpu.iota {dimensions = array<i32: 1>} : vector<1x128xi32>
    %c32_i32 = arith.constant 32 : i32
    %96 = vector.broadcast %c32_i32 : i32 to vector<1x128xi32>
    %97 = arith.cmpi slt, %95, %96 : vector<1x128xi32>
    %98 = arith.extui %97 : vector<1x128xi1> to vector<1x128xi32>
    %99 = arith.sitofp %98 : vector<1x128xi32> to vector<1x128xf32>
    %100 = arith.addf %0, %94 : vector<8x128xf32>
    %c0_32 = arith.constant 0 : index
    %c0_33 = arith.constant 0 : index
    %101 = vector.load %arg8[%c0_32, %c0_33] : memref<1x128xf32, #tpu.memory_space<vmem>>, vector<1x128xf32>
    %c0_34 = arith.constant 0 : index
    %c0_35 = arith.constant 0 : index
    %102 = vector.load %arg9[%c0_34, %c0_35] : memref<1x128xf32, #tpu.memory_space<vmem>>, vector<1x128xf32>
    %cst_36 = arith.constant dense<0.000000e+00> : vector<8xf32>
    %103 = vector.multi_reduction <add>, %100, %cst_36 [1] : vector<8x128xf32> to vector<8xf32>
    %104 = vector.shape_cast %103 : vector<8xf32> to vector<8x1xf32>
    %cst_37 = arith.constant 3.125000e-02 : f32
    %105 = vector.broadcast %cst_37 : f32 to vector<8x1xf32>
    %106 = arith.mulf %104, %105 : vector<8x1xf32>
    %107 = vector.broadcast %106 : vector<8x1xf32> to vector<8x128xf32>
    %108 = arith.subf %100, %107 : vector<8x128xf32>
    %109 = vector.broadcast %99 : vector<1x128xf32> to vector<8x128xf32>
    %110 = arith.mulf %108, %109 : vector<8x128xf32>
    %111 = arith.mulf %110, %110 : vector<8x128xf32>
    %cst_38 = arith.constant dense<0.000000e+00> : vector<8xf32>
    %112 = vector.multi_reduction <add>, %111, %cst_38 [1] : vector<8x128xf32> to vector<8xf32>
    %113 = vector.shape_cast %112 : vector<8xf32> to vector<8x1xf32>
    %cst_39 = arith.constant 3.125000e-02 : f32
    %114 = vector.broadcast %cst_39 : f32 to vector<8x1xf32>
    %115 = arith.mulf %113, %114 : vector<8x1xf32>
    %cst_40 = arith.constant 9.99999974E-6 : f32
    %116 = vector.broadcast %cst_40 : f32 to vector<8x1xf32>
    %117 = arith.addf %115, %116 : vector<8x1xf32>
    %118 = math.rsqrt %117 : vector<8x1xf32>
    %119 = vector.broadcast %118 : vector<8x1xf32> to vector<8x128xf32>
    %120 = arith.mulf %110, %119 : vector<8x128xf32>
    %121 = vector.broadcast %101 : vector<1x128xf32> to vector<8x128xf32>
    %122 = arith.mulf %120, %121 : vector<8x128xf32>
    %123 = vector.broadcast %102 : vector<1x128xf32> to vector<8x128xf32>
    %124 = arith.addf %122, %123 : vector<8x128xf32>
    %125 = arith.truncf %124 : vector<8x128xf32> to vector<8x128xbf16>
    %c0_41 = arith.constant 0 : index
    %c0_42 = arith.constant 0 : index
    %126 = vector.load %arg10[%c0_41, %c0_42] : memref<128x128xbf16, #tpu.memory_space<vmem>>, vector<128x128xbf16>
    %cst_43 = arith.constant dense<0.000000e+00> : vector<8x128xf32>
    %127 = tpu.matmul %125, %126, %cst_43 {dimension_numbers = #tpu.dot_dimension_numbers<[1], [0], [0], [1], [0, 0, 1, 1], [], []>} : vector<8x128xbf16>, vector<128x128xbf16>, vector<8x128xf32> -> vector<8x128xf32>
    %c0_44 = arith.constant 0 : index
    %c0_45 = arith.constant 0 : index
    %128 = vector.load %arg11[%c0_44, %c0_45] : memref<1x128xf32, #tpu.memory_space<vmem>>, vector<1x128xf32>
    %129 = vector.broadcast %128 : vector<1x128xf32> to vector<8x128xf32>
    %130 = arith.addf %127, %129 : vector<8x128xf32>
    %cst_46 = arith.constant 0.000000e+00 : f32
    %131 = vector.broadcast %cst_46 : f32 to vector<8x128xf32>
    %132 = arith.maximumf %130, %131 : vector<8x128xf32>
    %133 = arith.truncf %132 : vector<8x128xf32> to vector<8x128xbf16>
    %c0_47 = arith.constant 0 : index
    %c0_48 = arith.constant 0 : index
    %134 = vector.load %arg12[%c0_47, %c0_48] : memref<128x128xbf16, #tpu.memory_space<vmem>>, vector<128x128xbf16>
    %cst_49 = arith.constant dense<0.000000e+00> : vector<8x128xf32>
    %135 = tpu.matmul %133, %134, %cst_49 {dimension_numbers = #tpu.dot_dimension_numbers<[1], [0], [0], [1], [0, 0, 1, 1], [], []>} : vector<8x128xbf16>, vector<128x128xbf16>, vector<8x128xf32> -> vector<8x128xf32>
    %c0_50 = arith.constant 0 : index
    %c0_51 = arith.constant 0 : index
    %136 = vector.load %arg13[%c0_50, %c0_51] : memref<1x128xf32, #tpu.memory_space<vmem>>, vector<1x128xf32>
    %137 = vector.broadcast %136 : vector<1x128xf32> to vector<8x128xf32>
    %138 = arith.addf %135, %137 : vector<8x128xf32>
    %139 = arith.addf %124, %138 : vector<8x128xf32>
    %c0_52 = arith.constant 0 : index
    %c0_53 = arith.constant 0 : index
    %140 = vector.load %arg14[%c0_52, %c0_53] : memref<1x128xf32, #tpu.memory_space<vmem>>, vector<1x128xf32>
    %c0_54 = arith.constant 0 : index
    %c0_55 = arith.constant 0 : index
    %141 = vector.load %arg15[%c0_54, %c0_55] : memref<1x128xf32, #tpu.memory_space<vmem>>, vector<1x128xf32>
    %cst_56 = arith.constant dense<0.000000e+00> : vector<8xf32>
    %142 = vector.multi_reduction <add>, %139, %cst_56 [1] : vector<8x128xf32> to vector<8xf32>
    %143 = vector.shape_cast %142 : vector<8xf32> to vector<8x1xf32>
    %cst_57 = arith.constant 3.125000e-02 : f32
    %144 = vector.broadcast %cst_57 : f32 to vector<8x1xf32>
    %145 = arith.mulf %143, %144 : vector<8x1xf32>
    %146 = vector.broadcast %145 : vector<8x1xf32> to vector<8x128xf32>
    %147 = arith.subf %139, %146 : vector<8x128xf32>
    %148 = vector.broadcast %99 : vector<1x128xf32> to vector<8x128xf32>
    %149 = arith.mulf %147, %148 : vector<8x128xf32>
    %150 = arith.mulf %149, %149 : vector<8x128xf32>
    %cst_58 = arith.constant dense<0.000000e+00> : vector<8xf32>
    %151 = vector.multi_reduction <add>, %150, %cst_58 [1] : vector<8x128xf32> to vector<8xf32>
    %152 = vector.shape_cast %151 : vector<8xf32> to vector<8x1xf32>
    %cst_59 = arith.constant 3.125000e-02 : f32
    %153 = vector.broadcast %cst_59 : f32 to vector<8x1xf32>
    %154 = arith.mulf %152, %153 : vector<8x1xf32>
    %cst_60 = arith.constant 9.99999974E-6 : f32
    %155 = vector.broadcast %cst_60 : f32 to vector<8x1xf32>
    %156 = arith.addf %154, %155 : vector<8x1xf32>
    %157 = math.rsqrt %156 : vector<8x1xf32>
    %158 = vector.broadcast %157 : vector<8x1xf32> to vector<8x128xf32>
    %159 = arith.mulf %149, %158 : vector<8x128xf32>
    %160 = vector.broadcast %140 : vector<1x128xf32> to vector<8x128xf32>
    %161 = arith.mulf %159, %160 : vector<8x128xf32>
    %162 = vector.broadcast %141 : vector<1x128xf32> to vector<8x128xf32>
    %163 = arith.addf %161, %162 : vector<8x128xf32>
    %c0_61 = arith.constant 0 : index
    %c0_62 = arith.constant 0 : index
    %164 = vector.load %arg16[%c0_61, %c0_62] : memref<8x128xf32, #tpu.memory_space<vmem>>, vector<8x128xf32>
    tpu.vector_store %arg16[%c0_61, %c0_62], %163 {strides = array<i32>} : memref<8x128xf32, #tpu.memory_space<vmem>>, vector<8x128xf32>,
    return
  }
  func.func @transform_0(%arg0: i32) -> (i32, i32) {
    %c0_i32 = arith.constant 0 : i32
    %c0_i32_0 = arith.constant 0 : i32
    return %arg0, %c0_i32 : i32, i32
  }
  func.func @transform_1(%arg0: i32) -> (i32, i32) {
    %c0_i32 = arith.constant 0 : i32
    %c0_i32_0 = arith.constant 0 : i32
    %c0_i32_1 = arith.constant 0 : i32
    return %c0_i32, %c0_i32_0 : i32, i32
  }
  func.func @transform_2(%arg0: i32) -> (i32, i32) {
    %c0_i32 = arith.constant 0 : i32
    %c0_i32_0 = arith.constant 0 : i32
    %c0_i32_1 = arith.constant 0 : i32
    return %c0_i32, %c0_i32_0 : i32, i32
  }
  func.func @transform_3(%arg0: i32) -> (i32, i32) {
    %c0_i32 = arith.constant 0 : i32
    %c0_i32_0 = arith.constant 0 : i32
    %c0_i32_1 = arith.constant 0 : i32
    return %c0_i32, %c0_i32_0 : i32, i32
  }
  func.func @transform_4(%arg0: i32) -> (i32, i32) {
    %c0_i32 = arith.constant 0 : i32
    %c0_i32_0 = arith.constant 0 : i32
    %c0_i32_1 = arith.constant 0 : i32
    return %c0_i32, %c0_i32_0 : i32, i32
  }
  func.func @transform_5(%arg0: i32) -> (i32, i32) {
    %c0_i32 = arith.constant 0 : i32
    %c0_i32_0 = arith.constant 0 : i32
    %c0_i32_1 = arith.constant 0 : i32
    return %c0_i32, %c0_i32_0 : i32, i32
  }
  func.func @transform_6(%arg0: i32) -> (i32, i32) {
    %c0_i32 = arith.constant 0 : i32
    %c0_i32_0 = arith.constant 0 : i32
    %c0_i32_1 = arith.constant 0 : i32
    return %c0_i32, %c0_i32_0 : i32, i32
  }
  func.func @transform_7(%arg0: i32) -> (i32, i32) {
    %c0_i32 = arith.constant 0 : i32
    %c0_i32_0 = arith.constant 0 : i32
    %c0_i32_1 = arith.constant 0 : i32
    return %c0_i32, %c0_i32_0 : i32, i32
  }
  func.func @transform_8(%arg0: i32) -> (i32, i32) {
    %c0_i32 = arith.constant 0 : i32
    %c0_i32_0 = arith.constant 0 : i32
    %c0_i32_1 = arith.constant 0 : i32
    return %c0_i32, %c0_i32_0 : i32, i32
  }
  func.func @transform_9(%arg0: i32) -> (i32, i32) {
    %c0_i32 = arith.constant 0 : i32
    %c0_i32_0 = arith.constant 0 : i32
    %c0_i32_1 = arith.constant 0 : i32
    return %c0_i32, %c0_i32_0 : i32, i32
  }
  func.func @transform_10(%arg0: i32) -> (i32, i32) {
    %c0_i32 = arith.constant 0 : i32
    %c0_i32_0 = arith.constant 0 : i32
    %c0_i32_1 = arith.constant 0 : i32
    return %c0_i32, %c0_i32_0 : i32, i32
  }
  func.func @transform_11(%arg0: i32) -> (i32, i32) {
    %c0_i32 = arith.constant 0 : i32
    %c0_i32_0 = arith.constant 0 : i32
    %c0_i32_1 = arith.constant 0 : i32
    return %c0_i32, %c0_i32_0 : i32, i32
  }
  func.func @transform_12(%arg0: i32) -> (i32, i32) {
    %c0_i32 = arith.constant 0 : i32
    %c0_i32_0 = arith.constant 0 : i32
    %c0_i32_1 = arith.constant 0 : i32
    return %c0_i32, %c0_i32_0 : i32, i32
  }
  func.func @transform_13(%arg0: i32) -> (i32, i32) {
    %c0_i32 = arith.constant 0 : i32
    %c0_i32_0 = arith.constant 0 : i32
    %c0_i32_1 = arith.constant 0 : i32
    return %c0_i32, %c0_i32_0 : i32, i32
  }
  func.func @transform_14(%arg0: i32) -> (i32, i32) {
    %c0_i32 = arith.constant 0 : i32
    %c0_i32_0 = arith.constant 0 : i32
    %c0_i32_1 = arith.constant 0 : i32
    return %c0_i32, %c0_i32_0 : i32, i32
  }
  func.func @transform_15(%arg0: i32) -> (i32, i32) {
    %c0_i32 = arith.constant 0 : i32
    %c0_i32_0 = arith.constant 0 : i32
    return %arg0, %c0_i32 : i32, i32
  }
}

</mosaic_0001>

<llo_original>
// kernel: tpu_custom_call.1
$region0: #{tpu_custom_call.1}
  #allocation0 [shape = 'u32[]', space=smem, size = 0x4, offset = 0x4, fixed_abs, tag = 'smem constant byte address 0x4 - core index']
  #allocation1 [shape = 'u32[144,128]{1,0:T(1,128)}', space=vmem, size = 0x12000, scoped, tag = 'internal scratch']
  %s0 = inlined_call_operand.hbm [shape: f32[8,128], index: 0, kind: input, shape index: {}]
  %s1 = inlined_call_operand.hbm [shape: bf16[512,128], index: 1, kind: input, shape index: {}]
  %s2 = inlined_call_operand.hbm [shape: bf16[128,512], index: 2, kind: input, shape index: {}]
  %s3 = inlined_call_operand.hbm [shape: bf16[128,512], index: 3, kind: input, shape index: {}]
  %s4 = inlined_call_operand.vmem [shape: f32[1,512], index: 4, kind: input, shape index: {}]
  %s5 = inlined_call_operand.hbm [shape: bf16[512,128], index: 5, kind: input, shape index: {}]
  %s6 = inlined_call_operand.vmem [shape: f32[1,128], index: 6, kind: input, shape index: {}]
  %s7 = inlined_call_operand.vmem [shape: f32[1,128], index: 7, kind: input, shape index: {}]
  %s8 = inlined_call_operand.vmem [shape: f32[1,128], index: 8, kind: input, shape index: {}]
  %s9 = inlined_call_operand.hbm [shape: bf16[128,128], index: 9, kind: input, shape index: {}]
  %s10 = inlined_call_operand.vmem [shape: f32[1,128], index: 10, kind: input, shape index: {}]
  %s11 = inlined_call_operand.hbm [shape: bf16[128,128], index: 11, kind: input, shape index: {}]
  %s12 = inlined_call_operand.vmem [shape: f32[1,128], index: 12, kind: input, shape index: {}]
  %s13 = inlined_call_operand.vmem [shape: f32[1,128], index: 13, kind: input, shape index: {}]
  %s14 = inlined_call_operand.vmem [shape: f32[1,128], index: 14, kind: input, shape index: {}]
  %s15 = inlined_call_operand.hbm [shape: f32[8,128], index: 15, kind: output, shape index: {}]
  %s16 = sld [smem:[#allocation0]]
  $region98: #{tpu_custom_call.1} parent=0
    _
  %s18 = ssub.s32 1, %s16
  %s19 = scalar_select 0, %s18, %s16
  $region1: #{tpu_custom_call.1} parent=0
    #allocation2 [shape = 'u8[4096]{0}', space=vmem, size = 0x1000, scoped, tag = 'input window, operand 0, single buffered']
    #allocation3 [shape = 's32[1]{0}', space=sflag, size = 0x4, scoped, tag = 'scoped memory for tpu_custom_call.1']
    #allocation4 [shape = 's32[1]{0}', space=sflag, size = 0x4, scoped, tag = 'scoped memory for tpu_custom_call.1']
    #allocation5 [shape = 'u8[131072]{0}', space=vmem, size = 0x20000, scoped, tag = 'input window, operand 1, single buffered']
    #allocation6 [shape = 's32[1]{0}', space=sflag, size = 0x4, scoped, tag = 'scoped memory for tpu_custom_call.1']
    #allocation7 [shape = 'u8[131072]{0}', space=vmem, size = 0x20000, scoped, tag = 'input window, operand 2, single buffered']
    #allocation8 [shape = 'u8[131072]{0}', space=vmem, size = 0x20000, scoped, tag = 'input window, operand 3, single buffered']
    #allocation9 [shape = 's32[1]{0}', space=sflag, size = 0x4, scoped, tag = 'scoped memory for tpu_custom_call.1']
    #allocation10 [shape = 'u8[131072]{0}', space=vmem, size = 0x20000, scoped, tag = 'input window, operand 5, single buffered']
    #allocation11 [shape = 'u8[32768]{0}', space=vmem, size = 0x8000, scoped, tag = 'input window, operand 9, single buffered']
    #allocation12 [shape = 's32[1]{0}', space=sflag, size = 0x4, scoped, tag = 'scoped memory for tpu_custom_call.1']
    #allocation13 [shape = 'u8[32768]{0}', space=vmem, size = 0x8000, scoped, tag = 'input window, operand 11, single buffered']
    #allocation14 [shape = 'u8[4096]{0}', space=vmem, size = 0x1000, scoped, tag = 'output window, operand 0, single buffered']
    %20 = vsyncpa [#allocation3], 0
    %21 = vsyncpa [#allocation6], 0
    %22 = vsyncpa [#allocation9], 0
    %23 = vsyncpa [#allocation12], 0
    %24 = vsyncpa [#allocation4], 0
    // Predicated region
    $region2: #{tpu_custom_call.1} parent=1 // pred_check
      _
    $region3: #{tpu_custom_call.1} parent=1 // pred_check_branch
      %26 = sbr.rel (0) target = $region5
    $region4: #{tpu_custom_call.1} parent=1 // pred_region
      %s28 = ssub.s32 128, 128
      %29 = vsyncadd [#allocation3], %s28
      %s31 = sshll.u32 [#allocation2], 4
      %s32 = int_to_ptr.vmem [resolvable:$true] %s31
      %34 = dma.hbm_to_vmem [thread:$0]  %s0, 128, %s32, [#allocation3]
    $region5: #{tpu_custom_call.1} parent=1 // pred_fallthru
      _
    // Predicated region
    $region6: #{tpu_custom_call.1} parent=1 // pred_check
      _
    $region7: #{tpu_custom_call.1} parent=1 // pred_check_branch
      %36 = sbr.rel (0) target = $region9
    $region8: #{tpu_custom_call.1} parent=1 // pred_region
      %s38 = ssub.s32 4096, 4096
      %39 = vsyncadd [#allocation6], %s38
      %s40 = sshll.u32 [#allocation5], 4
      %s41 = int_to_ptr.vmem [resolvable:$true] %s40
      %46 = dma.hbm_to_vmem [thread:$0]  %s1, 4096, %s41, [#allocation6], 64, 64, 4
    $region9: #{tpu_custom_call.1} parent=1 // pred_fallthru
      _
    // Predicated region
    $region10: #{tpu_custom_call.1} parent=1 // pred_check
      _
    $region11: #{tpu_custom_call.1} parent=1 // pred_check_branch
      %48 = sbr.rel (0) target = $region13
    $region12: #{tpu_custom_call.1} parent=1 // pred_region
      %s50 = ssub.s32 4096, 4096
      %51 = vsyncadd [#allocation6], %s50
      %s52 = sshll.u32 [#allocation7], 4
      %s53 = int_to_ptr.vmem [resolvable:$true] %s52
      %58 = dma.hbm_to_vmem [thread:$0]  %s2, 4096, %s53, [#allocation6], 256, 256, 16
    $region13: #{tpu_custom_call.1} parent=1 // pred_fallthru
      _
    // Predicated region
    $region14: #{tpu_custom_call.1} parent=1 // pred_check
      _
    $region15: #{tpu_custom_call.1} parent=1 // pred_check_branch
      %60 = sbr.rel (0) target = $region17
    $region16: #{tpu_custom_call.1} parent=1 // pred_region
      %s62 = ssub.s32 4096, 4096
      %63 = vsyncadd [#allocation9], %s62
      %s64 = sshll.u32 [#allocation8], 4
      %s65 = int_to_ptr.vmem [resolvable:$true] %s64
      %70 = dma.hbm_to_vmem [thread:$0]  %s3, 4096, %s65, [#allocation9], 256, 256, 16
    $region17: #{tpu_custom_call.1} parent=1 // pred_fallthru
      _
    // Predicated region
    $region18: #{tpu_custom_call.1} parent=1 // pred_check
      _
    $region19: #{tpu_custom_call.1} parent=1 // pred_check_branch
      %72 = sbr.rel (0) target = $region21
    $region20: #{tpu_custom_call.1} parent=1 // pred_region
      _
    $region21: #{tpu_custom_call.1} parent=1 // pred_fallthru
      _
    // Predicated region
    $region22: #{tpu_custom_call.1} parent=1 // pred_check
      _
    $region23: #{tpu_custom_call.1} parent=1 // pred_check_branch
      %74 = sbr.rel (0) target = $region25
    $region24: #{tpu_custom_call.1} parent=1 // pred_region
      %s76 = ssub.s32 4096, 4096
      %77 = vsyncadd [#allocation9], %s76
      %s78 = sshll.u32 [#allocation10], 4
      %s79 = int_to_ptr.vmem [resolvable:$true] %s78
      %84 = dma.hbm_to_vmem [thread:$0]  %s5, 4096, %s79, [#allocation9], 64, 64, 4
    $region25: #{tpu_custom_call.1} parent=1 // pred_fallthru
      _
    // Predicated region
    $region26: #{tpu_custom_call.1} parent=1 // pred_check
      _
    $region27: #{tpu_custom_call.1} parent=1 // pred_check_branch
      %86 = sbr.rel (0) target = $region29
    $region28: #{tpu_custom_call.1} parent=1 // pred_region
      _
    $region29: #{tpu_custom_call.1} parent=1 // pred_fallthru
      _
    // Predicated region
    $region30: #{tpu_custom_call.1} parent=1 // pred_check
      _
    $region31: #{tpu_custom_call.1} parent=1 // pred_check_branch
      %88 = sbr.rel (0) target = $region33
    $region32: #{tpu_custom_call.1} parent=1 // pred_region
      _
    $region33: #{tpu_custom_call.1} parent=1 // pred_fallthru
      _
    // Predicated region
    $region34: #{tpu_custom_call.1} parent=1 // pred_check
      _
    $region35: #{tpu_custom_call.1} parent=1 // pred_check_branch
      %90 = sbr.rel (0) target = $region37
    $region36: #{tpu_custom_call.1} parent=1 // pred_region
      _
    $region37: #{tpu_custom_call.1} parent=1 // pred_fallthru
      _
    // Predicated region
    $region38: #{tpu_custom_call.1} parent=1 // pred_check
      _
    $region39: #{tpu_custom_call.1} parent=1 // pred_check_branch
      %92 = sbr.rel (0) target = $region41
    $region40: #{tpu_custom_call.1} parent=1 // pred_region
      %s94 = ssub.s32 1024, 1024
      %95 = vsyncadd [#allocation12], %s94
      %s96 = sshll.u32 [#allocation11], 4
      %s97 = int_to_ptr.vmem [resolvable:$true] %s96
      %102 = dma.hbm_to_vmem [thread:$0]  %s9, 1024, %s97, [#allocation12], 64, 64, 4
    $region41: #{tpu_custom_call.1} parent=1 // pred_fallthru
      _
    // Predicated region
    $region42: #{tpu_custom_call.1} parent=1 // pred_check
      _
    $region43: #{tpu_custom_call.1} parent=1 // pred_check_branch
      %104 = sbr.rel (0) target = $region45
    $region44: #{tpu_custom_call.1} parent=1 // pred_region
      _
    $region45: #{tpu_custom_call.1} parent=1 // pred_fallthru
      _
    // Predicated region
    $region46: #{tpu_custom_call.1} parent=1 // pred_check
      _
    $region47: #{tpu_custom_call.1} parent=1 // pred_check_branch
      %106 = sbr.rel (0) target = $region49
    $region48: #{tpu_custom_call.1} parent=1 // pred_region
      %s108 = ssub.s32 1024, 1024
      %109 = vsyncadd [#allocation12], %s108
      %s110 = sshll.u32 [#allocation13], 4
      %s111 = int_to_ptr.vmem [resolvable:$true] %s110
      %116 = dma.hbm_to_vmem [thread:$0]  %s11, 1024, %s111, [#allocation12], 64, 64, 4
    $region49: #{tpu_custom_call.1} parent=1 // pred_fallthru
      _
    // Predicated region
    $region50: #{tpu_custom_call.1} parent=1 // pred_check
      _
    $region51: #{tpu_custom_call.1} parent=1 // pred_check_branch
      %118 = sbr.rel (0) target = $region53
    $region52: #{tpu_custom_call.1} parent=1 // pred_region
      _
    $region53: #{tpu_custom_call.1} parent=1 // pred_fallthru
      _
    // Predicated region
    $region54: #{tpu_custom_call.1} parent=1 // pred_check
      _
    $region55: #{tpu_custom_call.1} parent=1 // pred_check_branch
      %120 = sbr.rel (0) target = $region57
    $region56: #{tpu_custom_call.1} parent=1 // pred_region
      _
    $region57: #{tpu_custom_call.1} parent=1 // pred_fallthru
      _
    // Predicated region
    $region58: #{tpu_custom_call.1} parent=1 // pred_check
      _
    $region59: #{tpu_custom_call.1} parent=1 // pred_check_branch
      %122 = sbr.rel (0) target = $region61
    $region60: #{tpu_custom_call.1} parent=1 // pred_region
      _
    $region61: #{tpu_custom_call.1} parent=1 // pred_fallthru
      _
    // Predicated region
    $region62: #{tpu_custom_call.1} parent=1 // pred_check
      _
    $region63: #{tpu_custom_call.1} parent=1 // pred_check_branch
      %124 = sbr.rel (0) target = $region65
    $region64: #{tpu_custom_call.1} parent=1 // pred_region
      %125 = dma.done [#allocation3], 128
    $region65: #{tpu_custom_call.1} parent=1 // pred_fallthru
      _
    // Predicated region
    $region66: #{tpu_custom_call.1} parent=1 // pred_check
      _
    $region67: #{tpu_custom_call.1} parent=1 // pred_check_branch
      %127 = sbr.rel (0) target = $region69
    $region68: #{tpu_custom_call.1} parent=1 // pred_region
      %128 = dma.done [#allocation6], 4096
    $region69: #{tpu_custom_call.1} parent=1 // pred_fallthru
      _
    // Predicated region
    $region70: #{tpu_custom_call.1} parent=1 // pred_check
      _
    $region71: #{tpu_custom_call.1} parent=1 // pred_check_branch
      %130 = sbr.rel (0) target = $region73
    $region72: #{tpu_custom_call.1} parent=1 // pred_region
      %131 = dma.done [#allocation6], 4096
    $region73: #{tpu_custom_call.1} parent=1 // pred_fallthru
      _
    // Predicated region
    $region74: #{tpu_custom_call.1} parent=1 // pred_check
      _
    $region75: #{tpu_custom_call.1} parent=1 // pred_check_branch
      %133 = sbr.rel (0) target = $region77
    $region76: #{tpu_custom_call.1} parent=1 // pred_region
      %134 = dma.done [#allocation9], 4096
    $region77: #{tpu_custom_call.1} parent=1 // pred_fallthru
      _
    // Predicated region
    $region78: #{tpu_custom_call.1} parent=1 // pred_check
      _
    $region79: #{tpu_custom_call.1} parent=1 // pred_check_branch
      %136 = sbr.rel (0) target = $region81
    $region80: #{tpu_custom_call.1} parent=1 // pred_region
      %137 = dma.done [#allocation9], 4096
    $region81: #{tpu_custom_call.1} parent=1 // pred_fallthru
      _
    // Predicated region
    $region82: #{tpu_custom_call.1} parent=1 // pred_check
      _
    $region83: #{tpu_custom_call.1} parent=1 // pred_check_branch
      %139 = sbr.rel (0) target = $region85
    $region84: #{tpu_custom_call.1} parent=1 // pred_region
      %140 = dma.done [#allocation12], 1024
    $region85: #{tpu_custom_call.1} parent=1 // pred_fallthru
      _
    // Predicated region
    $region86: #{tpu_custom_call.1} parent=1 // pred_check
      _
    $region87: #{tpu_custom_call.1} parent=1 // pred_check_branch
      %142 = sbr.rel (0) target = $region89
    $region88: #{tpu_custom_call.1} parent=1 // pred_region
      %143 = dma.done [#allocation12], 1024
    $region89: #{tpu_custom_call.1} parent=1 // pred_fallthru
      _
    %v145 = vld [vmem:[#allocation2] sm:$0xff]
    %v146 = vld [vmem:[#allocation5] sm:$0xf]
    %v147 = vld [vmem:[#allocation5 + $0x4] sm:$0xf]
    %v148 = vld [vmem:[#allocation5 + $0x8] sm:$0xf]
    %v149 = vld [vmem:[#allocation5 + $0xc] sm:$0xf]
    %v150 = vld [vmem:[#allocation5 + $0x10] sm:$0xf]
    %v151 = vld [vmem:[#allocation5 + $0x14] sm:$0xf]
    %v152 = vld [vmem:[#allocation5 + $0x18] sm:$0xf]
    %v153 = vld [vmem:[#allocation5 + $0x1c] sm:$0xf]
    %v154 = vld [vmem:[#allocation5 + $0x20] sm:$0xf]
    %v155 = vld [vmem:[#allocation5 + $0x24] sm:$0xf]
    %v156 = vld [vmem:[#allocation5 + $0x28] sm:$0xf]
    %v157 = vld [vmem:[#allocation5 + $0x2c] sm:$0xf]
    %v158 = vld [vmem:[#allocation5 + $0x30] sm:$0xf]
    %v159 = vld [vmem:[#allocation5 + $0x34] sm:$0xf]
    %v160 = vld [vmem:[#allocation5 + $0x38] sm:$0xf]
    %v161 = vld [vmem:[#allocation5 + $0x3c] sm:$0xf]
    %v162 = vld [vmem:[#allocation5 + $0x40] sm:$0xf]
    %v163 = vld [vmem:[#allocation5 + $0x44] sm:$0xf]
    %v164 = vld [vmem:[#allocation5 + $0x48] sm:$0xf]
    %v165 = vld [vmem:[#allocation5 + $0x4c] sm:$0xf]
    %v166 = vld [vmem:[#allocation5 + $0x50] sm:$0xf]
    %v167 = vld [vmem:[#allocation5 + $0x54] sm:$0xf]
    %v168 = vld [vmem:[#allocation5 + $0x58] sm:$0xf]
    %v169 = vld [vmem:[#allocation5 + $0x5c] sm:$0xf]
    %v170 = vld [vmem:[#allocation5 + $0x60] sm:$0xf]
    %v171 = vld [vmem:[#allocation5 + $0x64] sm:$0xf]
    %v172 = vld [vmem:[#allocation5 + $0x68] sm:$0xf]
    %v173 = vld [vmem:[#allocation5 + $0x6c] sm:$0xf]
    %v174 = vld [vmem:[#allocation5 + $0x70] sm:$0xf]
    %v175 = vld [vmem:[#allocation5 + $0x74] sm:$0xf]
    %v176 = vld [vmem:[#allocation5 + $0x78] sm:$0xf]
    %v177 = vld [vmem:[#allocation5 + $0x7c] sm:$0xf]
    %v178 = vld [vmem:[#allocation5 + $0x80] sm:$0xf]
    %v179 = vld [vmem:[#allocation5 + $0x84] sm:$0xf]
    %v180 = vld [vmem:[#allocation5 + $0x88] sm:$0xf]
    %v181 = vld [vmem:[#allocation5 + $0x8c] sm:$0xf]
    %v182 = vld [vmem:[#allocation5 + $0x90] sm:$0xf]
    %v183 = vld [vmem:[#allocation5 + $0x94] sm:$0xf]
    %v184 = vld [vmem:[#allocation5 + $0x98] sm:$0xf]
    %v185 = vld [vmem:[#allocation5 + $0x9c] sm:$0xf]
    %v186 = vld [vmem:[#allocation5 + $0xa0] sm:$0xf]
    %v187 = vld [vmem:[#allocation5 + $0xa4] sm:$0xf]
    %v188 = vld [vmem:[#allocation5 + $0xa8] sm:$0xf]
    %v189 = vld [vmem:[#allocation5 + $0xac] sm:$0xf]
    %v190 = vld [vmem:[#allocation5 + $0xb0] sm:$0xf]
    %v191 = vld [vmem:[#allocation5 + $0xb4] sm:$0xf]
    %v192 = vld [vmem:[#allocation5 + $0xb8] sm:$0xf]
    %v193 = vld [vmem:[#allocation5 + $0xbc] sm:$0xf]
    %v194 = vld [vmem:[#allocation5 + $0xc0] sm:$0xf]
    %v195 = vld [vmem:[#allocation5 + $0xc4] sm:$0xf]
    %v196 = vld [vmem:[#allocation5 + $0xc8] sm:$0xf]
    %v197 = vld [vmem:[#allocation5 + $0xcc] sm:$0xf]
    %v198 = vld [vmem:[#allocation5 + $0xd0] sm:$0xf]
    %v199 = vld [vmem:[#allocation5 + $0xd4] sm:$0xf]
    %v200 = vld [vmem:[#allocation5 + $0xd8] sm:$0xf]
    %v201 = vld [vmem:[#allocation5 + $0xdc] sm:$0xf]
    %v202 = vld [vmem:[#allocation5 + $0xe0] sm:$0xf]
    %v203 = vld [vmem:[#allocation5 + $0xe4] sm:$0xf]
    %v204 = vld [vmem:[#allocation5 + $0xe8] sm:$0xf]
    %v205 = vld [vmem:[#allocation5 + $0xec] sm:$0xf]
    %v206 = vld [vmem:[#allocation5 + $0xf0] sm:$0xf]
    %v207 = vld [vmem:[#allocation5 + $0xf4] sm:$0xf]
    %v208 = vld [vmem:[#allocation5 + $0xf8] sm:$0xf]
    %v209 = vld [vmem:[#allocation5 + $0xfc] sm:$0xf]
    %v210 = vld [vmem:[#allocation7] sm:$0xff]
    %v211 = vld [vmem:[#allocation7 + $0x8] sm:$0xff]
    %v212 = vld [vmem:[#allocation7 + $0x10] sm:$0xff]
    %v213 = vld [vmem:[#allocation7 + $0x18] sm:$0xff]
    %v214 = vld [vmem:[#allocation7 + $0x20] sm:$0xff]
    %v215 = vld [vmem:[#allocation7 + $0x28] sm:$0xff]
    %v216 = vld [vmem:[#allocation7 + $0x30] sm:$0xff]
    %v217 = vld [vmem:[#allocation7 + $0x38] sm:$0xff]
    %v218 = vld [vmem:[#allocation7 + $0x40] sm:$0xff]
    %v219 = vld [vmem:[#allocation7 + $0x48] sm:$0xff]
    %v220 = vld [vmem:[#allocation7 + $0x50] sm:$0xff]
    %v221 = vld [vmem:[#allocation7 + $0x58] sm:$0xff]
    %v222 = vld [vmem:[#allocation7 + $0x60] sm:$0xff]
    %v223 = vld [vmem:[#allocation7 + $0x68] sm:$0xff]
    %v224 = vld [vmem:[#allocation7 + $0x70] sm:$0xff]
    %v225 = vld [vmem:[#allocation7 + $0x78] sm:$0xff]
    %v226 = vld [vmem:[#allocation7 + $0x80] sm:$0xff]
    %v227 = vld [vmem:[#allocation7 + $0x88] sm:$0xff]
    %v228 = vld [vmem:[#allocation7 + $0x90] sm:$0xff]
    %v229 = vld [vmem:[#allocation7 + $0x98] sm:$0xff]
    %v230 = vld [vmem:[#allocation7 + $0xa0] sm:$0xff]
    %v231 = vld [vmem:[#allocation7 + $0xa8] sm:$0xff]
    %v232 = vld [vmem:[#allocation7 + $0xb0] sm:$0xff]
    %v233 = vld [vmem:[#allocation7 + $0xb8] sm:$0xff]
    %v234 = vld [vmem:[#allocation7 + $0xc0] sm:$0xff]
    %v235 = vld [vmem:[#allocation7 + $0xc8] sm:$0xff]
    %v236 = vld [vmem:[#allocation7 + $0xd0] sm:$0xff]
    %v237 = vld [vmem:[#allocation7 + $0xd8] sm:$0xff]
    %v238 = vld [vmem:[#allocation7 + $0xe0] sm:$0xff]
    %v239 = vld [vmem:[#allocation7 + $0xe8] sm:$0xff]
    %v240 = vld [vmem:[#allocation7 + $0xf0] sm:$0xff]
    %v241 = vld [vmem:[#allocation7 + $0xf8] sm:$0xff]
    %v242 = vpack.c.bf16 %v145, %v145
    %v243 = vld [vmem:[#allocation8] sm:$0xff]
    %v244 = vld [vmem:[#allocation8 + $0x8] sm:$0xff]
    %v245 = vld [vmem:[#allocation8 + $0x10] sm:$0xff]
    %v246 = vld [vmem:[#allocation8 + $0x18] sm:$0xff]
    %v247 = vld [vmem:[#allocation8 + $0x20] sm:$0xff]
    %v248 = vld [vmem:[#allocation8 + $0x28] sm:$0xff]
    %v249 = vld [vmem:[#allocation8 + $0x30] sm:$0xff]
    %v250 = vld [vmem:[#allocation8 + $0x38] sm:$0xff]
    %v251 = vld [vmem:[#allocation8 + $0x40] sm:$0xff]
    %v252 = vld [vmem:[#allocation8 + $0x48] sm:$0xff]
    %v253 = vld [vmem:[#allocation8 + $0x50] sm:$0xff]
    %v254 = vld [vmem:[#allocation8 + $0x58] sm:$0xff]
    %v255 = vld [vmem:[#allocation8 + $0x60] sm:$0xff]
    %v256 = vld [vmem:[#allocation8 + $0x68] sm:$0xff]
    %v257 = vld [vmem:[#allocation8 + $0x70] sm:$0xff]
    %v258 = vld [vmem:[#allocation8 + $0x78] sm:$0xff]
    %v259 = vld [vmem:[#allocation8 + $0x80] sm:$0xff]
    %v260 = vld [vmem:[#allocation8 + $0x88] sm:$0xff]
    %v261 = vld [vmem:[#allocation8 + $0x90] sm:$0xff]
    %v262 = vld [vmem:[#allocation8 + $0x98] sm:$0xff]
    %v263 = vld [vmem:[#allocation8 + $0xa0] sm:$0xff]
    %v264 = vld [vmem:[#allocation8 + $0xa8] sm:$0xff]
    %v265 = vld [vmem:[#allocation8 + $0xb0] sm:$0xff]
    %v266 = vld [vmem:[#allocation8 + $0xb8] sm:$0xff]
    %v267 = vld [vmem:[#allocation8 + $0xc0] sm:$0xff]
    %v268 = vld [vmem:[#allocation8 + $0xc8] sm:$0xff]
    %v269 = vld [vmem:[#allocation8 + $0xd0] sm:$0xff]
    %v270 = vld [vmem:[#allocation8 + $0xd8] sm:$0xff]
    %v271 = vld [vmem:[#allocation8 + $0xe0] sm:$0xff]
    %v272 = vld [vmem:[#allocation8 + $0xe8] sm:$0xff]
    %v273 = vld [vmem:[#allocation8 + $0xf0] sm:$0xff]
    %v274 = vld [vmem:[#allocation8 + $0xf8] sm:$0xff]
    %v275 = vld [vmem:[%s4] sm:$0xf]
    %v277 = vlaneseq
    %v278 = vshrl.u32 %v277, 7
    %v279 = vsub.s32 0, %v278
    %v280 = vrot.slane %v275, %v279
    %v281 = vlaneseq
    %v282 = vshrl.u32 %v281, 7
    %v283 = vsub.s32 1, %v282
    %v284 = vrot.slane %v275, %v283
    %v285 = vlaneseq
    %v286 = vshrl.u32 %v285, 7
    %v287 = vsub.s32 2, %v286
    %v288 = vrot.slane %v275, %v287
    %v289 = vlaneseq
    %v290 = vshrl.u32 %v289, 7
    %v291 = vsub.s32 3, %v290
    %v292 = vrot.slane %v275, %v291
    %v329 = vunpack.c.l.b16 %v243
    %v330 = vunpack.c.h.b16 %v243
    %v331 = vunpack.c.l.b16 %v244
    %v332 = vunpack.c.h.b16 %v244
    %v333 = vunpack.c.l.b16 %v245
    %v334 = vunpack.c.h.b16 %v245
    %v335 = vunpack.c.l.b16 %v246
    %v336 = vunpack.c.h.b16 %v246
    %v337 = vunpack.c.l.b16 %v247
    %v338 = vunpack.c.h.b16 %v247
    %v339 = vunpack.c.l.b16 %v248
    %v340 = vunpack.c.h.b16 %v248
    %v341 = vunpack.c.l.b16 %v249
    %v342 = vunpack.c.h.b16 %v249
    %v343 = vunpack.c.l.b16 %v250
    %v344 = vunpack.c.h.b16 %v250
    %v345 = vunpack.c.l.b16 %v251
    %v346 = vunpack.c.h.b16 %v251
    %v347 = vunpack.c.l.b16 %v252
    %v348 = vunpack.c.h.b16 %v252
    %v349 = vunpack.c.l.b16 %v253
    %v350 = vunpack.c.h.b16 %v253
    %v351 = vunpack.c.l.b16 %v254
    %v352 = vunpack.c.h.b16 %v254
    %v353 = vunpack.c.l.b16 %v255
    %v354 = vunpack.c.h.b16 %v255
    %v355 = vunpack.c.l.b16 %v256
    %v356 = vunpack.c.h.b16 %v256
    %v357 = vunpack.c.l.b16 %v257
    %v358 = vunpack.c.h.b16 %v257
    %v359 = vunpack.c.l.b16 %v258
    %v360 = vunpack.c.h.b16 %v258
    %v361 = vunpack.c.l.b16 %v259
    %v362 = vunpack.c.h.b16 %v259
    %v363 = vunpack.c.l.b16 %v260
    %v364 = vunpack.c.h.b16 %v260
    %v365 = vunpack.c.l.b16 %v261
    %v366 = vunpack.c.h.b16 %v261
    %v367 = vunpack.c.l.b16 %v262
    %v368 = vunpack.c.h.b16 %v262
    %v369 = vunpack.c.l.b16 %v263
    %v370 = vunpack.c.h.b16 %v263
    %v371 = vunpack.c.l.b16 %v264
    %v372 = vunpack.c.h.b16 %v264
    %v373 = vunpack.c.l.b16 %v265
    %v374 = vunpack.c.h.b16 %v265
    %v375 = vunpack.c.l.b16 %v266
    %v376 = vunpack.c.h.b16 %v266
    %v377 = vunpack.c.l.b16 %v267
    %v378 = vunpack.c.h.b16 %v267
    %v379 = vunpack.c.l.b16 %v268
    %v380 = vunpack.c.h.b16 %v268
    %v381 = vunpack.c.l.b16 %v269
    %v382 = vunpack.c.h.b16 %v269
    %v383 = vunpack.c.l.b16 %v270
    %v384 = vunpack.c.h.b16 %v270
    %v385 = vunpack.c.l.b16 %v271
    %v386 = vunpack.c.h.b16 %v271
    %v387 = vunpack.c.l.b16 %v272
    %v388 = vunpack.c.h.b16 %v272
    %v389 = vunpack.c.l.b16 %v273
    %v390 = vunpack.c.h.b16 %v273
    %v391 = vunpack.c.l.b16 %v274
    %v392 = vunpack.c.h.b16 %v274
    %v393 = vpack.c.b16 %v333, %v329
    %v394 = vpack.c.b16 %v334, %v330
    %v395 = vpack.c.b16 %v335, %v331
    %v396 = vpack.c.b16 %v336, %v332
    %v397 = vpack.c.b16 %v341, %v337
    %v398 = vpack.c.b16 %v342, %v338
    %v399 = vpack.c.b16 %v343, %v339
    %v400 = vpack.c.b16 %v344, %v340
    %v401 = vpack.c.b16 %v349, %v345
    %v402 = vpack.c.b16 %v350, %v346
    %v403 = vpack.c.b16 %v351, %v347
    %v404 = vpack.c.b16 %v352, %v348
    %v405 = vpack.c.b16 %v357, %v353
    %v406 = vpack.c.b16 %v358, %v354
    %v407 = vpack.c.b16 %v359, %v355
    %v408 = vpack.c.b16 %v360, %v356
    %v409 = vpack.c.b16 %v365, %v361
    %v410 = vpack.c.b16 %v366, %v362
    %v411 = vpack.c.b16 %v367, %v363
    %v412 = vpack.c.b16 %v368, %v364
    %v413 = vpack.c.b16 %v373, %v369
    %v414 = vpack.c.b16 %v374, %v370
    %v415 = vpack.c.b16 %v375, %v371
    %v416 = vpack.c.b16 %v376, %v372
    %v417 = vpack.c.b16 %v381, %v377
    %v418 = vpack.c.b16 %v382, %v378
    %v419 = vpack.c.b16 %v383, %v379
    %v420 = vpack.c.b16 %v384, %v380
    %v421 = vpack.c.b16 %v389, %v385
    %v422 = vpack.c.b16 %v390, %v386
    %v423 = vpack.c.b16 %v391, %v387
    %v424 = vpack.c.b16 %v392, %v388
    %457 = vmatprep.subr.bf16.mxu0 %v394
    %458 = vmatpush1.bf16.msra.mxu0 %v393
    %459 = vmatprep.subr.bf16.mxu0 %v398
    %460 = vmatpush1.bf16.msra.mxu0 %v397
    %461 = vmatprep.subr.bf16.mxu0 %v402
    %462 = vmatpush1.bf16.msra.mxu0 %v401
    %463 = vmatprep.subr.bf16.mxu0 %v406
    %464 = vmatpush1.bf16.msra.mxu0 %v405
    %465 = vmatprep.subr.bf16.mxu0 %v410
    %466 = vmatpush1.bf16.msra.mxu0 %v409
    %467 = vmatprep.subr.bf16.mxu0 %v414
    %468 = vmatpush1.bf16.msra.mxu0 %v413
    %469 = vmatprep.subr.bf16.mxu0 %v418
    %470 = vmatpush1.bf16.msra.mxu0 %v417
    %471 = vmatprep.subr.bf16.mxu0 %v422
    %472 = vmatpush1.bf16.msra.mxu0 %v421
    %473 = vmatprep.subr.bf16.mxu0 0
    %474 = vmatpush1.bf16.msra.mxu0 0
    %475 = vmatprep.subr.bf16.mxu0 0
    %476 = vmatpush1.bf16.msra.mxu0 0
    %477 = vmatprep.subr.bf16.mxu0 0
    %478 = vmatpush1.bf16.msra.mxu0 0
    %479 = vmatprep.subr.bf16.mxu0 0
    %480 = vmatpush1.bf16.msra.mxu0 0
    %481 = vmatprep.subr.bf16.mxu0 0
    %482 = vmatpush1.bf16.msra.mxu0 0
    %483 = vmatprep.subr.bf16.mxu0 0
    %484 = vmatpush1.bf16.msra.mxu0 0
    %485 = vmatprep.subr.bf16.mxu0 0
    %486 = vmatpush1.bf16.msra.mxu0 0
    %487 = vmatprep.subr.bf16.mxu0 0
    %488 = vmatpush1.bf16.msra.mxu0 0
    %489 = vmatprep.mubr.bf16.mxu0 0
    %490 = vmatmul.mubr.bf16.gmra.mrb[0].mxu0 %v242
    %v491 = vpop.f32.mrb[0].mxu0
    %v492 = vadd.f32 %v280, %v491
    %v493 = vpop.f32.mrb[0].mxu0
    %v494 = vadd.f32 %v284, %v493
    %v495 = vpop.f32.mrb[0].mxu0
    %v496 = vpop.f32.mrb[0].mxu0
    %497 = vdwg.mxu0
    %498 = vmatprep.subr.bf16.mxu0 %v396
    %499 = vmatpush1.bf16.msra.mxu0 %v395
    %500 = vmatprep.subr.bf16.mxu0 %v400
    %501 = vmatpush1.bf16.msra.mxu0 %v399
    %502 = vmatprep.subr.bf16.mxu0 %v404
    %503 = vmatpush1.bf16.msra.mxu0 %v403
    %504 = vmatprep.subr.bf16.mxu0 %v408
    %505 = vmatpush1.bf16.msra.mxu0 %v407
    %506 = vmatprep.subr.bf16.mxu0 %v412
    %507 = vmatpush1.bf16.msra.mxu0 %v411
    %508 = vmatprep.subr.bf16.mxu0 %v416
    %509 = vmatpush1.bf16.msra.mxu0 %v415
    %510 = vmatprep.subr.bf16.mxu0 %v420
    %511 = vmatpush1.bf16.msra.mxu0 %v419
    %512 = vmatprep.subr.bf16.mxu0 %v424
    %513 = vmatpush1.bf16.msra.mxu0 %v423
    %514 = vmatprep.subr.bf16.mxu0 0
    %515 = vmatpush1.bf16.msra.mxu0 0
    %516 = vmatprep.subr.bf16.mxu0 0
    %517 = vmatpush1.bf16.msra.mxu0 0
    %518 = vmatprep.subr.bf16.mxu0 0
    %519 = vmatpush1.bf16.msra.mxu0 0
    %520 = vmatprep.subr.bf16.mxu0 0
    %521 = vmatpush1.bf16.msra.mxu0 0
    %522 = vmatprep.subr.bf16.mxu0 0
    %523 = vmatpush1.bf16.msra.mxu0 0
    %524 = vmatprep.subr.bf16.mxu0 0
    %525 = vmatpush1.bf16.msra.mxu0 0
    %526 = vmatprep.subr.bf16.mxu0 0
    %527 = vmatpush1.bf16.msra.mxu0 0
    %528 = vmatprep.subr.bf16.mxu0 0
    %529 = vmatpush1.bf16.msra.mxu0 0
    %530 = vmatprep.mubr.bf16.mxu0 0
    %531 = vmatmul.mubr.bf16.gmra.mrb[0].mxu0 %v242
    %v532 = vpop.f32.mrb[0].mxu0
    %v533 = vadd.f32 %v288, %v532
    %v534 = vpop.f32.mrb[0].mxu0
    %v535 = vadd.f32 %v292, %v534
    %v536 = vpop.f32.mrb[0].mxu0
    %v537 = vpop.f32.mrb[0].mxu0
    %538 = vdwg.mxu0
    %v539 = vpack.c.bf16 %v492, %v492
    %v540 = vpack.c.bf16 %v494, %v494
    %v541 = vpack.c.bf16 %v533, %v533
    %v542 = vpack.c.bf16 %v535, %v535
    %v543 = vlaneseq
    %v544 = vand.u32 %v543, 127
    %vm545 = vcmp.lt.s32.totalorder %v544, 8
    %v546 = vsel %vm545, 0.0, -1e+30
    %v563 = vunpack.c.l.b16 %v146
    %v564 = vunpack.c.l.b16 %v147
    %v565 = vunpack.c.l.b16 %v148
    %v566 = vunpack.c.l.b16 %v149
    %v567 = vunpack.c.l.b16 %v150
    %v568 = vunpack.c.l.b16 %v151
    %v569 = vunpack.c.l.b16 %v152
    %v570 = vunpack.c.l.b16 %v153
    %v571 = vunpack.c.l.b16 %v154
    %v572 = vunpack.c.l.b16 %v155
    %v573 = vunpack.c.l.b16 %v156
    %v574 = vunpack.c.l.b16 %v157
    %v575 = vunpack.c.l.b16 %v158
    %v576 = vunpack.c.l.b16 %v159
    %v577 = vunpack.c.l.b16 %v160
    %v578 = vunpack.c.l.b16 %v161
    %v579 = vpack.c.b16 %v564, %v563
    %v580 = vpack.c.b16 %v566, %v565
    %v581 = vpack.c.b16 %v568, %v567
    %v582 = vpack.c.b16 %v570, %v569
    %v583 = vpack.c.b16 %v572, %v571
    %v584 = vpack.c.b16 %v574, %v573
    %v585 = vpack.c.b16 %v576, %v575
    %v586 = vpack.c.b16 %v578, %v577
    %595 = vmatprep.subr.bf16.mxu0 0
    %596 = vmatpush1.bf16.msra.mxu0 %v579
    %597 = vmatprep.subr.bf16.mxu0 0
    %598 = vmatpush1.bf16.msra.mxu0 %v580
    %599 = vmatprep.subr.bf16.mxu0 0
    %600 = vmatpush1.bf16.msra.mxu0 %v581
    %601 = vmatprep.subr.bf16.mxu0 0
    %602 = vmatpush1.bf16.msra.mxu0 %v582
    %603 = vmatprep.subr.bf16.mxu0 0
    %604 = vmatpush1.bf16.msra.mxu0 %v583
    %605 = vmatprep.subr.bf16.mxu0 0
    %606 = vmatpush1.bf16.msra.mxu0 %v584
    %607 = vmatprep.subr.bf16.mxu0 0
    %608 = vmatpush1.bf16.msra.mxu0 %v585
    %609 = vmatprep.subr.bf16.mxu0 0
    %610 = vmatpush1.bf16.msra.mxu0 %v586
    %611 = vmatprep.subr.bf16.mxu0 0
    %612 = vmatpush1.bf16.msra.mxu0 0
    %613 = vmatprep.subr.bf16.mxu0 0
    %614 = vmatpush1.bf16.msra.mxu0 0
    %615 = vmatprep.subr.bf16.mxu0 0
    %616 = vmatpush1.bf16.msra.mxu0 0
    %617 = vmatprep.subr.bf16.mxu0 0
    %618 = vmatpush1.bf16.msra.mxu0 0
    %619 = vmatprep.subr.bf16.mxu0 0
    %620 = vmatpush1.bf16.msra.mxu0 0
    %621 = vmatprep.subr.bf16.mxu0 0
    %622 = vmatpush1.bf16.msra.mxu0 0
    %623 = vmatprep.subr.bf16.mxu0 0
    %624 = vmatpush1.bf16.msra.mxu0 0
    %625 = vmatprep.subr.bf16.mxu0 0
    %626 = vmatpush1.bf16.msra.mxu0 0
    %627 = vmatprep.mubr.bf16.mxu0 0
    %628 = vmatmul.mubr.bf16.gmra.mrb[0].mxu0 %v539
    %v629 = vpop.f32.mrb[0].mxu0
    %v630 = vadd.f32 %v546, %v629
    %v631 = vpop.f32.mrb[0].mxu0
    %v632 = vpop.f32.mrb[0].mxu0
    %v633 = vpop.f32.mrb[0].mxu0
    %634 = vdwg.mxu0
    %635 = vmax.xlane.f32.xlu0 %v630
    %v636 = vpop.xlane.xlu0 %635
    %v637 = vsub.f32 %v630, %v636
    %v638 = vmul.f32 %v637, 1.442695
    %v639 = vpow.pop %v638
    %640 = vadd.xlane.f32.xlu0 %v639
    %v641 = vpop.xlane.xlu0 %640
    %v642 = vrcp.pop %v641
    %v643 = vmul.f32 %v639, %v642
    %v644 = vpack.c.bf16 %v643, %v643
    %v661 = vunpack.c.l.b16 %v210
    %v662 = vunpack.c.l.b16 %v212
    %v663 = vunpack.c.l.b16 %v214
    %v664 = vunpack.c.l.b16 %v216
    %v665 = vunpack.c.l.b16 %v218
    %v666 = vunpack.c.l.b16 %v220
    %v667 = vunpack.c.l.b16 %v222
    %v668 = vunpack.c.l.b16 %v224
    %v669 = vunpack.c.l.b16 %v226
    %v670 = vunpack.c.l.b16 %v228
    %v671 = vunpack.c.l.b16 %v230
    %v672 = vunpack.c.l.b16 %v232
    %v673 = vunpack.c.l.b16 %v234
    %v674 = vunpack.c.l.b16 %v236
    %v675 = vunpack.c.l.b16 %v238
    %v676 = vunpack.c.l.b16 %v240
    %v677 = vpack.c.b16 %v662, %v661
    %v678 = vpack.c.b16 %v664, %v663
    %v679 = vpack.c.b16 %v666, %v665
    %v680 = vpack.c.b16 %v668, %v667
    %v681 = vpack.c.b16 %v670, %v669
    %v682 = vpack.c.b16 %v672, %v671
    %v683 = vpack.c.b16 %v674, %v673
    %v684 = vpack.c.b16 %v676, %v675
    %693 = vmatprep.subr.bf16.mxu0 0
    %694 = vmatpush1.bf16.msra.mxu0 %v677
    %695 = vmatprep.subr.bf16.mxu0 0
    %696 = vmatpush1.bf16.msra.mxu0 %v678
    %697 = vmatprep.subr.bf16.mxu0 0
    %698 = vmatpush1.bf16.msra.mxu0 %v679
    %699 = vmatprep.subr.bf16.mxu0 0
    %700 = vmatpush1.bf16.msra.mxu0 %v680
    %701 = vmatprep.subr.bf16.mxu0 0
    %702 = vmatpush1.bf16.msra.mxu0 %v681
    %703 = vmatprep.subr.bf16.mxu0 0
    %704 = vmatpush1.bf16.msra.mxu0 %v682
    %705 = vmatprep.subr.bf16.mxu0 0
    %706 = vmatpush1.bf16.msra.mxu0 %v683
    %707 = vmatprep.subr.bf16.mxu0 0
    %708 = vmatpush1.bf16.msra.mxu0 %v684
    %709 = vmatprep.subr.bf16.mxu0 0
    %710 = vmatpush1.bf16.msra.mxu0 0
    %711 = vmatprep.subr.bf16.mxu0 0
    %712 = vmatpush1.bf16.msra.mxu0 0
    %713 = vmatprep.subr.bf16.mxu0 0
    %714 = vmatpush1.bf16.msra.mxu0 0
    %715 = vmatprep.subr.bf16.mxu0 0
    %716 = vmatpush1.bf16.msra.mxu0 0
    %717 = vmatprep.subr.bf16.mxu0 0
    %718 = vmatpush1.bf16.msra.mxu0 0
    %719 = vmatprep.subr.bf16.mxu0 0
    %720 = vmatpush1.bf16.msra.mxu0 0
    %721 = vmatprep.subr.bf16.mxu0 0
    %722 = vmatpush1.bf16.msra.mxu0 0
    %723 = vmatprep.subr.bf16.mxu0 0
    %724 = vmatpush1.bf16.msra.mxu0 0
    %725 = vmatprep.mubr.bf16.mxu0 0
    %726 = vmatmul.mubr.bf16.gmra.mrb[0].mxu0 %v644
    %v727 = vpop.f32.mrb[0].mxu0
    %v728 = vadd.f32 0.0, %v727
    %v729 = vpop.f32.mrb[0].mxu0
    %v730 = vpop.f32.mrb[0].mxu0
    %v731 = vpop.f32.mrb[0].mxu0
    %732 = vdwg.mxu0
    %v749 = vunpack.c.l.b16 %v162
    %v750 = vunpack.c.l.b16 %v163
    %v751 = vunpack.c.l.b16 %v164
    %v752 = vunpack.c.l.b16 %v165
    %v753 = vunpack.c.l.b16 %v166
    %v754 = vunpack.c.l.b16 %v167
    %v755 = vunpack.c.l.b16 %v168
    %v756 = vunpack.c.l.b16 %v169
    %v757 = vunpack.c.l.b16 %v170
    %v758 = vunpack.c.l.b16 %v171
    %v759 = vunpack.c.l.b16 %v172
    %v760 = vunpack.c.l.b16 %v173
    %v761 = vunpack.c.l.b16 %v174
    %v762 = vunpack.c.l.b16 %v175
    %v763 = vunpack.c.l.b16 %v176
    %v764 = vunpack.c.l.b16 %v177
    %v765 = vpack.c.b16 %v750, %v749
    %v766 = vpack.c.b16 %v752, %v751
    %v767 = vpack.c.b16 %v754, %v753
    %v768 = vpack.c.b16 %v756, %v755
    %v769 = vpack.c.b16 %v758, %v757
    %v770 = vpack.c.b16 %v760, %v759
    %v771 = vpack.c.b16 %v762, %v761
    %v772 = vpack.c.b16 %v764, %v763
    %781 = vmatprep.subr.bf16.mxu0 0
    %782 = vmatpush1.bf16.msra.mxu0 %v765
    %783 = vmatprep.subr.bf16.mxu0 0
    %784 = vmatpush1.bf16.msra.mxu0 %v766
    %785 = vmatprep.subr.bf16.mxu0 0
    %786 = vmatpush1.bf16.msra.mxu0 %v767
    %787 = vmatprep.subr.bf16.mxu0 0
    %788 = vmatpush1.bf16.msra.mxu0 %v768
    %789 = vmatprep.subr.bf16.mxu0 0
    %790 = vmatpush1.bf16.msra.mxu0 %v769
    %791 = vmatprep.subr.bf16.mxu0 0
    %792 = vmatpush1.bf16.msra.mxu0 %v770
    %793 = vmatprep.subr.bf16.mxu0 0
    %794 = vmatpush1.bf16.msra.mxu0 %v771
    %795 = vmatprep.subr.bf16.mxu0 0
    %796 = vmatpush1.bf16.msra.mxu0 %v772
    %797 = vmatprep.subr.bf16.mxu0 0
    %798 = vmatpush1.bf16.msra.mxu0 0
    %799 = vmatprep.subr.bf16.mxu0 0
    %800 = vmatpush1.bf16.msra.mxu0 0
    %801 = vmatprep.subr.bf16.mxu0 0
    %802 = vmatpush1.bf16.msra.mxu0 0
    %803 = vmatprep.subr.bf16.mxu0 0
    %804 = vmatpush1.bf16.msra.mxu0 0
    %805 = vmatprep.subr.bf16.mxu0 0
    %806 = vmatpush1.bf16.msra.mxu0 0
    %807 = vmatprep.subr.bf16.mxu0 0
    %808 = vmatpush1.bf16.msra.mxu0 0
    %809 = vmatprep.subr.bf16.mxu0 0
    %810 = vmatpush1.bf16.msra.mxu0 0
    %811 = vmatprep.subr.bf16.mxu0 0
    %812 = vmatpush1.bf16.msra.mxu0 0
    %813 = vmatprep.mubr.bf16.mxu0 0
    %814 = vmatmul.mubr.bf16.gmra.mrb[0].mxu0 %v540
    %v815 = vpop.f32.mrb[0].mxu0
    %v816 = vadd.f32 %v546, %v815
    %v817 = vpop.f32.mrb[0].mxu0
    %v818 = vpop.f32.mrb[0].mxu0
    %v819 = vpop.f32.mrb[0].mxu0
    %820 = vdwg.mxu0
    %821 = vmax.xlane.f32.xlu0 %v816
    %v822 = vpop.xlane.xlu0 %821
    %v823 = vsub.f32 %v816, %v822
    %v824 = vmul.f32 %v823, 1.442695
    %v825 = vpow.pop %v824
    %826 = vadd.xlane.f32.xlu0 %v825
    %v827 = vpop.xlane.xlu0 %826
    %v828 = vrcp.pop %v827
    %v829 = vmul.f32 %v825, %v828
    %v830 = vpack.c.bf16 %v829, %v829
    %v831 = vunpack.c.h.b16 %v210
    %v832 = vunpack.c.h.b16 %v212
    %v833 = vunpack.c.h.b16 %v214
    %v834 = vunpack.c.h.b16 %v216
    %v835 = vunpack.c.h.b16 %v218
    %v836 = vunpack.c.h.b16 %v220
    %v837 = vunpack.c.h.b16 %v222
    %v838 = vunpack.c.h.b16 %v224
    %v839 = vunpack.c.h.b16 %v226
    %v840 = vunpack.c.h.b16 %v228
    %v841 = vunpack.c.h.b16 %v230
    %v842 = vunpack.c.h.b16 %v232
    %v843 = vunpack.c.h.b16 %v234
    %v844 = vunpack.c.h.b16 %v236
    %v845 = vunpack.c.h.b16 %v238
    %v846 = vunpack.c.h.b16 %v240
    %v847 = vpack.c.b16 %v832, %v831
    %v848 = vpack.c.b16 %v834, %v833
    %v849 = vpack.c.b16 %v836, %v835
    %v850 = vpack.c.b16 %v838, %v837
    %v851 = vpack.c.b16 %v840, %v839
    %v852 = vpack.c.b16 %v842, %v841
    %v853 = vpack.c.b16 %v844, %v843
    %v854 = vpack.c.b16 %v846, %v845
    %863 = vmatprep.subr.bf16.mxu0 0
    %864 = vmatpush1.bf16.msra.mxu0 %v847
    %865 = vmatprep.subr.bf16.mxu0 0
    %866 = vmatpush1.bf16.msra.mxu0 %v848
    %867 = vmatprep.subr.bf16.mxu0 0
    %868 = vmatpush1.bf16.msra.mxu0 %v849
    %869 = vmatprep.subr.bf16.mxu0 0
    %870 = vmatpush1.bf16.msra.mxu0 %v850
    %871 = vmatprep.subr.bf16.mxu0 0
    %872 = vmatpush1.bf16.msra.mxu0 %v851
    %873 = vmatprep.subr.bf16.mxu0 0
    %874 = vmatpush1.bf16.msra.mxu0 %v852
    %875 = vmatprep.subr.bf16.mxu0 0
    %876 = vmatpush1.bf16.msra.mxu0 %v853
    %877 = vmatprep.subr.bf16.mxu0 0
    %878 = vmatpush1.bf16.msra.mxu0 %v854
    %879 = vmatprep.subr.bf16.mxu0 0
    %880 = vmatpush1.bf16.msra.mxu0 0
    %881 = vmatprep.subr.bf16.mxu0 0
    %882 = vmatpush1.bf16.msra.mxu0 0
    %883 = vmatprep.subr.bf16.mxu0 0
    %884 = vmatpush1.bf16.msra.mxu0 0
    %885 = vmatprep.subr.bf16.mxu0 0
    %886 = vmatpush1.bf16.msra.mxu0 0
    %887 = vmatprep.subr.bf16.mxu0 0
    %888 = vmatpush1.bf16.msra.mxu0 0
    %889 = vmatprep.subr.bf16.mxu0 0
    %890 = vmatpush1.bf16.msra.mxu0 0
    %891 = vmatprep.subr.bf16.mxu0 0
    %892 = vmatpush1.bf16.msra.mxu0 0
    %893 = vmatprep.subr.bf16.mxu0 0
    %894 = vmatpush1.bf16.msra.mxu0 0
    %895 = vmatprep.mubr.bf16.mxu0 0
    %896 = vmatmul.mubr.bf16.gmra.mrb[0].mxu0 %v830
    %v897 = vpop.f32.mrb[0].mxu0
    %v898 = vadd.f32 0.0, %v897
    %v899 = vpop.f32.mrb[0].mxu0
    %v900 = vpop.f32.mrb[0].mxu0
    %v901 = vpop.f32.mrb[0].mxu0
    %902 = vdwg.mxu0
    %v919 = vunpack.c.l.b16 %v178
    %v920 = vunpack.c.l.b16 %v179
    %v921 = vunpack.c.l.b16 %v180
    %v922 = vunpack.c.l.b16 %v181
    %v923 = vunpack.c.l.b16 %v182
    %v924 = vunpack.c.l.b16 %v183
    %v925 = vunpack.c.l.b16 %v184
    %v926 = vunpack.c.l.b16 %v185
    %v927 = vunpack.c.l.b16 %v186
    %v928 = vunpack.c.l.b16 %v187
    %v929 = vunpack.c.l.b16 %v188
    %v930 = vunpack.c.l.b16 %v189
    %v931 = vunpack.c.l.b16 %v190
    %v932 = vunpack.c.l.b16 %v191
    %v933 = vunpack.c.l.b16 %v192
    %v934 = vunpack.c.l.b16 %v193
    %v935 = vpack.c.b16 %v920, %v919
    %v936 = vpack.c.b16 %v922, %v921
    %v937 = vpack.c.b16 %v924, %v923
    %v938 = vpack.c.b16 %v926, %v925
    %v939 = vpack.c.b16 %v928, %v927
    %v940 = vpack.c.b16 %v930, %v929
    %v941 = vpack.c.b16 %v932, %v931
    %v942 = vpack.c.b16 %v934, %v933
    %951 = vmatprep.subr.bf16.mxu0 0
    %952 = vmatpush1.bf16.msra.mxu0 %v935
    %953 = vmatprep.subr.bf16.mxu0 0
    %954 = vmatpush1.bf16.msra.mxu0 %v936
    %955 = vmatprep.subr.bf16.mxu0 0
    %956 = vmatpush1.bf16.msra.mxu0 %v937
    %957 = vmatprep.subr.bf16.mxu0 0
    %958 = vmatpush1.bf16.msra.mxu0 %v938
    %959 = vmatprep.subr.bf16.mxu0 0
    %960 = vmatpush1.bf16.msra.mxu0 %v939
    %961 = vmatprep.subr.bf16.mxu0 0
    %962 = vmatpush1.bf16.msra.mxu0 %v940
    %963 = vmatprep.subr.bf16.mxu0 0
    %964 = vmatpush1.bf16.msra.mxu0 %v941
    %965 = vmatprep.subr.bf16.mxu0 0
    %966 = vmatpush1.bf16.msra.mxu0 %v942
    %967 = vmatprep.subr.bf16.mxu0 0
    %968 = vmatpush1.bf16.msra.mxu0 0
    %969 = vmatprep.subr.bf16.mxu0 0
    %970 = vmatpush1.bf16.msra.mxu0 0
    %971 = vmatprep.subr.bf16.mxu0 0
    %972 = vmatpush1.bf16.msra.mxu0 0
    %973 = vmatprep.subr.bf16.mxu0 0
    %974 = vmatpush1.bf16.msra.mxu0 0
    %975 = vmatprep.subr.bf16.mxu0 0
    %976 = vmatpush1.bf16.msra.mxu0 0
    %977 = vmatprep.subr.bf16.mxu0 0
    %978 = vmatpush1.bf16.msra.mxu0 0
    %979 = vmatprep.subr.bf16.mxu0 0
    %980 = vmatpush1.bf16.msra.mxu0 0
    %981 = vmatprep.subr.bf16.mxu0 0
    %982 = vmatpush1.bf16.msra.mxu0 0
    %983 = vmatprep.mubr.bf16.mxu0 0
    %984 = vmatmul.mubr.bf16.gmra.mrb[0].mxu0 %v541
    %v985 = vpop.f32.mrb[0].mxu0
    %v986 = vadd.f32 %v546, %v985
    %v987 = vpop.f32.mrb[0].mxu0
    %v988 = vpop.f32.mrb[0].mxu0
    %v989 = vpop.f32.mrb[0].mxu0
    %990 = vdwg.mxu0
    %991 = vmax.xlane.f32.xlu0 %v986
    %v992 = vpop.xlane.xlu0 %991
    %v993 = vsub.f32 %v986, %v992
    %v994 = vmul.f32 %v993, 1.442695
    %v995 = vpow.pop %v994
    %996 = vadd.xlane.f32.xlu0 %v995
    %v997 = vpop.xlane.xlu0 %996
    %v998 = vrcp.pop %v997
    %v999 = vmul.f32 %v995, %v998
    %v1000 = vpack.c.bf16 %v999, %v999
    %v1017 = vunpack.c.l.b16 %v211
    %v1018 = vunpack.c.l.b16 %v213
    %v1019 = vunpack.c.l.b16 %v215
    %v1020 = vunpack.c.l.b16 %v217
    %v1021 = vunpack.c.l.b16 %v219
    %v1022 = vunpack.c.l.b16 %v221
    %v1023 = vunpack.c.l.b16 %v223
    %v1024 = vunpack.c.l.b16 %v225
    %v1025 = vunpack.c.l.b16 %v227
    %v1026 = vunpack.c.l.b16 %v229
    %v1027 = vunpack.c.l.b16 %v231
    %v1028 = vunpack.c.l.b16 %v233
    %v1029 = vunpack.c.l.b16 %v235
    %v1030 = vunpack.c.l.b16 %v237
    %v1031 = vunpack.c.l.b16 %v239
    %v1032 = vunpack.c.l.b16 %v241
    %v1033 = vpack.c.b16 %v1018, %v1017
    %v1034 = vpack.c.b16 %v1020, %v1019
    %v1035 = vpack.c.b16 %v1022, %v1021
    %v1036 = vpack.c.b16 %v1024, %v1023
    %v1037 = vpack.c.b16 %v1026, %v1025
    %v1038 = vpack.c.b16 %v1028, %v1027
    %v1039 = vpack.c.b16 %v1030, %v1029
    %v1040 = vpack.c.b16 %v1032, %v1031
    %1049 = vmatprep.subr.bf16.mxu0 0
    %1050 = vmatpush1.bf16.msra.mxu0 %v1033
    %1051 = vmatprep.subr.bf16.mxu0 0
    %1052 = vmatpush1.bf16.msra.mxu0 %v1034
    %1053 = vmatprep.subr.bf16.mxu0 0
    %1054 = vmatpush1.bf16.msra.mxu0 %v1035
    %1055 = vmatprep.subr.bf16.mxu0 0
    %1056 = vmatpush1.bf16.msra.mxu0 %v1036
    %1057 = vmatprep.subr.bf16.mxu0 0
    %1058 = vmatpush1.bf16.msra.mxu0 %v1037
    %1059 = vmatprep.subr.bf16.mxu0 0
    %1060 = vmatpush1.bf16.msra.mxu0 %v1038
    %1061 = vmatprep.subr.bf16.mxu0 0
    %1062 = vmatpush1.bf16.msra.mxu0 %v1039
    %1063 = vmatprep.subr.bf16.mxu0 0
    %1064 = vmatpush1.bf16.msra.mxu0 %v1040
    %1065 = vmatprep.subr.bf16.mxu0 0
    %1066 = vmatpush1.bf16.msra.mxu0 0
    %1067 = vmatprep.subr.bf16.mxu0 0
    %1068 = vmatpush1.bf16.msra.mxu0 0
    %1069 = vmatprep.subr.bf16.mxu0 0
    %1070 = vmatpush1.bf16.msra.mxu0 0
    %1071 = vmatprep.subr.bf16.mxu0 0
    %1072 = vmatpush1.bf16.msra.mxu0 0
    %1073 = vmatprep.subr.bf16.mxu0 0
    %1074 = vmatpush1.bf16.msra.mxu0 0
    %1075 = vmatprep.subr.bf16.mxu0 0
    %1076 = vmatpush1.bf16.msra.mxu0 0
    %1077 = vmatprep.subr.bf16.mxu0 0
    %1078 = vmatpush1.bf16.msra.mxu0 0
    %1079 = vmatprep.subr.bf16.mxu0 0
    %1080 = vmatpush1.bf16.msra.mxu0 0
    %1081 = vmatprep.mubr.bf16.mxu0 0
    %1082 = vmatmul.mubr.bf16.gmra.mrb[0].mxu0 %v1000
    %v1083 = vpop.f32.mrb[0].mxu0
    %v1084 = vadd.f32 0.0, %v1083
    %v1085 = vpop.f32.mrb[0].mxu0
    %v1086 = vpop.f32.mrb[0].mxu0
    %v1087 = vpop.f32.mrb[0].mxu0
    %1088 = vdwg.mxu0
    %v1105 = vunpack.c.l.b16 %v194
    %v1106 = vunpack.c.l.b16 %v195
    %v1107 = vunpack.c.l.b16 %v196
    %v1108 = vunpack.c.l.b16 %v197
    %v1109 = vunpack.c.l.b16 %v198
    %v1110 = vunpack.c.l.b16 %v199
    %v1111 = vunpack.c.l.b16 %v200
    %v1112 = vunpack.c.l.b16 %v201
    %v1113 = vunpack.c.l.b16 %v202
    %v1114 = vunpack.c.l.b16 %v203
    %v1115 = vunpack.c.l.b16 %v204
    %v1116 = vunpack.c.l.b16 %v205
    %v1117 = vunpack.c.l.b16 %v206
    %v1118 = vunpack.c.l.b16 %v207
    %v1119 = vunpack.c.l.b16 %v208
    %v1120 = vunpack.c.l.b16 %v209
    %v1121 = vpack.c.b16 %v1106, %v1105
    %v1122 = vpack.c.b16 %v1108, %v1107
    %v1123 = vpack.c.b16 %v1110, %v1109
    %v1124 = vpack.c.b16 %v1112, %v1111
    %v1125 = vpack.c.b16 %v1114, %v1113
    %v1126 = vpack.c.b16 %v1116, %v1115
    %v1127 = vpack.c.b16 %v1118, %v1117
    %v1128 = vpack.c.b16 %v1120, %v1119
    %1137 = vmatprep.subr.bf16.mxu0 0
    %1138 = vmatpush1.bf16.msra.mxu0 %v1121
    %1139 = vmatprep.subr.bf16.mxu0 0
    %1140 = vmatpush1.bf16.msra.mxu0 %v1122
    %1141 = vmatprep.subr.bf16.mxu0 0
    %1142 = vmatpush1.bf16.msra.mxu0 %v1123
    %1143 = vmatprep.subr.bf16.mxu0 0
    %1144 = vmatpush1.bf16.msra.mxu0 %v1124
    %1145 = vmatprep.subr.bf16.mxu0 0
    %1146 = vmatpush1.bf16.msra.mxu0 %v1125
    %1147 = vmatprep.subr.bf16.mxu0 0
    %1148 = vmatpush1.bf16.msra.mxu0 %v1126
    %1149 = vmatprep.subr.bf16.mxu0 0
    %1150 = vmatpush1.bf16.msra.mxu0 %v1127
    %1151 = vmatprep.subr.bf16.mxu0 0
    %1152 = vmatpush1.bf16.msra.mxu0 %v1128
    %1153 = vmatprep.subr.bf16.mxu0 0
    %1154 = vmatpush1.bf16.msra.mxu0 0
    %1155 = vmatprep.subr.bf16.mxu0 0
    %1156 = vmatpush1.bf16.msra.mxu0 0
    %1157 = vmatprep.subr.bf16.mxu0 0
    %1158 = vmatpush1.bf16.msra.mxu0 0
    %1159 = vmatprep.subr.bf16.mxu0 0
    %1160 = vmatpush1.bf16.msra.mxu0 0
    %1161 = vmatprep.subr.bf16.mxu0 0
    %1162 = vmatpush1.bf16.msra.mxu0 0
    %1163 = vmatprep.subr.bf16.mxu0 0
    %1164 = vmatpush1.bf16.msra.mxu0 0
    %1165 = vmatprep.subr.bf16.mxu0 0
    %1166 = vmatpush1.bf16.msra.mxu0 0
    %1167 = vmatprep.subr.bf16.mxu0 0
    %1168 = vmatpush1.bf16.msra.mxu0 0
    %1169 = vmatprep.mubr.bf16.mxu0 0
    %1170 = vmatmul.mubr.bf16.gmra.mrb[0].mxu0 %v542
    %v1171 = vpop.f32.mrb[0].mxu0
    %v1172 = vadd.f32 %v546, %v1171
    %v1173 = vpop.f32.mrb[0].mxu0
    %v1174 = vpop.f32.mrb[0].mxu0
    %v1175 = vpop.f32.mrb[0].mxu0
    %1176 = vdwg.mxu0
    %1177 = vmax.xlane.f32.xlu0 %v1172
    %v1178 = vpop.xlane.xlu0 %1177
    %v1179 = vsub.f32 %v1172, %v1178
    %v1180 = vmul.f32 %v1179, 1.442695
    %v1181 = vpow.pop %v1180
    %1182 = vadd.xlane.f32.xlu0 %v1181
    %v1183 = vpop.xlane.xlu0 %1182
    %v1184 = vrcp.pop %v1183
    %v1185 = vmul.f32 %v1181, %v1184
    %v1186 = vpack.c.bf16 %v1185, %v1185
    %v1187 = vunpack.c.h.b16 %v211
    %v1188 = vunpack.c.h.b16 %v213
    %v1189 = vunpack.c.h.b16 %v215
    %v1190 = vunpack.c.h.b16 %v217
    %v1191 = vunpack.c.h.b16 %v219
    %v1192 = vunpack.c.h.b16 %v221
    %v1193 = vunpack.c.h.b16 %v223
    %v1194 = vunpack.c.h.b16 %v225
    %v1195 = vunpack.c.h.b16 %v227
    %v1196 = vunpack.c.h.b16 %v229
    %v1197 = vunpack.c.h.b16 %v231
    %v1198 = vunpack.c.h.b16 %v233
    %v1199 = vunpack.c.h.b16 %v235
    %v1200 = vunpack.c.h.b16 %v237
    %v1201 = vunpack.c.h.b16 %v239
    %v1202 = vunpack.c.h.b16 %v241
    %v1203 = vpack.c.b16 %v1188, %v1187
    %v1204 = vpack.c.b16 %v1190, %v1189
    %v1205 = vpack.c.b16 %v1192, %v1191
    %v1206 = vpack.c.b16 %v1194, %v1193
    %v1207 = vpack.c.b16 %v1196, %v1195
    %v1208 = vpack.c.b16 %v1198, %v1197
    %v1209 = vpack.c.b16 %v1200, %v1199
    %v1210 = vpack.c.b16 %v1202, %v1201
    %1219 = vmatprep.subr.bf16.mxu0 0
    %1220 = vmatpush1.bf16.msra.mxu0 %v1203
    %1221 = vmatprep.subr.bf16.mxu0 0
    %1222 = vmatpush1.bf16.msra.mxu0 %v1204
    %1223 = vmatprep.subr.bf16.mxu0 0
    %1224 = vmatpush1.bf16.msra.mxu0 %v1205
    %1225 = vmatprep.subr.bf16.mxu0 0
    %1226 = vmatpush1.bf16.msra.mxu0 %v1206
    %1227 = vmatprep.subr.bf16.mxu0 0
    %1228 = vmatpush1.bf16.msra.mxu0 %v1207
    %1229 = vmatprep.subr.bf16.mxu0 0
    %1230 = vmatpush1.bf16.msra.mxu0 %v1208
    %1231 = vmatprep.subr.bf16.mxu0 0
    %1232 = vmatpush1.bf16.msra.mxu0 %v1209
    %1233 = vmatprep.subr.bf16.mxu0 0
    %1234 = vmatpush1.bf16.msra.mxu0 %v1210
    %1235 = vmatprep.subr.bf16.mxu0 0
    %1236 = vmatpush1.bf16.msra.mxu0 0
    %1237 = vmatprep.subr.bf16.mxu0 0
    %1238 = vmatpush1.bf16.msra.mxu0 0
    %1239 = vmatprep.subr.bf16.mxu0 0
    %1240 = vmatpush1.bf16.msra.mxu0 0
    %1241 = vmatprep.subr.bf16.mxu0 0
    %1242 = vmatpush1.bf16.msra.mxu0 0
    %1243 = vmatprep.subr.bf16.mxu0 0
    %1244 = vmatpush1.bf16.msra.mxu0 0
    %1245 = vmatprep.subr.bf16.mxu0 0
    %1246 = vmatpush1.bf16.msra.mxu0 0
    %1247 = vmatprep.subr.bf16.mxu0 0
    %1248 = vmatpush1.bf16.msra.mxu0 0
    %1249 = vmatprep.subr.bf16.mxu0 0
    %1250 = vmatpush1.bf16.msra.mxu0 0
    %1251 = vmatprep.mubr.bf16.mxu0 0
    %1252 = vmatmul.mubr.bf16.gmra.mrb[0].mxu0 %v1186
    %v1253 = vpop.f32.mrb[0].mxu0
    %v1254 = vadd.f32 0.0, %v1253
    %v1255 = vpop.f32.mrb[0].mxu0
    %v1256 = vpop.f32.mrb[0].mxu0
    %v1257 = vpop.f32.mrb[0].mxu0
    %1258 = vdwg.mxu0
    %v1259 = vpack.c.bf16 %v728, %v728
    %v1260 = vpack.c.bf16 %v898, %v898
    %v1261 = vpack.c.bf16 %v1084, %v1084
    %v1262 = vpack.c.bf16 %v1254, %v1254
    %v1263 = vld [vmem:[#allocation10] sm:$0xf]
    %v1264 = vld [vmem:[#allocation10 + $0x4] sm:$0xf]
    %v1265 = vld [vmem:[#allocation10 + $0x8] sm:$0xf]
    %v1266 = vld [vmem:[#allocation10 + $0xc] sm:$0xf]
    %v1267 = vld [vmem:[#allocation10 + $0x10] sm:$0xf]
    %v1268 = vld [vmem:[#allocation10 + $0x14] sm:$0xf]
    %v1269 = vld [vmem:[#allocation10 + $0x18] sm:$0xf]
    %v1270 = vld [vmem:[#allocation10 + $0x1c] sm:$0xf]
    %v1271 = vld [vmem:[#allocation10 + $0x20] sm:$0xf]
    %v1272 = vld [vmem:[#allocation10 + $0x24] sm:$0xf]
    %v1273 = vld [vmem:[#allocation10 + $0x28] sm:$0xf]
    %v1274 = vld [vmem:[#allocation10 + $0x2c] sm:$0xf]
    %v1275 = vld [vmem:[#allocation10 + $0x30] sm:$0xf]
    %v1276 = vld [vmem:[#allocation10 + $0x34] sm:$0xf]
    %v1277 = vld [vmem:[#allocation10 + $0x38] sm:$0xf]
    %v1278 = vld [vmem:[#allocation10 + $0x3c] sm:$0xf]
    %v1279 = vld [vmem:[#allocation10 + $0x40] sm:$0xf]
    %v1280 = vld [vmem:[#allocation10 + $0x44] sm:$0xf]
    %v1281 = vld [vmem:[#allocation10 + $0x48] sm:$0xf]
    %v1282 = vld [vmem:[#allocation10 + $0x4c] sm:$0xf]
    %v1283 = vld [vmem:[#allocation10 + $0x50] sm:$0xf]
    %v1284 = vld [vmem:[#allocation10 + $0x54] sm:$0xf]
    %v1285 = vld [vmem:[#allocation10 + $0x58] sm:$0xf]
    %v1286 = vld [vmem:[#allocation10 + $0x5c] sm:$0xf]
    %v1287 = vld [vmem:[#allocation10 + $0x60] sm:$0xf]
    %v1288 = vld [vmem:[#allocation10 + $0x64] sm:$0xf]
    %v1289 = vld [vmem:[#allocation10 + $0x68] sm:$0xf]
    %v1290 = vld [vmem:[#allocation10 + $0x6c] sm:$0xf]
    %v1291 = vld [vmem:[#allocation10 + $0x70] sm:$0xf]
    %v1292 = vld [vmem:[#allocation10 + $0x74] sm:$0xf]
    %v1293 = vld [vmem:[#allocation10 + $0x78] sm:$0xf]
    %v1294 = vld [vmem:[#allocation10 + $0x7c] sm:$0xf]
    %v1295 = vld [vmem:[#allocation10 + $0x80] sm:$0xf]
    %v1296 = vld [vmem:[#allocation10 + $0x84] sm:$0xf]
    %v1297 = vld [vmem:[#allocation10 + $0x88] sm:$0xf]
    %v1298 = vld [vmem:[#allocation10 + $0x8c] sm:$0xf]
    %v1299 = vld [vmem:[#allocation10 + $0x90] sm:$0xf]
    %v1300 = vld [vmem:[#allocation10 + $0x94] sm:$0xf]
    %v1301 = vld [vmem:[#allocation10 + $0x98] sm:$0xf]
    %v1302 = vld [vmem:[#allocation10 + $0x9c] sm:$0xf]
    %v1303 = vld [vmem:[#allocation10 + $0xa0] sm:$0xf]
    %v1304 = vld [vmem:[#allocation10 + $0xa4] sm:$0xf]
    %v1305 = vld [vmem:[#allocation10 + $0xa8] sm:$0xf]
    %v1306 = vld [vmem:[#allocation10 + $0xac] sm:$0xf]
    %v1307 = vld [vmem:[#allocation10 + $0xb0] sm:$0xf]
    %v1308 = vld [vmem:[#allocation10 + $0xb4] sm:$0xf]
    %v1309 = vld [vmem:[#allocation10 + $0xb8] sm:$0xf]
    %v1310 = vld [vmem:[#allocation10 + $0xbc] sm:$0xf]
    %v1311 = vld [vmem:[#allocation10 + $0xc0] sm:$0xf]
    %v1312 = vld [vmem:[#allocation10 + $0xc4] sm:$0xf]
    %v1313 = vld [vmem:[#allocation10 + $0xc8] sm:$0xf]
    %v1314 = vld [vmem:[#allocation10 + $0xcc] sm:$0xf]
    %v1315 = vld [vmem:[#allocation10 + $0xd0] sm:$0xf]
    %v1316 = vld [vmem:[#allocation10 + $0xd4] sm:$0xf]
    %v1317 = vld [vmem:[#allocation10 + $0xd8] sm:$0xf]
    %v1318 = vld [vmem:[#allocation10 + $0xdc] sm:$0xf]
    %v1319 = vld [vmem:[#allocation10 + $0xe0] sm:$0xf]
    %v1320 = vld [vmem:[#allocation10 + $0xe4] sm:$0xf]
    %v1321 = vld [vmem:[#allocation10 + $0xe8] sm:$0xf]
    %v1322 = vld [vmem:[#allocation10 + $0xec] sm:$0xf]
    %v1323 = vld [vmem:[#allocation10 + $0xf0] sm:$0xf]
    %v1324 = vld [vmem:[#allocation10 + $0xf4] sm:$0xf]
    %v1325 = vld [vmem:[#allocation10 + $0xf8] sm:$0xf]
    %v1326 = vld [vmem:[#allocation10 + $0xfc] sm:$0xf]
    %v1327 = vld [vmem:[%s6] sm:$0x1]
    %v1329 = vlaneseq
    %v1330 = vshrl.u32 %v1329, 7
    %v1331 = vsub.s32 0, %v1330
    %v1332 = vrot.slane %v1327, %v1331
    %v1398 = vunpack.c.l.b16 %v1263
    %v1399 = vunpack.c.l.b16 %v1264
    %v1400 = vunpack.c.l.b16 %v1265
    %v1401 = vunpack.c.l.b16 %v1266
    %v1402 = vunpack.c.l.b16 %v1267
    %v1403 = vunpack.c.l.b16 %v1268
    %v1404 = vunpack.c.l.b16 %v1269
    %v1405 = vunpack.c.l.b16 %v1270
    %v1406 = vunpack.c.l.b16 %v1271
    %v1407 = vunpack.c.l.b16 %v1272
    %v1408 = vunpack.c.l.b16 %v1273
    %v1409 = vunpack.c.l.b16 %v1274
    %v1410 = vunpack.c.l.b16 %v1275
    %v1411 = vunpack.c.l.b16 %v1276
    %v1412 = vunpack.c.l.b16 %v1277
    %v1413 = vunpack.c.l.b16 %v1278
    %v1414 = vunpack.c.l.b16 %v1279
    %v1415 = vunpack.c.l.b16 %v1280
    %v1416 = vunpack.c.l.b16 %v1281
    %v1417 = vunpack.c.l.b16 %v1282
    %v1418 = vunpack.c.l.b16 %v1283
    %v1419 = vunpack.c.l.b16 %v1284
    %v1420 = vunpack.c.l.b16 %v1285
    %v1421 = vunpack.c.l.b16 %v1286
    %v1422 = vunpack.c.l.b16 %v1287
    %v1423 = vunpack.c.l.b16 %v1288
    %v1424 = vunpack.c.l.b16 %v1289
    %v1425 = vunpack.c.l.b16 %v1290
    %v1426 = vunpack.c.l.b16 %v1291
    %v1427 = vunpack.c.l.b16 %v1292
    %v1428 = vunpack.c.l.b16 %v1293
    %v1429 = vunpack.c.l.b16 %v1294
    %v1430 = vunpack.c.l.b16 %v1295
    %v1431 = vunpack.c.l.b16 %v1296
    %v1432 = vunpack.c.l.b16 %v1297
    %v1433 = vunpack.c.l.b16 %v1298
    %v1434 = vunpack.c.l.b16 %v1299
    %v1435 = vunpack.c.l.b16 %v1300
    %v1436 = vunpack.c.l.b16 %v1301
    %v1437 = vunpack.c.l.b16 %v1302
    %v1438 = vunpack.c.l.b16 %v1303
    %v1439 = vunpack.c.l.b16 %v1304
    %v1440 = vunpack.c.l.b16 %v1305
    %v1441 = vunpack.c.l.b16 %v1306
    %v1442 = vunpack.c.l.b16 %v1307
    %v1443 = vunpack.c.l.b16 %v1308
    %v1444 = vunpack.c.l.b16 %v1309
    %v1445 = vunpack.c.l.b16 %v1310
    %v1446 = vunpack.c.l.b16 %v1311
    %v1447 = vunpack.c.l.b16 %v1312
    %v1448 = vunpack.c.l.b16 %v1313
    %v1449 = vunpack.c.l.b16 %v1314
    %v1450 = vunpack.c.l.b16 %v1315
    %v1451 = vunpack.c.l.b16 %v1316
    %v1452 = vunpack.c.l.b16 %v1317
    %v1453 = vunpack.c.l.b16 %v1318
    %v1454 = vunpack.c.l.b16 %v1319
    %v1455 = vunpack.c.l.b16 %v1320
    %v1456 = vunpack.c.l.b16 %v1321
    %v1457 = vunpack.c.l.b16 %v1322
    %v1458 = vunpack.c.l.b16 %v1323
    %v1459 = vunpack.c.l.b16 %v1324
    %v1460 = vunpack.c.l.b16 %v1325
    %v1461 = vunpack.c.l.b16 %v1326
    %v1462 = vpack.c.b16 %v1399, %v1398
    %v1463 = vpack.c.b16 %v1401, %v1400
    %v1464 = vpack.c.b16 %v1403, %v1402
    %v1465 = vpack.c.b16 %v1405, %v1404
    %v1466 = vpack.c.b16 %v1407, %v1406
    %v1467 = vpack.c.b16 %v1409, %v1408
    %v1468 = vpack.c.b16 %v1411, %v1410
    %v1469 = vpack.c.b16 %v1413, %v1412
    %v1470 = vpack.c.b16 %v1415, %v1414
    %v1471 = vpack.c.b16 %v1417, %v1416
    %v1472 = vpack.c.b16 %v1419, %v1418
    %v1473 = vpack.c.b16 %v1421, %v1420
    %v1474 = vpack.c.b16 %v1423, %v1422
    %v1475 = vpack.c.b16 %v1425, %v1424
    %v1476 = vpack.c.b16 %v1427, %v1426
    %v1477 = vpack.c.b16 %v1429, %v1428
    %v1478 = vpack.c.b16 %v1431, %v1430
    %v1479 = vpack.c.b16 %v1433, %v1432
    %v1480 = vpack.c.b16 %v1435, %v1434
    %v1481 = vpack.c.b16 %v1437, %v1436
    %v1482 = vpack.c.b16 %v1439, %v1438
    %v1483 = vpack.c.b16 %v1441, %v1440
    %v1484 = vpack.c.b16 %v1443, %v1442
    %v1485 = vpack.c.b16 %v1445, %v1444
    %v1486 = vpack.c.b16 %v1447, %v1446
    %v1487 = vpack.c.b16 %v1449, %v1448
    %v1488 = vpack.c.b16 %v1451, %v1450
    %v1489 = vpack.c.b16 %v1453, %v1452
    %v1490 = vpack.c.b16 %v1455, %v1454
    %v1491 = vpack.c.b16 %v1457, %v1456
    %v1492 = vpack.c.b16 %v1459, %v1458
    %v1493 = vpack.c.b16 %v1461, %v1460
    %1526 = vmatprep.subr.bf16.mxu0 0
    %1527 = vmatpush1.bf16.msra.mxu0 %v1462
    %1528 = vmatprep.subr.bf16.mxu0 0
    %1529 = vmatpush1.bf16.msra.mxu0 %v1463
    %1530 = vmatprep.subr.bf16.mxu0 0
    %1531 = vmatpush1.bf16.msra.mxu0 %v1464
    %1532 = vmatprep.subr.bf16.mxu0 0
    %1533 = vmatpush1.bf16.msra.mxu0 %v1465
    %1534 = vmatprep.subr.bf16.mxu0 0
    %1535 = vmatpush1.bf16.msra.mxu0 %v1466
    %1536 = vmatprep.subr.bf16.mxu0 0
    %1537 = vmatpush1.bf16.msra.mxu0 %v1467
    %1538 = vmatprep.subr.bf16.mxu0 0
    %1539 = vmatpush1.bf16.msra.mxu0 %v1468
    %1540 = vmatprep.subr.bf16.mxu0 0
    %1541 = vmatpush1.bf16.msra.mxu0 %v1469
    %1542 = vmatprep.subr.bf16.mxu0 0
    %1543 = vmatpush1.bf16.msra.mxu0 %v1470
    %1544 = vmatprep.subr.bf16.mxu0 0
    %1545 = vmatpush1.bf16.msra.mxu0 %v1471
    %1546 = vmatprep.subr.bf16.mxu0 0
    %1547 = vmatpush1.bf16.msra.mxu0 %v1472
    %1548 = vmatprep.subr.bf16.mxu0 0
    %1549 = vmatpush1.bf16.msra.mxu0 %v1473
    %1550 = vmatprep.subr.bf16.mxu0 0
    %1551 = vmatpush1.bf16.msra.mxu0 %v1474
    %1552 = vmatprep.subr.bf16.mxu0 0
    %1553 = vmatpush1.bf16.msra.mxu0 %v1475
    %1554 = vmatprep.subr.bf16.mxu0 0
    %1555 = vmatpush1.bf16.msra.mxu0 %v1476
    %1556 = vmatprep.subr.bf16.mxu0 0
    %1557 = vmatpush1.bf16.msra.mxu0 %v1477
    %1558 = vmatprep.mubr.bf16.mxu0 %v1260
    %1559 = vmatmul.mubr.bf16.gmra.mrb[0].mxu0 %v1259
    %v1560 = vpop.f32.mrb[0].mxu0
    %v1561 = vadd.f32 %v1332, %v1560
    %v1562 = vpop.f32.mrb[0].mxu0
    %v1563 = vpop.f32.mrb[0].mxu0
    %v1564 = vpop.f32.mrb[0].mxu0
    %1565 = vdwg.mxu0
    %1566 = vmatprep.subr.bf16.mxu0 0
    %1567 = vmatpush1.bf16.msra.mxu0 %v1478
    %1568 = vmatprep.subr.bf16.mxu0 0
    %1569 = vmatpush1.bf16.msra.mxu0 %v1479
    %1570 = vmatprep.subr.bf16.mxu0 0
    %1571 = vmatpush1.bf16.msra.mxu0 %v1480
    %1572 = vmatprep.subr.bf16.mxu0 0
    %1573 = vmatpush1.bf16.msra.mxu0 %v1481
    %1574 = vmatprep.subr.bf16.mxu0 0
    %1575 = vmatpush1.bf16.msra.mxu0 %v1482
    %1576 = vmatprep.subr.bf16.mxu0 0
    %1577 = vmatpush1.bf16.msra.mxu0 %v1483
    %1578 = vmatprep.subr.bf16.mxu0 0
    %1579 = vmatpush1.bf16.msra.mxu0 %v1484
    %1580 = vmatprep.subr.bf16.mxu0 0
    %1581 = vmatpush1.bf16.msra.mxu0 %v1485
    %1582 = vmatprep.subr.bf16.mxu0 0
    %1583 = vmatpush1.bf16.msra.mxu0 %v1486
    %1584 = vmatprep.subr.bf16.mxu0 0
    %1585 = vmatpush1.bf16.msra.mxu0 %v1487
    %1586 = vmatprep.subr.bf16.mxu0 0
    %1587 = vmatpush1.bf16.msra.mxu0 %v1488
    %1588 = vmatprep.subr.bf16.mxu0 0
    %1589 = vmatpush1.bf16.msra.mxu0 %v1489
    %1590 = vmatprep.subr.bf16.mxu0 0
    %1591 = vmatpush1.bf16.msra.mxu0 %v1490
    %1592 = vmatprep.subr.bf16.mxu0 0
    %1593 = vmatpush1.bf16.msra.mxu0 %v1491
    %1594 = vmatprep.subr.bf16.mxu0 0
    %1595 = vmatpush1.bf16.msra.mxu0 %v1492
    %1596 = vmatprep.subr.bf16.mxu0 0
    %1597 = vmatpush1.bf16.msra.mxu0 %v1493
    %1598 = vmatprep.mubr.bf16.mxu0 %v1262
    %1599 = vmatmul.mubr.bf16.gmra.mrb[0].mxu0 %v1261
    %v1600 = vpop.f32.mrb[0].mxu0
    %v1601 = vadd.f32 %v1561, %v1600
    %v1602 = vpop.f32.mrb[0].mxu0
    %v1603 = vpop.f32.mrb[0].mxu0
    %v1604 = vpop.f32.mrb[0].mxu0
    %1605 = vdwg.mxu0
    %vm1606 = vcmp.lt.s32.totalorder %v544, 32
    %v1607 = vsel %vm1606, 1, 0
    %v1608 = vcvt.s32.f32 %v1607
    %v1609 = vadd.f32 %v145, %v1601
    %v1610 = vld [vmem:[%s7] sm:$0x1]
    %v1611 = vld [vmem:[%s8] sm:$0x1]
    %1612 = vadd.xlane.f32.xlu0 %v1609
    %v1613 = vpop.xlane.xlu0 %1612
    %v1614 = vmul.f32 %v1613, 0.03125
    %v1615 = vsub.f32 %v1609, %v1614
    %v1616 = vmul.f32 %v1615, %v1608
    %v1617 = vmul.f32 %v1616, %v1616
    %1618 = vadd.xlane.f32.xlu0 %v1617
    %v1619 = vpop.xlane.xlu0 %1618
    %v1620 = vmul.f32 %v1619, 0.03125
    %v1621 = vadd.f32 %v1620, 1e-05
    %v1622 = vrsqrt.pop %v1621
    %v1623 = vmul.f32 %v1616, %v1622
    %v1625 = vlaneseq
    %v1626 = vshrl.u32 %v1625, 7
    %v1627 = vsub.s32 0, %v1626
    %v1628 = vrot.slane %v1610, %v1627
    %v1630 = vmul.f32 %v1623, %v1628
    %v1632 = vlaneseq
    %v1633 = vshrl.u32 %v1632, 7
    %v1634 = vsub.s32 0, %v1633
    %v1635 = vrot.slane %v1611, %v1634
    %v1637 = vadd.f32 %v1630, %v1635
    %v1638 = vpack.c.bf16 %v1637, %v1637
    %v1639 = vld [vmem:[#allocation11] sm:$0xf]
    %v1640 = vld [vmem:[#allocation11 + $0x4] sm:$0xf]
    %v1641 = vld [vmem:[#allocation11 + $0x8] sm:$0xf]
    %v1642 = vld [vmem:[#allocation11 + $0xc] sm:$0xf]
    %v1643 = vld [vmem:[#allocation11 + $0x10] sm:$0xf]
    %v1644 = vld [vmem:[#allocation11 + $0x14] sm:$0xf]
    %v1645 = vld [vmem:[#allocation11 + $0x18] sm:$0xf]
    %v1646 = vld [vmem:[#allocation11 + $0x1c] sm:$0xf]
    %v1647 = vld [vmem:[#allocation11 + $0x20] sm:$0xf]
    %v1648 = vld [vmem:[#allocation11 + $0x24] sm:$0xf]
    %v1649 = vld [vmem:[#allocation11 + $0x28] sm:$0xf]
    %v1650 = vld [vmem:[#allocation11 + $0x2c] sm:$0xf]
    %v1651 = vld [vmem:[#allocation11 + $0x30] sm:$0xf]
    %v1652 = vld [vmem:[#allocation11 + $0x34] sm:$0xf]
    %v1653 = vld [vmem:[#allocation11 + $0x38] sm:$0xf]
    %v1654 = vld [vmem:[#allocation11 + $0x3c] sm:$0xf]
    %v1655 = vld [vmem:[%s10] sm:$0x1]
    %v1657 = vlaneseq
    %v1658 = vshrl.u32 %v1657, 7
    %v1659 = vsub.s32 0, %v1658
    %v1660 = vrot.slane %v1655, %v1659
    %v1678 = vunpack.c.l.b16 %v1639
    %v1679 = vunpack.c.l.b16 %v1640
    %v1680 = vunpack.c.l.b16 %v1641
    %v1681 = vunpack.c.l.b16 %v1642
    %v1682 = vunpack.c.l.b16 %v1643
    %v1683 = vunpack.c.l.b16 %v1644
    %v1684 = vunpack.c.l.b16 %v1645
    %v1685 = vunpack.c.l.b16 %v1646
    %v1686 = vunpack.c.l.b16 %v1647
    %v1687 = vunpack.c.l.b16 %v1648
    %v1688 = vunpack.c.l.b16 %v1649
    %v1689 = vunpack.c.l.b16 %v1650
    %v1690 = vunpack.c.l.b16 %v1651
    %v1691 = vunpack.c.l.b16 %v1652
    %v1692 = vunpack.c.l.b16 %v1653
    %v1693 = vunpack.c.l.b16 %v1654
    %v1694 = vpack.c.b16 %v1679, %v1678
    %v1695 = vpack.c.b16 %v1681, %v1680
    %v1696 = vpack.c.b16 %v1683, %v1682
    %v1697 = vpack.c.b16 %v1685, %v1684
    %v1698 = vpack.c.b16 %v1687, %v1686
    %v1699 = vpack.c.b16 %v1689, %v1688
    %v1700 = vpack.c.b16 %v1691, %v1690
    %v1701 = vpack.c.b16 %v1693, %v1692
    %1710 = vmatprep.subr.bf16.mxu0 0
    %1711 = vmatpush1.bf16.msra.mxu0 %v1694
    %1712 = vmatprep.subr.bf16.mxu0 0
    %1713 = vmatpush1.bf16.msra.mxu0 %v1695
    %1714 = vmatprep.subr.bf16.mxu0 0
    %1715 = vmatpush1.bf16.msra.mxu0 %v1696
    %1716 = vmatprep.subr.bf16.mxu0 0
    %1717 = vmatpush1.bf16.msra.mxu0 %v1697
    %1718 = vmatprep.subr.bf16.mxu0 0
    %1719 = vmatpush1.bf16.msra.mxu0 %v1698
    %1720 = vmatprep.subr.bf16.mxu0 0
    %1721 = vmatpush1.bf16.msra.mxu0 %v1699
    %1722 = vmatprep.subr.bf16.mxu0 0
    %1723 = vmatpush1.bf16.msra.mxu0 %v1700
    %1724 = vmatprep.subr.bf16.mxu0 0
    %1725 = vmatpush1.bf16.msra.mxu0 %v1701
    %1726 = vmatprep.subr.bf16.mxu0 0
    %1727 = vmatpush1.bf16.msra.mxu0 0
    %1728 = vmatprep.subr.bf16.mxu0 0
    %1729 = vmatpush1.bf16.msra.mxu0 0
    %1730 = vmatprep.subr.bf16.mxu0 0
    %1731 = vmatpush1.bf16.msra.mxu0 0
    %1732 = vmatprep.subr.bf16.mxu0 0
    %1733 = vmatpush1.bf16.msra.mxu0 0
    %1734 = vmatprep.subr.bf16.mxu0 0
    %1735 = vmatpush1.bf16.msra.mxu0 0
    %1736 = vmatprep.subr.bf16.mxu0 0
    %1737 = vmatpush1.bf16.msra.mxu0 0
    %1738 = vmatprep.subr.bf16.mxu0 0
    %1739 = vmatpush1.bf16.msra.mxu0 0
    %1740 = vmatprep.subr.bf16.mxu0 0
    %1741 = vmatpush1.bf16.msra.mxu0 0
    %1742 = vmatprep.mubr.bf16.mxu0 0
    %1743 = vmatmul.mubr.bf16.gmra.mrb[0].mxu0 %v1638
    %v1744 = vpop.f32.mrb[0].mxu0
    %v1745 = vadd.f32 %v1660, %v1744
    %v1746 = vpop.f32.mrb[0].mxu0
    %v1747 = vpop.f32.mrb[0].mxu0
    %v1748 = vpop.f32.mrb[0].mxu0
    %1749 = vdwg.mxu0
    %v1750 = vmax.f32 %v1745, 0.0
    %v1751 = vpack.c.bf16 %v1750, %v1750
    %v1752 = vld [vmem:[#allocation13] sm:$0xf]
    %v1753 = vld [vmem:[#allocation13 + $0x4] sm:$0xf]
    %v1754 = vld [vmem:[#allocation13 + $0x8] sm:$0xf]
    %v1755 = vld [vmem:[#allocation13 + $0xc] sm:$0xf]
    %v1756 = vld [vmem:[#allocation13 + $0x10] sm:$0xf]
    %v1757 = vld [vmem:[#allocation13 + $0x14] sm:$0xf]
    %v1758 = vld [vmem:[#allocation13 + $0x18] sm:$0xf]
    %v1759 = vld [vmem:[#allocation13 + $0x1c] sm:$0xf]
    %v1760 = vld [vmem:[#allocation13 + $0x20] sm:$0xf]
    %v1761 = vld [vmem:[#allocation13 + $0x24] sm:$0xf]
    %v1762 = vld [vmem:[#allocation13 + $0x28] sm:$0xf]
    %v1763 = vld [vmem:[#allocation13 + $0x2c] sm:$0xf]
    %v1764 = vld [vmem:[#allocation13 + $0x30] sm:$0xf]
    %v1765 = vld [vmem:[#allocation13 + $0x34] sm:$0xf]
    %v1766 = vld [vmem:[#allocation13 + $0x38] sm:$0xf]
    %v1767 = vld [vmem:[#allocation13 + $0x3c] sm:$0xf]
    %v1768 = vld [vmem:[%s12] sm:$0x1]
    %v1770 = vlaneseq
    %v1771 = vshrl.u32 %v1770, 7
    %v1772 = vsub.s32 0, %v1771
    %v1773 = vrot.slane %v1768, %v1772
    %v1791 = vunpack.c.l.b16 %v1752
    %v1792 = vunpack.c.l.b16 %v1753
    %v1793 = vunpack.c.l.b16 %v1754
    %v1794 = vunpack.c.l.b16 %v1755
    %v1795 = vunpack.c.l.b16 %v1756
    %v1796 = vunpack.c.l.b16 %v1757
    %v1797 = vunpack.c.l.b16 %v1758
    %v1798 = vunpack.c.l.b16 %v1759
    %v1799 = vunpack.c.l.b16 %v1760
    %v1800 = vunpack.c.l.b16 %v1761
    %v1801 = vunpack.c.l.b16 %v1762
    %v1802 = vunpack.c.l.b16 %v1763
    %v1803 = vunpack.c.l.b16 %v1764
    %v1804 = vunpack.c.l.b16 %v1765
    %v1805 = vunpack.c.l.b16 %v1766
    %v1806 = vunpack.c.l.b16 %v1767
    %v1807 = vpack.c.b16 %v1792, %v1791
    %v1808 = vpack.c.b16 %v1794, %v1793
    %v1809 = vpack.c.b16 %v1796, %v1795
    %v1810 = vpack.c.b16 %v1798, %v1797
    %v1811 = vpack.c.b16 %v1800, %v1799
    %v1812 = vpack.c.b16 %v1802, %v1801
    %v1813 = vpack.c.b16 %v1804, %v1803
    %v1814 = vpack.c.b16 %v1806, %v1805
    %1823 = vmatprep.subr.bf16.mxu0 0
    %1824 = vmatpush1.bf16.msra.mxu0 %v1807
    %1825 = vmatprep.subr.bf16.mxu0 0
    %1826 = vmatpush1.bf16.msra.mxu0 %v1808
    %1827 = vmatprep.subr.bf16.mxu0 0
    %1828 = vmatpush1.bf16.msra.mxu0 %v1809
    %1829 = vmatprep.subr.bf16.mxu0 0
    %1830 = vmatpush1.bf16.msra.mxu0 %v1810
    %1831 = vmatprep.subr.bf16.mxu0 0
    %1832 = vmatpush1.bf16.msra.mxu0 %v1811
    %1833 = vmatprep.subr.bf16.mxu0 0
    %1834 = vmatpush1.bf16.msra.mxu0 %v1812
    %1835 = vmatprep.subr.bf16.mxu0 0
    %1836 = vmatpush1.bf16.msra.mxu0 %v1813
    %1837 = vmatprep.subr.bf16.mxu0 0
    %1838 = vmatpush1.bf16.msra.mxu0 %v1814
    %1839 = vmatprep.subr.bf16.mxu0 0
    %1840 = vmatpush1.bf16.msra.mxu0 0
    %1841 = vmatprep.subr.bf16.mxu0 0
    %1842 = vmatpush1.bf16.msra.mxu0 0
    %1843 = vmatprep.subr.bf16.mxu0 0
    %1844 = vmatpush1.bf16.msra.mxu0 0
    %1845 = vmatprep.subr.bf16.mxu0 0
    %1846 = vmatpush1.bf16.msra.mxu0 0
    %1847 = vmatprep.subr.bf16.mxu0 0
    %1848 = vmatpush1.bf16.msra.mxu0 0
    %1849 = vmatprep.subr.bf16.mxu0 0
    %1850 = vmatpush1.bf16.msra.mxu0 0
    %1851 = vmatprep.subr.bf16.mxu0 0
    %1852 = vmatpush1.bf16.msra.mxu0 0
    %1853 = vmatprep.subr.bf16.mxu0 0
    %1854 = vmatpush1.bf16.msra.mxu0 0
    %1855 = vmatprep.mubr.bf16.mxu0 0
    %1856 = vmatmul.mubr.bf16.gmra.mrb[0].mxu0 %v1751
    %v1857 = vpop.f32.mrb[0].mxu0
    %v1858 = vadd.f32 %v1773, %v1857
    %v1859 = vpop.f32.mrb[0].mxu0
    %v1860 = vpop.f32.mrb[0].mxu0
    %v1861 = vpop.f32.mrb[0].mxu0
    %1862 = vdwg.mxu0
    %v1863 = vadd.f32 %v1637, %v1858
    %v1864 = vld [vmem:[%s13] sm:$0x1]
    %v1865 = vld [vmem:[%s14] sm:$0x1]
    %1866 = vadd.xlane.f32.xlu0 %v1863
    %v1867 = vpop.xlane.xlu0 %1866
    %v1868 = vmul.f32 %v1867, 0.03125
    %v1869 = vsub.f32 %v1863, %v1868
    %v1870 = vmul.f32 %v1869, %v1608
    %v1871 = vmul.f32 %v1870, %v1870
    %1872 = vadd.xlane.f32.xlu0 %v1871
    %v1873 = vpop.xlane.xlu0 %1872
    %v1874 = vmul.f32 %v1873, 0.03125
    %v1875 = vadd.f32 %v1874, 1e-05
    %v1876 = vrsqrt.pop %v1875
    %v1877 = vmul.f32 %v1870, %v1876
    %v1879 = vlaneseq
    %v1880 = vshrl.u32 %v1879, 7
    %v1881 = vsub.s32 0, %v1880
    %v1882 = vrot.slane %v1864, %v1881
    %v1884 = vmul.f32 %v1877, %v1882
    %v1886 = vlaneseq
    %v1887 = vshrl.u32 %v1886, 7
    %v1888 = vsub.s32 0, %v1887
    %v1889 = vrot.slane %v1865, %v1888
    %v1891 = vadd.f32 %v1884, %v1889
    %1892 = vst [vmem:[#allocation14] sm:$0xff] %v1891
    // Predicated region
    $region90: #{tpu_custom_call.1} parent=1 // pred_check
      _
    $region91: #{tpu_custom_call.1} parent=1 // pred_check_branch
      %1894 = sbr.rel (0) target = $region93
    $region92: #{tpu_custom_call.1} parent=1 // pred_region
      %s1896 = ssub.s32 128, 128
      %1897 = vsyncadd [#allocation4], %s1896
      %s1899 = sshll.u32 [#allocation14], 4
      %s1900 = int_to_ptr.vmem [resolvable:$true] %s1899
      %1902 = dma.vmem_to_hbm [thread:$0]  %s1900, 128, %s15, [#allocation4]
    $region93: #{tpu_custom_call.1} parent=1 // pred_fallthru
      _
    // Predicated region
    $region94: #{tpu_custom_call.1} parent=1 // pred_check
      _
    $region95: #{tpu_custom_call.1} parent=1 // pred_check_branch
      %1904 = sbr.rel (0) target = $region97
    $region96: #{tpu_custom_call.1} parent=1 // pred_region
      %1905 = dma.done [#allocation4], 128
    $region97: #{tpu_custom_call.1} parent=1 // pred_fallthru
      _
    %1906 = vsyncpa [#allocation3], 1
    %1907 = vsyncpa [#allocation6], 1
    %1908 = vsyncpa [#allocation9], 1
    %1909 = vsyncpa [#allocation12], 1
    %1910 = vsyncpa [#allocation4], 1

// kernel: tpu_custom_call.1
$region0: #{tpu_custom_call.1}
  #allocation0 [shape = 'u32[]', space=smem, size = 0x4, offset = 0x4, fixed_abs, tag = 'smem constant byte address 0x4 - core index']
  #allocation1 [shape = 'u32[144,128]{1,0:T(1,128)}', space=vmem, size = 0x12000, scoped, tag = 'internal scratch']
  %s0 = inlined_call_operand.hbm [shape: f32[8,128], index: 0, kind: input, shape index: {}]
  %s1 = inlined_call_operand.hbm [shape: bf16[512,128], index: 1, kind: input, shape index: {}]
  %s2 = inlined_call_operand.hbm [shape: bf16[128,512], index: 2, kind: input, shape index: {}]
  %s3 = inlined_call_operand.hbm [shape: bf16[128,512], index: 3, kind: input, shape index: {}]
  %s4 = inlined_call_operand.vmem [shape: f32[1,512], index: 4, kind: input, shape index: {}]
  %s5 = inlined_call_operand.hbm [shape: bf16[512,128], index: 5, kind: input, shape index: {}]
  %s6 = inlined_call_operand.vmem [shape: f32[1,128], index: 6, kind: input, shape index: {}]
  %s7 = inlined_call_operand.vmem [shape: f32[1,128], index: 7, kind: input, shape index: {}]
  %s8 = inlined_call_operand.vmem [shape: f32[1,128], index: 8, kind: input, shape index: {}]
  %s9 = inlined_call_operand.hbm [shape: bf16[128,128], index: 9, kind: input, shape index: {}]
  %s10 = inlined_call_operand.vmem [shape: f32[1,128], index: 10, kind: input, shape index: {}]
  %s11 = inlined_call_operand.hbm [shape: bf16[128,128], index: 11, kind: input, shape index: {}]
  %s12 = inlined_call_operand.vmem [shape: f32[1,128], index: 12, kind: input, shape index: {}]
  %s13 = inlined_call_operand.vmem [shape: f32[1,128], index: 13, kind: input, shape index: {}]
  %s14 = inlined_call_operand.vmem [shape: f32[1,128], index: 14, kind: input, shape index: {}]
  %s15 = inlined_call_operand.hbm [shape: f32[8,128], index: 15, kind: output, shape index: {}]
  %s16 = sld [smem:[#allocation0]]
  $region98: #{tpu_custom_call.1} parent=0
    _
  %s18 = ssub.s32 1, %s16
  %s19 = scalar_select 0, %s18, %s16
  $region1: #{tpu_custom_call.1} parent=0
    #allocation2 [shape = 'u8[4096]{0}', space=vmem, size = 0x1000, scoped, tag = 'input window, operand 0, single buffered']
    #allocation3 [shape = 's32[1]{0}', space=sflag, size = 0x4, scoped, tag = 'scoped memory for tpu_custom_call.1']
    #allocation4 [shape = 's32[1]{0}', space=sflag, size = 0x4, scoped, tag = 'scoped memory for tpu_custom_call.1']
    #allocation5 [shape = 'u8[131072]{0}', space=vmem, size = 0x20000, scoped, tag = 'input window, operand 1, single buffered']
    #allocation6 [shape = 's32[1]{0}', space=sflag, size = 0x4, scoped, tag = 'scoped memory for tpu_custom_call.1']
    #allocation7 [shape = 'u8[131072]{0}', space=vmem, size = 0x20000, scoped, tag = 'input window, operand 2, single buffered']
    #allocation8 [shape = 'u8[131072]{0}', space=vmem, size = 0x20000, scoped, tag = 'input window, operand 3, single buffered']
    #allocation9 [shape = 's32[1]{0}', space=sflag, size = 0x4, scoped, tag = 'scoped memory for tpu_custom_call.1']
    #allocation10 [shape = 'u8[131072]{0}', space=vmem, size = 0x20000, scoped, tag = 'input window, operand 5, single buffered']
    #allocation11 [shape = 'u8[32768]{0}', space=vmem, size = 0x8000, scoped, tag = 'input window, operand 9, single buffered']
    #allocation12 [shape = 's32[1]{0}', space=sflag, size = 0x4, scoped, tag = 'scoped memory for tpu_custom_call.1']
    #allocation13 [shape = 'u8[32768]{0}', space=vmem, size = 0x8000, scoped, tag = 'input window, operand 11, single buffered']
    #allocation14 [shape = 'u8[4096]{0}', space=vmem, size = 0x1000, scoped, tag = 'output window, operand 0, single buffered']
    %20 = vsyncpa [#allocation3], 0
    %21 = vsyncpa [#allocation6], 0
    %22 = vsyncpa [#allocation9], 0
    %23 = vsyncpa [#allocation12], 0
    %24 = vsyncpa [#allocation4], 0
    // Predicated region
    $region2: #{tpu_custom_call.1} parent=1 // pred_check
      _
    $region3: #{tpu_custom_call.1} parent=1 // pred_check_branch
      %26 = sbr.rel (0) target = $region5
    $region4: #{tpu_custom_call.1} parent=1 // pred_region
      %s28 = ssub.s32 128, 128
      %29 = vsyncadd [#allocation3], %s28
      %s31 = sshll.u32 [#allocation2], 4
      %s32 = int_to_ptr.vmem [resolvable:$true] %s31
      %34 = dma.hbm_to_vmem [thread:$0]  %s0, 128, %s32, [#allocation3]
    $region5: #{tpu_custom_call.1} parent=1 // pred_fallthru
      _
    // Predicated region
    $region6: #{tpu_custom_call.1} parent=1 // pred_check
      _
    $region7: #{tpu_custom_call.1} parent=1 // pred_check_branch
      %36 = sbr.rel (0) target = $region9
    $region8: #{tpu_custom_call.1} parent=1 // pred_region
      %s38 = ssub.s32 4096, 4096
      %39 = vsyncadd [#allocation6], %s38
      %s40 = sshll.u32 [#allocation5], 4
      %s41 = int_to_ptr.vmem [resolvable:$true] %s40
      %46 = dma.hbm_to_vmem [thread:$0]  %s1, 4096, %s41, [#allocation6], 64, 64, 4
    $region9: #{tpu_custom_call.1} parent=1 // pred_fallthru
      _
    // Predicated region
    $region10: #{tpu_custom_call.1} parent=1 // pred_check
      _
    $region11: #{tpu_custom_call.1} parent=1 // pred_check_branch
      %48 = sbr.rel (0) target = $region13
    $region12: #{tpu_custom_call.1} parent=1 // pred_region
      %s50 = ssub.s32 4096, 4096
      %51 = vsyncadd [#allocation6], %s50
      %s52 = sshll.u32 [#allocation7], 4
      %s53 = int_to_ptr.vmem [resolvable:$true] %s52
      %58 = dma.hbm_to_vmem [thread:$0]  %s2, 4096, %s53, [#allocation6], 256, 256, 16
    $region13: #{tpu_custom_call.1} parent=1 // pred_fallthru
      _
    // Predicated region
    $region14: #{tpu_custom_call.1} parent=1 // pred_check
      _
    $region15: #{tpu_custom_call.1} parent=1 // pred_check_branch
      %60 = sbr.rel (0) target = $region17
    $region16: #{tpu_custom_call.1} parent=1 // pred_region
      %s62 = ssub.s32 4096, 4096
      %63 = vsyncadd [#allocation9], %s62
      %s64 = sshll.u32 [#allocation8], 4
      %s65 = int_to_ptr.vmem [resolvable:$true] %s64
      %70 = dma.hbm_to_vmem [thread:$0]  %s3, 4096, %s65, [#allocation9], 256, 256, 16
    $region17: #{tpu_custom_call.1} parent=1 // pred_fallthru
      _
    // Predicated region
    $region18: #{tpu_custom_call.1} parent=1 // pred_check
      _
    $region19: #{tpu_custom_call.1} parent=1 // pred_check_branch
      %72 = sbr.rel (0) target = $region21
    $region20: #{tpu_custom_call.1} parent=1 // pred_region
      _
    $region21: #{tpu_custom_call.1} parent=1 // pred_fallthru
      _
    // Predicated region
    $region22: #{tpu_custom_call.1} parent=1 // pred_check
      _
    $region23: #{tpu_custom_call.1} parent=1 // pred_check_branch
      %74 = sbr.rel (0) target = $region25
    $region24: #{tpu_custom_call.1} parent=1 // pred_region
      %s76 = ssub.s32 4096, 4096
      %77 = vsyncadd [#allocation9], %s76
      %s78 = sshll.u32 [#allocation10], 4
      %s79 = int_to_ptr.vmem [resolvable:$true] %s78
      %84 = dma.hbm_to_vmem [thread:$0]  %s5, 4096, %s79, [#allocation9], 64, 64, 4
    $region25: #{tpu_custom_call.1} parent=1 // pred_fallthru
      _
    // Predicated region
    $region26: #{tpu_custom_call.1} parent=1 // pred_check
      _
    $region27: #{tpu_custom_call.1} parent=1 // pred_check_branch
      %86 = sbr.rel (0) target = $region29
    $region28: #{tpu_custom_call.1} parent=1 // pred_region
      _
    $region29: #{tpu_custom_call.1} parent=1 // pred_fallthru
      _
    // Predicated region
    $region30: #{tpu_custom_call.1} parent=1 // pred_check
      _
    $region31: #{tpu_custom_call.1} parent=1 // pred_check_branch
      %88 = sbr.rel (0) target = $region33
    $region32: #{tpu_custom_call.1} parent=1 // pred_region
      _
    $region33: #{tpu_custom_call.1} parent=1 // pred_fallthru
      _
    // Predicated region
    $region34: #{tpu_custom_call.1} parent=1 // pred_check
      _
    $region35: #{tpu_custom_call.1} parent=1 // pred_check_branch
      %90 = sbr.rel (0) target = $region37
    $region36: #{tpu_custom_call.1} parent=1 // pred_region
      _
    $region37: #{tpu_custom_call.1} parent=1 // pred_fallthru
      _
    // Predicated region
    $region38: #{tpu_custom_call.1} parent=1 // pred_check
      _
    $region39: #{tpu_custom_call.1} parent=1 // pred_check_branch
      %92 = sbr.rel (0) target = $region41
    $region40: #{tpu_custom_call.1} parent=1 // pred_region
      %s94 = ssub.s32 1024, 1024
      %95 = vsyncadd [#allocation12], %s94
      %s96 = sshll.u32 [#allocation11], 4
      %s97 = int_to_ptr.vmem [resolvable:$true] %s96
      %102 = dma.hbm_to_vmem [thread:$0]  %s9, 1024, %s97, [#allocation12], 64, 64, 4
    $region41: #{tpu_custom_call.1} parent=1 // pred_fallthru
      _
    // Predicated region
    $region42: #{tpu_custom_call.1} parent=1 // pred_check
      _
    $region43: #{tpu_custom_call.1} parent=1 // pred_check_branch
      %104 = sbr.rel (0) target = $region45
    $region44: #{tpu_custom_call.1} parent=1 // pred_region
      _
    $region45: #{tpu_custom_call.1} parent=1 // pred_fallthru
      _
    // Predicated region
    $region46: #{tpu_custom_call.1} parent=1 // pred_check
      _
    $region47: #{tpu_custom_call.1} parent=1 // pred_check_branch
      %106 = sbr.rel (0) target = $region49
    $region48: #{tpu_custom_call.1} parent=1 // pred_region
      %s108 = ssub.s32 1024, 1024
      %109 = vsyncadd [#allocation12], %s108
      %s110 = sshll.u32 [#allocation13], 4
      %s111 = int_to_ptr.vmem [resolvable:$true] %s110
      %116 = dma.hbm_to_vmem [thread:$0]  %s11, 1024, %s111, [#allocation12], 64, 64, 4
    $region49: #{tpu_custom_call.1} parent=1 // pred_fallthru
      _
    // Predicated region
    $region50: #{tpu_custom_call.1} parent=1 // pred_check
      _
    $region51: #{tpu_custom_call.1} parent=1 // pred_check_branch
      %118 = sbr.rel (0) target = $region53
    $region52: #{tpu_custom_call.1} parent=1 // pred_region
      _
    $region53: #{tpu_custom_call.1} parent=1 // pred_fallthru
      _
    // Predicated region
    $region54: #{tpu_custom_call.1} parent=1 // pred_check
      _
    $region55: #{tpu_custom_call.1} parent=1 // pred_check_branch
      %120 = sbr.rel (0) target = $region57
    $region56: #{tpu_custom_call.1} parent=1 // pred_region
      _
    $region57: #{tpu_custom_call.1} parent=1 // pred_fallthru
      _
    // Predicated region
    $region58: #{tpu_custom_call.1} parent=1 // pred_check
      _
    $region59: #{tpu_custom_call.1} parent=1 // pred_check_branch
      %122 = sbr.rel (0) target = $region61
    $region60: #{tpu_custom_call.1} parent=1 // pred_region
      _
    $region61: #{tpu_custom_call.1} parent=1 // pred_fallthru
      _
    // Predicated region
    $region62: #{tpu_custom_call.1} parent=1 // pred_check
      _
    $region63: #{tpu_custom_call.1} parent=1 // pred_check_branch
      %124 = sbr.rel (0) target = $region65
    $region64: #{tpu_custom_call.1} parent=1 // pred_region
      %125 = dma.done [#allocation3], 128
    $region65: #{tpu_custom_call.1} parent=1 // pred_fallthru
      _
    // Predicated region
    $region66: #{tpu_custom_call.1} parent=1 // pred_check
      _
    $region67: #{tpu_custom_call.1} parent=1 // pred_check_branch
      %127 = sbr.rel (0) target = $region69
    $region68: #{tpu_custom_call.1} parent=1 // pred_region
      %128 = dma.done [#allocation6], 4096
    $region69: #{tpu_custom_call.1} parent=1 // pred_fallthru
      _
    // Predicated region
    $region70: #{tpu_custom_call.1} parent=1 // pred_check
      _
    $region71: #{tpu_custom_call.1} parent=1 // pred_check_branch
      %130 = sbr.rel (0) target = $region73
    $region72: #{tpu_custom_call.1} parent=1 // pred_region
      %131 = dma.done [#allocation6], 4096
    $region73: #{tpu_custom_call.1} parent=1 // pred_fallthru
      _
    // Predicated region
    $region74: #{tpu_custom_call.1} parent=1 // pred_check
      _
    $region75: #{tpu_custom_call.1} parent=1 // pred_check_branch
      %133 = sbr.rel (0) target = $region77
    $region76: #{tpu_custom_call.1} parent=1 // pred_region
      %134 = dma.done [#allocation9], 4096
    $region77: #{tpu_custom_call.1} parent=1 // pred_fallthru
      _
    // Predicated region
    $region78: #{tpu_custom_call.1} parent=1 // pred_check
      _
    $region79: #{tpu_custom_call.1} parent=1 // pred_check_branch
      %136 = sbr.rel (0) target = $region81
    $region80: #{tpu_custom_call.1} parent=1 // pred_region
      %137 = dma.done [#allocation9], 4096
    $region81: #{tpu_custom_call.1} parent=1 // pred_fallthru
      _
    // Predicated region
    $region82: #{tpu_custom_call.1} parent=1 // pred_check
      _
    $region83: #{tpu_custom_call.1} parent=1 // pred_check_branch
      %139 = sbr.rel (0) target = $region85
    $region84: #{tpu_custom_call.1} parent=1 // pred_region
      %140 = dma.done [#allocation12], 1024
    $region85: #{tpu_custom_call.1} parent=1 // pred_fallthru
      _
    // Predicated region
    $region86: #{tpu_custom_call.1} parent=1 // pred_check
      _
    $region87: #{tpu_custom_call.1} parent=1 // pred_check_branch
      %142 = sbr.rel (0) target = $region89
    $region88: #{tpu_custom_call.1} parent=1 // pred_region
      %143 = dma.done [#allocation12], 1024
    $region89: #{tpu_custom_call.1} parent=1 // pred_fallthru
      _
    %v145 = vld [vmem:[#allocation2] sm:$0xff]
    %v146 = vld [vmem:[#allocation5] sm:$0xf]
    %v147 = vld [vmem:[#allocation5 + $0x4] sm:$0xf]
    %v148 = vld [vmem:[#allocation5 + $0x8] sm:$0xf]
    %v149 = vld [vmem:[#allocation5 + $0xc] sm:$0xf]
    %v150 = vld [vmem:[#allocation5 + $0x10] sm:$0xf]
    %v151 = vld [vmem:[#allocation5 + $0x14] sm:$0xf]
    %v152 = vld [vmem:[#allocation5 + $0x18] sm:$0xf]
    %v153 = vld [vmem:[#allocation5 + $0x1c] sm:$0xf]
    %v154 = vld [vmem:[#allocation5 + $0x20] sm:$0xf]
    %v155 = vld [vmem:[#allocation5 + $0x24] sm:$0xf]
    %v156 = vld [vmem:[#allocation5 + $0x28] sm:$0xf]
    %v157 = vld [vmem:[#allocation5 + $0x2c] sm:$0xf]
    %v158 = vld [vmem:[#allocation5 + $0x30] sm:$0xf]
    %v159 = vld [vmem:[#allocation5 + $0x34] sm:$0xf]
    %v160 = vld [vmem:[#allocation5 + $0x38] sm:$0xf]
    %v161 = vld [vmem:[#allocation5 + $0x3c] sm:$0xf]
    %v162 = vld [vmem:[#allocation5 + $0x40] sm:$0xf]
    %v163 = vld [vmem:[#allocation5 + $0x44] sm:$0xf]
    %v164 = vld [vmem:[#allocation5 + $0x48] sm:$0xf]
    %v165 = vld [vmem:[#allocation5 + $0x4c] sm:$0xf]
    %v166 = vld [vmem:[#allocation5 + $0x50] sm:$0xf]
    %v167 = vld [vmem:[#allocation5 + $0x54] sm:$0xf]
    %v168 = vld [vmem:[#allocation5 + $0x58] sm:$0xf]
    %v169 = vld [vmem:[#allocation5 + $0x5c] sm:$0xf]
    %v170 = vld [vmem:[#allocation5 + $0x60] sm:$0xf]
    %v171 = vld [vmem:[#allocation5 + $0x64] sm:$0xf]
    %v172 = vld [vmem:[#allocation5 + $0x68] sm:$0xf]
    %v173 = vld [vmem:[#allocation5 + $0x6c] sm:$0xf]
    %v174 = vld [vmem:[#allocation5 + $0x70] sm:$0xf]
    %v175 = vld [vmem:[#allocation5 + $0x74] sm:$0xf]
    %v176 = vld [vmem:[#allocation5 + $0x78] sm:$0xf]
    %v177 = vld [vmem:[#allocation5 + $0x7c] sm:$0xf]
    %v178 = vld [vmem:[#allocation5 + $0x80] sm:$0xf]
    %v179 = vld [vmem:[#allocation5 + $0x84] sm:$0xf]
    %v180 = vld [vmem:[#allocation5 + $0x88] sm:$0xf]
    %v181 = vld [vmem:[#allocation5 + $0x8c] sm:$0xf]
    %v182 = vld [vmem:[#allocation5 + $0x90] sm:$0xf]
    %v183 = vld [vmem:[#allocation5 + $0x94] sm:$0xf]
    %v184 = vld [vmem:[#allocation5 + $0x98] sm:$0xf]
    %v185 = vld [vmem:[#allocation5 + $0x9c] sm:$0xf]
    %v186 = vld [vmem:[#allocation5 + $0xa0] sm:$0xf]
    %v187 = vld [vmem:[#allocation5 + $0xa4] sm:$0xf]
    %v188 = vld [vmem:[#allocation5 + $0xa8] sm:$0xf]
    %v189 = vld [vmem:[#allocation5 + $0xac] sm:$0xf]
    %v190 = vld [vmem:[#allocation5 + $0xb0] sm:$0xf]
    %v191 = vld [vmem:[#allocation5 + $0xb4] sm:$0xf]
    %v192 = vld [vmem:[#allocation5 + $0xb8] sm:$0xf]
    %v193 = vld [vmem:[#allocation5 + $0xbc] sm:$0xf]
    %v194 = vld [vmem:[#allocation5 + $0xc0] sm:$0xf]
    %v195 = vld [vmem:[#allocation5 + $0xc4] sm:$0xf]
    %v196 = vld [vmem:[#allocation5 + $0xc8] sm:$0xf]
    %v197 = vld [vmem:[#allocation5 + $0xcc] sm:$0xf]
    %v198 = vld [vmem:[#allocation5 + $0xd0] sm:$0xf]
    %v199 = vld [vmem:[#allocation5 + $0xd4] sm:$0xf]
    %v200 = vld [vmem:[#allocation5 + $0xd8] sm:$0xf]
    %v201 = vld [vmem:[#allocation5 + $0xdc] sm:$0xf]
    %v202 = vld [vmem:[#allocation5 + $0xe0] sm:$0xf]
    %v203 = vld [vmem:[#allocation5 + $0xe4] sm:$0xf]
    %v204 = vld [vmem:[#allocation5 + $0xe8] sm:$0xf]
    %v205 = vld [vmem:[#allocation5 + $0xec] sm:$0xf]
    %v206 = vld [vmem:[#allocation5 + $0xf0] sm:$0xf]
    %v207 = vld [vmem:[#allocation5 + $0xf4] sm:$0xf]
    %v208 = vld [vmem:[#allocation5 + $0xf8] sm:$0xf]
    %v209 = vld [vmem:[#allocation5 + $0xfc] sm:$0xf]
    %v210 = vld [vmem:[#allocation7] sm:$0xff]
    %v211 = vld [vmem:[#allocation7 + $0x8] sm:$0xff]
    %v212 = vld [vmem:[#allocation7 + $0x10] sm:$0xff]
    %v213 = vld [vmem:[#allocation7 + $0x18] sm:$0xff]
    %v214 = vld [vmem:[#allocation7 + $0x20] sm:$0xff]
    %v215 = vld [vmem:[#allocation7 + $0x28] sm:$0xff]
    %v216 = vld [vmem:[#allocation7 + $0x30] sm:$0xff]
    %v217 = vld [vmem:[#allocation7 + $0x38] sm:$0xff]
    %v218 = vld [vmem:[#allocation7 + $0x40] sm:$0xff]
    %v219 = vld [vmem:[#allocation7 + $0x48] sm:$0xff]
    %v220 = vld [vmem:[#allocation7 + $0x50] sm:$0xff]
    %v221 = vld [vmem:[#allocation7 + $0x58] sm:$0xff]
    %v222 = vld [vmem:[#allocation7 + $0x60] sm:$0xff]
    %v223 = vld [vmem:[#allocation7 + $0x68] sm:$0xff]
    %v224 = vld [vmem:[#allocation7 + $0x70] sm:$0xff]
    %v225 = vld [vmem:[#allocation7 + $0x78] sm:$0xff]
    %v226 = vld [vmem:[#allocation7 + $0x80] sm:$0xff]
    %v227 = vld [vmem:[#allocation7 + $0x88] sm:$0xff]
    %v228 = vld [vmem:[#allocation7 + $0x90] sm:$0xff]
    %v229 = vld [vmem:[#allocation7 + $0x98] sm:$0xff]
    %v230 = vld [vmem:[#allocation7 + $0xa0] sm:$0xff]
    %v231 = vld [vmem:[#allocation7 + $0xa8] sm:$0xff]
    %v232 = vld [vmem:[#allocation7 + $0xb0] sm:$0xff]
    %v233 = vld [vmem:[#allocation7 + $0xb8] sm:$0xff]
    %v234 = vld [vmem:[#allocation7 + $0xc0] sm:$0xff]
    %v235 = vld [vmem:[#allocation7 + $0xc8] sm:$0xff]
    %v236 = vld [vmem:[#allocation7 + $0xd0] sm:$0xff]
    %v237 = vld [vmem:[#allocation7 + $0xd8] sm:$0xff]
    %v238 = vld [vmem:[#allocation7 + $0xe0] sm:$0xff]
    %v239 = vld [vmem:[#allocation7 + $0xe8] sm:$0xff]
    %v240 = vld [vmem:[#allocation7 + $0xf0] sm:$0xff]
    %v241 = vld [vmem:[#allocation7 + $0xf8] sm:$0xff]
    %v242 = vpack.c.bf16 %v145, %v145
    %v243 = vld [vmem:[#allocation8] sm:$0xff]
    %v244 = vld [vmem:[#allocation8 + $0x8] sm:$0xff]
    %v245 = vld [vmem:[#allocation8 + $0x10] sm:$0xff]
    %v246 = vld [vmem:[#allocation8 + $0x18] sm:$0xff]
    %v247 = vld [vmem:[#allocation8 + $0x20] sm:$0xff]
    %v248 = vld [vmem:[#allocation8 + $0x28] sm:$0xff]
    %v249 = vld [vmem:[#allocation8 + $0x30] sm:$0xff]
    %v250 = vld [vmem:[#allocation8 + $0x38] sm:$0xff]
    %v251 = vld [vmem:[#allocation8 + $0x40] sm:$0xff]
    %v252 = vld [vmem:[#allocation8 + $0x48] sm:$0xff]
    %v253 = vld [vmem:[#allocation8 + $0x50] sm:$0xff]
    %v254 = vld [vmem:[#allocation8 + $0x58] sm:$0xff]
    %v255 = vld [vmem:[#allocation8 + $0x60] sm:$0xff]
    %v256 = vld [vmem:[#allocation8 + $0x68] sm:$0xff]
    %v257 = vld [vmem:[#allocation8 + $0x70] sm:$0xff]
    %v258 = vld [vmem:[#allocation8 + $0x78] sm:$0xff]
    %v259 = vld [vmem:[#allocation8 + $0x80] sm:$0xff]
    %v260 = vld [vmem:[#allocation8 + $0x88] sm:$0xff]
    %v261 = vld [vmem:[#allocation8 + $0x90] sm:$0xff]
    %v262 = vld [vmem:[#allocation8 + $0x98] sm:$0xff]
    %v263 = vld [vmem:[#allocation8 + $0xa0] sm:$0xff]
    %v264 = vld [vmem:[#allocation8 + $0xa8] sm:$0xff]
    %v265 = vld [vmem:[#allocation8 + $0xb0] sm:$0xff]
    %v266 = vld [vmem:[#allocation8 + $0xb8] sm:$0xff]
    %v267 = vld [vmem:[#allocation8 + $0xc0] sm:$0xff]
    %v268 = vld [vmem:[#allocation8 + $0xc8] sm:$0xff]
    %v269 = vld [vmem:[#allocation8 + $0xd0] sm:$0xff]
    %v270 = vld [vmem:[#allocation8 + $0xd8] sm:$0xff]
    %v271 = vld [vmem:[#allocation8 + $0xe0] sm:$0xff]
    %v272 = vld [vmem:[#allocation8 + $0xe8] sm:$0xff]
    %v273 = vld [vmem:[#allocation8 + $0xf0] sm:$0xff]
    %v274 = vld [vmem:[#allocation8 + $0xf8] sm:$0xff]
    %v275 = vld [vmem:[%s4] sm:$0xf]
    %v277 = vlaneseq
    %v278 = vshrl.u32 %v277, 7
    %v279 = vsub.s32 0, %v278
    %v280 = vrot.slane %v275, %v279
    %v281 = vlaneseq
    %v282 = vshrl.u32 %v281, 7
    %v283 = vsub.s32 1, %v282
    %v284 = vrot.slane %v275, %v283
    %v285 = vlaneseq
    %v286 = vshrl.u32 %v285, 7
    %v287 = vsub.s32 2, %v286
    %v288 = vrot.slane %v275, %v287
    %v289 = vlaneseq
    %v290 = vshrl.u32 %v289, 7
    %v291 = vsub.s32 3, %v290
    %v292 = vrot.slane %v275, %v291
    %v329 = vunpack.c.l.b16 %v243
    %v330 = vunpack.c.h.b16 %v243
    %v331 = vunpack.c.l.b16 %v244
    %v332 = vunpack.c.h.b16 %v244
    %v333 = vunpack.c.l.b16 %v245
    %v334 = vunpack.c.h.b16 %v245
    %v335 = vunpack.c.l.b16 %v246
    %v336 = vunpack.c.h.b16 %v246
    %v337 = vunpack.c.l.b16 %v247
    %v338 = vunpack.c.h.b16 %v247
    %v339 = vunpack.c.l.b16 %v248
    %v340 = vunpack.c.h.b16 %v248
    %v341 = vunpack.c.l.b16 %v249
    %v342 = vunpack.c.h.b16 %v249
    %v343 = vunpack.c.l.b16 %v250
    %v344 = vunpack.c.h.b16 %v250
    %v345 = vunpack.c.l.b16 %v251
    %v346 = vunpack.c.h.b16 %v251
    %v347 = vunpack.c.l.b16 %v252
    %v348 = vunpack.c.h.b16 %v252
    %v349 = vunpack.c.l.b16 %v253
    %v350 = vunpack.c.h.b16 %v253
    %v351 = vunpack.c.l.b16 %v254
    %v352 = vunpack.c.h.b16 %v254
    %v353 = vunpack.c.l.b16 %v255
    %v354 = vunpack.c.h.b16 %v255
    %v355 = vunpack.c.l.b16 %v256
    %v356 = vunpack.c.h.b16 %v256
    %v357 = vunpack.c.l.b16 %v257
    %v358 = vunpack.c.h.b16 %v257
    %v359 = vunpack.c.l.b16 %v258
    %v360 = vunpack.c.h.b16 %v258
    %v361 = vunpack.c.l.b16 %v259
    %v362 = vunpack.c.h.b16 %v259
    %v363 = vunpack.c.l.b16 %v260
    %v364 = vunpack.c.h.b16 %v260
    %v365 = vunpack.c.l.b16 %v261
    %v366 = vunpack.c.h.b16 %v261
    %v367 = vunpack.c.l.b16 %v262
    %v368 = vunpack.c.h.b16 %v262
    %v369 = vunpack.c.l.b16 %v263
    %v370 = vunpack.c.h.b16 %v263
    %v371 = vunpack.c.l.b16 %v264
    %v372 = vunpack.c.h.b16 %v264
    %v373 = vunpack.c.l.b16 %v265
    %v374 = vunpack.c.h.b16 %v265
    %v375 = vunpack.c.l.b16 %v266
    %v376 = vunpack.c.h.b16 %v266
    %v377 = vunpack.c.l.b16 %v267
    %v378 = vunpack.c.h.b16 %v267
    %v379 = vunpack.c.l.b16 %v268
    %v380 = vunpack.c.h.b16 %v268
    %v381 = vunpack.c.l.b16 %v269
    %v382 = vunpack.c.h.b16 %v269
    %v383 = vunpack.c.l.b16 %v270
    %v384 = vunpack.c.h.b16 %v270
    %v385 = vunpack.c.l.b16 %v271
    %v386 = vunpack.c.h.b16 %v271
    %v387 = vunpack.c.l.b16 %v272
    %v388 = vunpack.c.h.b16 %v272
    %v389 = vunpack.c.l.b16 %v273
    %v390 = vunpack.c.h.b16 %v273
    %v391 = vunpack.c.l.b16 %v274
    %v392 = vunpack.c.h.b16 %v274
    %v393 = vpack.c.b16 %v333, %v329
    %v394 = vpack.c.b16 %v334, %v330
    %v395 = vpack.c.b16 %v335, %v331
    %v396 = vpack.c.b16 %v336, %v332
    %v397 = vpack.c.b16 %v341, %v337
    %v398 = vpack.c.b16 %v342, %v338
    %v399 = vpack.c.b16 %v343, %v339
    %v400 = vpack.c.b16 %v344, %v340
    %v401 = vpack.c.b16 %v349, %v345
    %v402 = vpack.c.b16 %v350, %v346
    %v403 = vpack.c.b16 %v351, %v347
    %v404 = vpack.c.b16 %v352, %v348
    %v405 = vpack.c.b16 %v357, %v353
    %v406 = vpack.c.b16 %v358, %v354
    %v407 = vpack.c.b16 %v359, %v355
    %v408 = vpack.c.b16 %v360, %v356
    %v409 = vpack.c.b16 %v365, %v361
    %v410 = vpack.c.b16 %v366, %v362
    %v411 = vpack.c.b16 %v367, %v363
    %v412 = vpack.c.b16 %v368, %v364
    %v413 = vpack.c.b16 %v373, %v369
    %v414 = vpack.c.b16 %v374, %v370
    %v415 = vpack.c.b16 %v375, %v371
    %v416 = vpack.c.b16 %v376, %v372
    %v417 = vpack.c.b16 %v381, %v377
    %v418 = vpack.c.b16 %v382, %v378
    %v419 = vpack.c.b16 %v383, %v379
    %v420 = vpack.c.b16 %v384, %v380
    %v421 = vpack.c.b16 %v389, %v385
    %v422 = vpack.c.b16 %v390, %v386
    %v423 = vpack.c.b16 %v391, %v387
    %v424 = vpack.c.b16 %v392, %v388
    %457 = vmatprep.subr.bf16.mxu0 %v394
    %458 = vmatpush1.bf16.msra.mxu0 %v393
    %459 = vmatprep.subr.bf16.mxu0 %v398
    %460 = vmatpush1.bf16.msra.mxu0 %v397
    %461 = vmatprep.subr.bf16.mxu0 %v402
    %462 = vmatpush1.bf16.msra.mxu0 %v401
    %463 = vmatprep.subr.bf16.mxu0 %v406
    %464 = vmatpush1.bf16.msra.mxu0 %v405
    %465 = vmatprep.subr.bf16.mxu0 %v410
    %466 = vmatpush1.bf16.msra.mxu0 %v409
    %467 = vmatprep.subr.bf16.mxu0 %v414
    %468 = vmatpush1.bf16.msra.mxu0 %v413
    %469 = vmatprep.subr.bf16.mxu0 %v418
    %470 = vmatpush1.bf16.msra.mxu0 %v417
    %471 = vmatprep.subr.bf16.mxu0 %v422
    %472 = vmatpush1.bf16.msra.mxu0 %v421
    %473 = vmatprep.subr.bf16.mxu0 0
    %474 = vmatpush1.bf16.msra.mxu0 0
    %475 = vmatprep.subr.bf16.mxu0 0
    %476 = vmatpush1.bf16.msra.mxu0 0
    %477 = vmatprep.subr.bf16.mxu0 0
    %478 = vmatpush1.bf16.msra.mxu0 0
    %479 = vmatprep.subr.bf16.mxu0 0
    %480 = vmatpush1.bf16.msra.mxu0 0
    %481 = vmatprep.subr.bf16.mxu0 0
    %482 = vmatpush1.bf16.msra.mxu0 0
    %483 = vmatprep.subr.bf16.mxu0 0
    %484 = vmatpush1.bf16.msra.mxu0 0
    %485 = vmatprep.subr.bf16.mxu0 0
    %486 = vmatpush1.bf16.msra.mxu0 0
    %487 = vmatprep.subr.bf16.mxu0 0
    %488 = vmatpush1.bf16.msra.mxu0 0
    %489 = vmatprep.mubr.bf16.mxu0 0
    %490 = vmatmul.mubr.bf16.gmra.mrb[0].mxu0 %v242
    %v491 = vpop.f32.mrb[0].mxu0
    %v492 = vadd.f32 %v280, %v491
    %v493 = vpop.f32.mrb[0].mxu0
    %v494 = vadd.f32 %v284, %v493
    %v495 = vpop.f32.mrb[0].mxu0
    %v496 = vpop.f32.mrb[0].mxu0
    %497 = vdwg.mxu0
    %498 = vmatprep.subr.bf16.mxu0 %v396
    %499 = vmatpush1.bf16.msra.mxu0 %v395
    %500 = vmatprep.subr.bf16.mxu0 %v400
    %501 = vmatpush1.bf16.msra.mxu0 %v399
    %502 = vmatprep.subr.bf16.mxu0 %v404
    %503 = vmatpush1.bf16.msra.mxu0 %v403
    %504 = vmatprep.subr.bf16.mxu0 %v408
    %505 = vmatpush1.bf16.msra.mxu0 %v407
    %506 = vmatprep.subr.bf16.mxu0 %v412
    %507 = vmatpush1.bf16.msra.mxu0 %v411
    %508 = vmatprep.subr.bf16.mxu0 %v416
    %509 = vmatpush1.bf16.msra.mxu0 %v415
    %510 = vmatprep.subr.bf16.mxu0 %v420
    %511 = vmatpush1.bf16.msra.mxu0 %v419
    %512 = vmatprep.subr.bf16.mxu0 %v424
    %513 = vmatpush1.bf16.msra.mxu0 %v423
    %514 = vmatprep.subr.bf16.mxu0 0
    %515 = vmatpush1.bf16.msra.mxu0 0
    %516 = vmatprep.subr.bf16.mxu0 0
    %517 = vmatpush1.bf16.msra.mxu0 0
    %518 = vmatprep.subr.bf16.mxu0 0
    %519 = vmatpush1.bf16.msra.mxu0 0
    %520 = vmatprep.subr.bf16.mxu0 0
    %521 = vmatpush1.bf16.msra.mxu0 0
    %522 = vmatprep.subr.bf16.mxu0 0
    %523 = vmatpush1.bf16.msra.mxu0 0
    %524 = vmatprep.subr.bf16.mxu0 0
    %525 = vmatpush1.bf16.msra.mxu0 0
    %526 = vmatprep.subr.bf16.mxu0 0
    %527 = vmatpush1.bf16.msra.mxu0 0
    %528 = vmatprep.subr.bf16.mxu0 0
    %529 = vmatpush1.bf16.msra.mxu0 0
    %530 = vmatprep.mubr.bf16.mxu0 0
    %531 = vmatmul.mubr.bf16.gmra.mrb[0].mxu0 %v242
    %v532 = vpop.f32.mrb[0].mxu0
    %v533 = vadd.f32 %v288, %v532
    %v534 = vpop.f32.mrb[0].mxu0
    %v535 = vadd.f32 %v292, %v534
    %v536 = vpop.f32.mrb[0].mxu0
    %v537 = vpop.f32.mrb[0].mxu0
    %538 = vdwg.mxu0
    %v539 = vpack.c.bf16 %v492, %v492
    %v540 = vpack.c.bf16 %v494, %v494
    %v541 = vpack.c.bf16 %v533, %v533
    %v542 = vpack.c.bf16 %v535, %v535
    %v543 = vlaneseq
    %v544 = vand.u32 %v543, 127
    %vm545 = vcmp.lt.s32.totalorder %v544, 8
    %v546 = vsel %vm545, 0.0, -1e+30
    %v563 = vunpack.c.l.b16 %v146
    %v564 = vunpack.c.l.b16 %v147
    %v565 = vunpack.c.l.b16 %v148
    %v566 = vunpack.c.l.b16 %v149
    %v567 = vunpack.c.l.b16 %v150
    %v568 = vunpack.c.l.b16 %v151
    %v569 = vunpack.c.l.b16 %v152
    %v570 = vunpack.c.l.b16 %v153
    %v571 = vunpack.c.l.b16 %v154
    %v572 = vunpack.c.l.b16 %v155
    %v573 = vunpack.c.l.b16 %v156
    %v574 = vunpack.c.l.b16 %v157
    %v575 = vunpack.c.l.b16 %v158
    %v576 = vunpack.c.l.b16 %v159
    %v577 = vunpack.c.l.b16 %v160
    %v578 = vunpack.c.l.b16 %v161
    %v579 = vpack.c.b16 %v564, %v563
    %v580 = vpack.c.b16 %v566, %v565
    %v581 = vpack.c.b16 %v568, %v567
    %v582 = vpack.c.b16 %v570, %v569
    %v583 = vpack.c.b16 %v572, %v571
    %v584 = vpack.c.b16 %v574, %v573
    %v585 = vpack.c.b16 %v576, %v575
    %v586 = vpack.c.b16 %v578, %v577
    %595 = vmatprep.subr.bf16.mxu0 0
    %596 = vmatpush1.bf16.msra.mxu0 %v579
    %597 = vmatprep.subr.bf16.mxu0 0
    %598 = vmatpush1.bf16.msra.mxu0 %v580
    %599 = vmatprep.subr.bf16.mxu0 0
    %600 = vmatpush1.bf16.msra.mxu0 %v581
    %601 = vmatprep.subr.bf16.mxu0 0
    %602 = vmatpush1.bf16.msra.mxu0 %v582
    %603 = vmatprep.subr.bf16.mxu0 0
    %604 = vmatpush1.bf16.msra.mxu0 %v583
    %605 = vmatprep.subr.bf16.mxu0 0
    %606 = vmatpush1.bf16.msra.mxu0 %v584
    %607 = vmatprep.subr.bf16.mxu0 0
    %608 = vmatpush1.bf16.msra.mxu0 %v585
    %609 = vmatprep.subr.bf16.mxu0 0
    %610 = vmatpush1.bf16.msra.mxu0 %v586
    %611 = vmatprep.subr.bf16.mxu0 0
    %612 = vmatpush1.bf16.msra.mxu0 0
    %613 = vmatprep.subr.bf16.mxu0 0
    %614 = vmatpush1.bf16.msra.mxu0 0
    %615 = vmatprep.subr.bf16.mxu0 0
    %616 = vmatpush1.bf16.msra.mxu0 0
    %617 = vmatprep.subr.bf16.mxu0 0
    %618 = vmatpush1.bf16.msra.mxu0 0
    %619 = vmatprep.subr.bf16.mxu0 0
    %620 = vmatpush1.bf16.msra.mxu0 0
    %621 = vmatprep.subr.bf16.mxu0 0
    %622 = vmatpush1.bf16.msra.mxu0 0
    %623 = vmatprep.subr.bf16.mxu0 0
    %624 = vmatpush1.bf16.msra.mxu0 0
    %625 = vmatprep.subr.bf16.mxu0 0
    %626 = vmatpush1.bf16.msra.mxu0 0
    %627 = vmatprep.mubr.bf16.mxu0 0
    %628 = vmatmul.mubr.bf16.gmra.mrb[0].mxu0 %v539
    %v629 = vpop.f32.mrb[0].mxu0
    %v630 = vadd.f32 %v546, %v629
    %v631 = vpop.f32.mrb[0].mxu0
    %v632 = vpop.f32.mrb[0].mxu0
    %v633 = vpop.f32.mrb[0].mxu0
    %634 = vdwg.mxu0
    %635 = vmax.xlane.f32.xlu0 %v630
    %v636 = vpop.xlane.xlu0 %635
    %v637 = vsub.f32 %v630, %v636
    %v638 = vmul.f32 %v637, 1.442695
    %v639 = vpow.pop %v638
    %640 = vadd.xlane.f32.xlu0 %v639
    %v641 = vpop.xlane.xlu0 %640
    %v642 = vrcp.pop %v641
    %v643 = vmul.f32 %v639, %v642
    %v644 = vpack.c.bf16 %v643, %v643
    %v661 = vunpack.c.l.b16 %v210
    %v662 = vunpack.c.l.b16 %v212
    %v663 = vunpack.c.l.b16 %v214
    %v664 = vunpack.c.l.b16 %v216
    %v665 = vunpack.c.l.b16 %v218
    %v666 = vunpack.c.l.b16 %v220
    %v667 = vunpack.c.l.b16 %v222
    %v668 = vunpack.c.l.b16 %v224
    %v669 = vunpack.c.l.b16 %v226
    %v670 = vunpack.c.l.b16 %v228
    %v671 = vunpack.c.l.b16 %v230
    %v672 = vunpack.c.l.b16 %v232
    %v673 = vunpack.c.l.b16 %v234
    %v674 = vunpack.c.l.b16 %v236
    %v675 = vunpack.c.l.b16 %v238
    %v676 = vunpack.c.l.b16 %v240
    %v677 = vpack.c.b16 %v662, %v661
    %v678 = vpack.c.b16 %v664, %v663
    %v679 = vpack.c.b16 %v666, %v665
    %v680 = vpack.c.b16 %v668, %v667
    %v681 = vpack.c.b16 %v670, %v669
    %v682 = vpack.c.b16 %v672, %v671
    %v683 = vpack.c.b16 %v674, %v673
    %v684 = vpack.c.b16 %v676, %v675
    %693 = vmatprep.subr.bf16.mxu0 0
    %694 = vmatpush1.bf16.msra.mxu0 %v677
    %695 = vmatprep.subr.bf16.mxu0 0
    %696 = vmatpush1.bf16.msra.mxu0 %v678
    %697 = vmatprep.subr.bf16.mxu0 0
    %698 = vmatpush1.bf16.msra.mxu0 %v679
    %699 = vmatprep.subr.bf16.mxu0 0
    %700 = vmatpush1.bf16.msra.mxu0 %v680
    %701 = vmatprep.subr.bf16.mxu0 0
    %702 = vmatpush1.bf16.msra.mxu0 %v681
    %703 = vmatprep.subr.bf16.mxu0 0
    %704 = vmatpush1.bf16.msra.mxu0 %v682
    %705 = vmatprep.subr.bf16.mxu0 0
    %706 = vmatpush1.bf16.msra.mxu0 %v683
    %707 = vmatprep.subr.bf16.mxu0 0
    %708 = vmatpush1.bf16.msra.mxu0 %v684
    %709 = vmatprep.subr.bf16.mxu0 0
    %710 = vmatpush1.bf16.msra.mxu0 0
    %711 = vmatprep.subr.bf16.mxu0 0
    %712 = vmatpush1.bf16.msra.mxu0 0
    %713 = vmatprep.subr.bf16.mxu0 0
    %714 = vmatpush1.bf16.msra.mxu0 0
    %715 = vmatprep.subr.bf16.mxu0 0
    %716 = vmatpush1.bf16.msra.mxu0 0
    %717 = vmatprep.subr.bf16.mxu0 0
    %718 = vmatpush1.bf16.msra.mxu0 0
    %719 = vmatprep.subr.bf16.mxu0 0
    %720 = vmatpush1.bf16.msra.mxu0 0
    %721 = vmatprep.subr.bf16.mxu0 0
    %722 = vmatpush1.bf16.msra.mxu0 0
    %723 = vmatprep.subr.bf16.mxu0 0
    %724 = vmatpush1.bf16.msra.mxu0 0
    %725 = vmatprep.mubr.bf16.mxu0 0
    %726 = vmatmul.mubr.bf16.gmra.mrb[0].mxu0 %v644
    %v727 = vpop.f32.mrb[0].mxu0
    %v728 = vadd.f32 0.0, %v727
    %v729 = vpop.f32.mrb[0].mxu0
    %v730 = vpop.f32.mrb[0].mxu0
    %v731 = vpop.f32.mrb[0].mxu0
    %732 = vdwg.mxu0
    %v749 = vunpack.c.l.b16 %v162
    %v750 = vunpack.c.l.b16 %v163
    %v751 = vunpack.c.l.b16 %v164
    %v752 = vunpack.c.l.b16 %v165
    %v753 = vunpack.c.l.b16 %v166
    %v754 = vunpack.c.l.b16 %v167
    %v755 = vunpack.c.l.b16 %v168
    %v756 = vunpack.c.l.b16 %v169
    %v757 = vunpack.c.l.b16 %v170
    %v758 = vunpack.c.l.b16 %v171
    %v759 = vunpack.c.l.b16 %v172
    %v760 = vunpack.c.l.b16 %v173
    %v761 = vunpack.c.l.b16 %v174
    %v762 = vunpack.c.l.b16 %v175
    %v763 = vunpack.c.l.b16 %v176
    %v764 = vunpack.c.l.b16 %v177
    %v765 = vpack.c.b16 %v750, %v749
    %v766 = vpack.c.b16 %v752, %v751
    %v767 = vpack.c.b16 %v754, %v753
    %v768 = vpack.c.b16 %v756, %v755
    %v769 = vpack.c.b16 %v758, %v757
    %v770 = vpack.c.b16 %v760, %v759
    %v771 = vpack.c.b16 %v762, %v761
    %v772 = vpack.c.b16 %v764, %v763
    %781 = vmatprep.subr.bf16.mxu0 0
    %782 = vmatpush1.bf16.msra.mxu0 %v765
    %783 = vmatprep.subr.bf16.mxu0 0
    %784 = vmatpush1.bf16.msra.mxu0 %v766
    %785 = vmatprep.subr.bf16.mxu0 0
    %786 = vmatpush1.bf16.msra.mxu0 %v767
    %787 = vmatprep.subr.bf16.mxu0 0
    %788 = vmatpush1.bf16.msra.mxu0 %v768
    %789 = vmatprep.subr.bf16.mxu0 0
    %790 = vmatpush1.bf16.msra.mxu0 %v769
    %791 = vmatprep.subr.bf16.mxu0 0
    %792 = vmatpush1.bf16.msra.mxu0 %v770
    %793 = vmatprep.subr.bf16.mxu0 0
    %794 = vmatpush1.bf16.msra.mxu0 %v771
    %795 = vmatprep.subr.bf16.mxu0 0
    %796 = vmatpush1.bf16.msra.mxu0 %v772
    %797 = vmatprep.subr.bf16.mxu0 0
    %798 = vmatpush1.bf16.msra.mxu0 0
    %799 = vmatprep.subr.bf16.mxu0 0
    %800 = vmatpush1.bf16.msra.mxu0 0
    %801 = vmatprep.subr.bf16.mxu0 0
    %802 = vmatpush1.bf16.msra.mxu0 0
    %803 = vmatprep.subr.bf16.mxu0 0
    %804 = vmatpush1.bf16.msra.mxu0 0
    %805 = vmatprep.subr.bf16.mxu0 0
    %806 = vmatpush1.bf16.msra.mxu0 0
    %807 = vmatprep.subr.bf16.mxu0 0
    %808 = vmatpush1.bf16.msra.mxu0 0
    %809 = vmatprep.subr.bf16.mxu0 0
    %810 = vmatpush1.bf16.msra.mxu0 0
    %811 = vmatprep.subr.bf16.mxu0 0
    %812 = vmatpush1.bf16.msra.mxu0 0
    %813 = vmatprep.mubr.bf16.mxu0 0
    %814 = vmatmul.mubr.bf16.gmra.mrb[0].mxu0 %v540
    %v815 = vpop.f32.mrb[0].mxu0
    %v816 = vadd.f32 %v546, %v815
    %v817 = vpop.f32.mrb[0].mxu0
    %v818 = vpop.f32.mrb[0].mxu0
    %v819 = vpop.f32.mrb[0].mxu0
    %820 = vdwg.mxu0
    %821 = vmax.xlane.f32.xlu0 %v816
    %v822 = vpop.xlane.xlu0 %821
    %v823 = vsub.f32 %v816, %v822
    %v824 = vmul.f32 %v823, 1.442695
    %v825 = vpow.pop %v824
    %826 = vadd.xlane.f32.xlu0 %v825
    %v827 = vpop.xlane.xlu0 %826
    %v828 = vrcp.pop %v827
    %v829 = vmul.f32 %v825, %v828
    %v830 = vpack.c.bf16 %v829, %v829
    %v831 = vunpack.c.h.b16 %v210
    %v832 = vunpack.c.h.b16 %v212
    %v833 = vunpack.c.h.b16 %v214
    %v834 = vunpack.c.h.b16 %v216
    %v835 = vunpack.c.h.b16 %v218
    %v836 = vunpack.c.h.b16 %v220
    %v837 = vunpack.c.h.b16 %v222
    %v838 = vunpack.c.h.b16 %v224
    %v839 = vunpack.c.h.b16 %v226
    %v840 = vunpack.c.h.b16 %v228
    %v841 = vunpack.c.h.b16 %v230
    %v842 = vunpack.c.h.b16 %v232
    %v843 = vunpack.c.h.b16 %v234
    %v844 = vunpack.c.h.b16 %v236
    %v845 = vunpack.c.h.b16 %v238
    %v846 = vunpack.c.h.b16 %v240
    %v847 = vpack.c.b16 %v832, %v831
    %v848 = vpack.c.b16 %v834, %v833
    %v849 = vpack.c.b16 %v836, %v835
    %v850 = vpack.c.b16 %v838, %v837
    %v851 = vpack.c.b16 %v840, %v839
    %v852 = vpack.c.b16 %v842, %v841
    %v853 = vpack.c.b16 %v844, %v843
    %v854 = vpack.c.b16 %v846, %v845
    %863 = vmatprep.subr.bf16.mxu0 0
    %864 = vmatpush1.bf16.msra.mxu0 %v847
    %865 = vmatprep.subr.bf16.mxu0 0
    %866 = vmatpush1.bf16.msra.mxu0 %v848
    %867 = vmatprep.subr.bf16.mxu0 0
    %868 = vmatpush1.bf16.msra.mxu0 %v849
    %869 = vmatprep.subr.bf16.mxu0 0
    %870 = vmatpush1.bf16.msra.mxu0 %v850
    %871 = vmatprep.subr.bf16.mxu0 0
    %872 = vmatpush1.bf16.msra.mxu0 %v851
    %873 = vmatprep.subr.bf16.mxu0 0
    %874 = vmatpush1.bf16.msra.mxu0 %v852
    %875 = vmatprep.subr.bf16.mxu0 0
    %876 = vmatpush1.bf16.msra.mxu0 %v853
    %877 = vmatprep.subr.bf16.mxu0 0
    %878 = vmatpush1.bf16.msra.mxu0 %v854
    %879 = vmatprep.subr.bf16.mxu0 0
    %880 = vmatpush1.bf16.msra.mxu0 0
    %881 = vmatprep.subr.bf16.mxu0 0
    %882 = vmatpush1.bf16.msra.mxu0 0
    %883 = vmatprep.subr.bf16.mxu0 0
    %884 = vmatpush1.bf16.msra.mxu0 0
    %885 = vmatprep.subr.bf16.mxu0 0
    %886 = vmatpush1.bf16.msra.mxu0 0
    %887 = vmatprep.subr.bf16.mxu0 0
    %888 = vmatpush1.bf16.msra.mxu0 0
    %889 = vmatprep.subr.bf16.mxu0 0
    %890 = vmatpush1.bf16.msra.mxu0 0
    %891 = vmatprep.subr.bf16.mxu0 0
    %892 = vmatpush1.bf16.msra.mxu0 0
    %893 = vmatprep.subr.bf16.mxu0 0
    %894 = vmatpush1.bf16.msra.mxu0 0
    %895 = vmatprep.mubr.bf16.mxu0 0
    %896 = vmatmul.mubr.bf16.gmra.mrb[0].mxu0 %v830
    %v897 = vpop.f32.mrb[0].mxu0
    %v898 = vadd.f32 0.0, %v897
    %v899 = vpop.f32.mrb[0].mxu0
    %v900 = vpop.f32.mrb[0].mxu0
    %v901 = vpop.f32.mrb[0].mxu0
    %902 = vdwg.mxu0
    %v919 = vunpack.c.l.b16 %v178
    %v920 = vunpack.c.l.b16 %v179
    %v921 = vunpack.c.l.b16 %v180
    %v922 = vunpack.c.l.b16 %v181
    %v923 = vunpack.c.l.b16 %v182
    %v924 = vunpack.c.l.b16 %v183
    %v925 = vunpack.c.l.b16 %v184
    %v926 = vunpack.c.l.b16 %v185
    %v927 = vunpack.c.l.b16 %v186
    %v928 = vunpack.c.l.b16 %v187
    %v929 = vunpack.c.l.b16 %v188
    %v930 = vunpack.c.l.b16 %v189
    %v931 = vunpack.c.l.b16 %v190
    %v932 = vunpack.c.l.b16 %v191
    %v933 = vunpack.c.l.b16 %v192
    %v934 = vunpack.c.l.b16 %v193
    %v935 = vpack.c.b16 %v920, %v919
    %v936 = vpack.c.b16 %v922, %v921
    %v937 = vpack.c.b16 %v924, %v923
    %v938 = vpack.c.b16 %v926, %v925
    %v939 = vpack.c.b16 %v928, %v927
    %v940 = vpack.c.b16 %v930, %v929
    %v941 = vpack.c.b16 %v932, %v931
    %v942 = vpack.c.b16 %v934, %v933
    %951 = vmatprep.subr.bf16.mxu0 0
    %952 = vmatpush1.bf16.msra.mxu0 %v935
    %953 = vmatprep.subr.bf16.mxu0 0
    %954 = vmatpush1.bf16.msra.mxu0 %v936
    %955 = vmatprep.subr.bf16.mxu0 0
    %956 = vmatpush1.bf16.msra.mxu0 %v937
    %957 = vmatprep.subr.bf16.mxu0 0
    %958 = vmatpush1.bf16.msra.mxu0 %v938
    %959 = vmatprep.subr.bf16.mxu0 0
    %960 = vmatpush1.bf16.msra.mxu0 %v939
    %961 = vmatprep.subr.bf16.mxu0 0
    %962 = vmatpush1.bf16.msra.mxu0 %v940
    %963 = vmatprep.subr.bf16.mxu0 0
    %964 = vmatpush1.bf16.msra.mxu0 %v941
    %965 = vmatprep.subr.bf16.mxu0 0
    %966 = vmatpush1.bf16.msra.mxu0 %v942
    %967 = vmatprep.subr.bf16.mxu0 0
    %968 = vmatpush1.bf16.msra.mxu0 0
    %969 = vmatprep.subr.bf16.mxu0 0
    %970 = vmatpush1.bf16.msra.mxu0 0
    %971 = vmatprep.subr.bf16.mxu0 0
    %972 = vmatpush1.bf16.msra.mxu0 0
    %973 = vmatprep.subr.bf16.mxu0 0
    %974 = vmatpush1.bf16.msra.mxu0 0
    %975 = vmatprep.subr.bf16.mxu0 0
    %976 = vmatpush1.bf16.msra.mxu0 0
    %977 = vmatprep.subr.bf16.mxu0 0
    %978 = vmatpush1.bf16.msra.mxu0 0
    %979 = vmatprep.subr.bf16.mxu0 0
    %980 = vmatpush1.bf16.msra.mxu0 0
    %981 = vmatprep.subr.bf16.mxu0 0
    %982 = vmatpush1.bf16.msra.mxu0 0
    %983 = vmatprep.mubr.bf16.mxu0 0
    %984 = vmatmul.mubr.bf16.gmra.mrb[0].mxu0 %v541
    %v985 = vpop.f32.mrb[0].mxu0
    %v986 = vadd.f32 %v546, %v985
    %v987 = vpop.f32.mrb[0].mxu0
    %v988 = vpop.f32.mrb[0].mxu0
    %v989 = vpop.f32.mrb[0].mxu0
    %990 = vdwg.mxu0
    %991 = vmax.xlane.f32.xlu0 %v986
    %v992 = vpop.xlane.xlu0 %991
    %v993 = vsub.f32 %v986, %v992
    %v994 = vmul.f32 %v993, 1.442695
    %v995 = vpow.pop %v994
    %996 = vadd.xlane.f32.xlu0 %v995
    %v997 = vpop.xlane.xlu0 %996
    %v998 = vrcp.pop %v997
    %v999 = vmul.f32 %v995, %v998
    %v1000 = vpack.c.bf16 %v999, %v999
    %v1017 = vunpack.c.l.b16 %v211
    %v1018 = vunpack.c.l.b16 %v213
    %v1019 = vunpack.c.l.b16 %v215
    %v1020 = vunpack.c.l.b16 %v217
    %v1021 = vunpack.c.l.b16 %v219
    %v1022 = vunpack.c.l.b16 %v221
    %v1023 = vunpack.c.l.b16 %v223
    %v1024 = vunpack.c.l.b16 %v225
    %v1025 = vunpack.c.l.b16 %v227
    %v1026 = vunpack.c.l.b16 %v229
    %v1027 = vunpack.c.l.b16 %v231
    %v1028 = vunpack.c.l.b16 %v233
    %v1029 = vunpack.c.l.b16 %v235
    %v1030 = vunpack.c.l.b16 %v237
    %v1031 = vunpack.c.l.b16 %v239
    %v1032 = vunpack.c.l.b16 %v241
    %v1033 = vpack.c.b16 %v1018, %v1017
    %v1034 = vpack.c.b16 %v1020, %v1019
    %v1035 = vpack.c.b16 %v1022, %v1021
    %v1036 = vpack.c.b16 %v1024, %v1023
    %v1037 = vpack.c.b16 %v1026, %v1025
    %v1038 = vpack.c.b16 %v1028, %v1027
    %v1039 = vpack.c.b16 %v1030, %v1029
    %v1040 = vpack.c.b16 %v1032, %v1031
    %1049 = vmatprep.subr.bf16.mxu0 0
    %1050 = vmatpush1.bf16.msra.mxu0 %v1033
    %1051 = vmatprep.subr.bf16.mxu0 0
    %1052 = vmatpush1.bf16.msra.mxu0 %v1034
    %1053 = vmatprep.subr.bf16.mxu0 0
    %1054 = vmatpush1.bf16.msra.mxu0 %v1035
    %1055 = vmatprep.subr.bf16.mxu0 0
    %1056 = vmatpush1.bf16.msra.mxu0 %v1036
    %1057 = vmatprep.subr.bf16.mxu0 0
    %1058 = vmatpush1.bf16.msra.mxu0 %v1037
    %1059 = vmatprep.subr.bf16.mxu0 0
    %1060 = vmatpush1.bf16.msra.mxu0 %v1038
    %1061 = vmatprep.subr.bf16.mxu0 0
    %1062 = vmatpush1.bf16.msra.mxu0 %v1039
    %1063 = vmatprep.subr.bf16.mxu0 0
    %1064 = vmatpush1.bf16.msra.mxu0 %v1040
    %1065 = vmatprep.subr.bf16.mxu0 0
    %1066 = vmatpush1.bf16.msra.mxu0 0
    %1067 = vmatprep.subr.bf16.mxu0 0
    %1068 = vmatpush1.bf16.msra.mxu0 0
    %1069 = vmatprep.subr.bf16.mxu0 0
    %1070 = vmatpush1.bf16.msra.mxu0 0
    %1071 = vmatprep.subr.bf16.mxu0 0
    %1072 = vmatpush1.bf16.msra.mxu0 0
    %1073 = vmatprep.subr.bf16.mxu0 0
    %1074 = vmatpush1.bf16.msra.mxu0 0
    %1075 = vmatprep.subr.bf16.mxu0 0
    %1076 = vmatpush1.bf16.msra.mxu0 0
    %1077 = vmatprep.subr.bf16.mxu0 0
    %1078 = vmatpush1.bf16.msra.mxu0 0
    %1079 = vmatprep.subr.bf16.mxu0 0
    %1080 = vmatpush1.bf16.msra.mxu0 0
    %1081 = vmatprep.mubr.bf16.mxu0 0
    %1082 = vmatmul.mubr.bf16.gmra.mrb[0].mxu0 %v1000
    %v1083 = vpop.f32.mrb[0].mxu0
    %v1084 = vadd.f32 0.0, %v1083
    %v1085 = vpop.f32.mrb[0].mxu0
    %v1086 = vpop.f32.mrb[0].mxu0
    %v1087 = vpop.f32.mrb[0].mxu0
    %1088 = vdwg.mxu0
    %v1105 = vunpack.c.l.b16 %v194
    %v1106 = vunpack.c.l.b16 %v195
    %v1107 = vunpack.c.l.b16 %v196
    %v1108 = vunpack.c.l.b16 %v197
    %v1109 = vunpack.c.l.b16 %v198
    %v1110 = vunpack.c.l.b16 %v199
    %v1111 = vunpack.c.l.b16 %v200
    %v1112 = vunpack.c.l.b16 %v201
    %v1113 = vunpack.c.l.b16 %v202
    %v1114 = vunpack.c.l.b16 %v203
    %v1115 = vunpack.c.l.b16 %v204
    %v1116 = vunpack.c.l.b16 %v205
    %v1117 = vunpack.c.l.b16 %v206
    %v1118 = vunpack.c.l.b16 %v207
    %v1119 = vunpack.c.l.b16 %v208
    %v1120 = vunpack.c.l.b16 %v209
    %v1121 = vpack.c.b16 %v1106, %v1105
    %v1122 = vpack.c.b16 %v1108, %v1107
    %v1123 = vpack.c.b16 %v1110, %v1109
    %v1124 = vpack.c.b16 %v1112, %v1111
    %v1125 = vpack.c.b16 %v1114, %v1113
    %v1126 = vpack.c.b16 %v1116, %v1115
    %v1127 = vpack.c.b16 %v1118, %v1117
    %v1128 = vpack.c.b16 %v1120, %v1119
    %1137 = vmatprep.subr.bf16.mxu0 0
    %1138 = vmatpush1.bf16.msra.mxu0 %v1121
    %1139 = vmatprep.subr.bf16.mxu0 0
    %1140 = vmatpush1.bf16.msra.mxu0 %v1122
    %1141 = vmatprep.subr.bf16.mxu0 0
    %1142 = vmatpush1.bf16.msra.mxu0 %v1123
    %1143 = vmatprep.subr.bf16.mxu0 0
    %1144 = vmatpush1.bf16.msra.mxu0 %v1124
    %1145 = vmatprep.subr.bf16.mxu0 0
    %1146 = vmatpush1.bf16.msra.mxu0 %v1125
    %1147 = vmatprep.subr.bf16.mxu0 0
    %1148 = vmatpush1.bf16.msra.mxu0 %v1126
    %1149 = vmatprep.subr.bf16.mxu0 0
    %1150 = vmatpush1.bf16.msra.mxu0 %v1127
    %1151 = vmatprep.subr.bf16.mxu0 0
    %1152 = vmatpush1.bf16.msra.mxu0 %v1128
    %1153 = vmatprep.subr.bf16.mxu0 0
    %1154 = vmatpush1.bf16.msra.mxu0 0
    %1155 = vmatprep.subr.bf16.mxu0 0
    %1156 = vmatpush1.bf16.msra.mxu0 0
    %1157 = vmatprep.subr.bf16.mxu0 0
    %1158 = vmatpush1.bf16.msra.mxu0 0
    %1159 = vmatprep.subr.bf16.mxu0 0
    %1160 = vmatpush1.bf16.msra.mxu0 0
    %1161 = vmatprep.subr.bf16.mxu0 0
    %1162 = vmatpush1.bf16.msra.mxu0 0
    %1163 = vmatprep.subr.bf16.mxu0 0
    %1164 = vmatpush1.bf16.msra.mxu0 0
    %1165 = vmatprep.subr.bf16.mxu0 0
    %1166 = vmatpush1.bf16.msra.mxu0 0
    %1167 = vmatprep.subr.bf16.mxu0 0
    %1168 = vmatpush1.bf16.msra.mxu0 0
    %1169 = vmatprep.mubr.bf16.mxu0 0
    %1170 = vmatmul.mubr.bf16.gmra.mrb[0].mxu0 %v542
    %v1171 = vpop.f32.mrb[0].mxu0
    %v1172 = vadd.f32 %v546, %v1171
    %v1173 = vpop.f32.mrb[0].mxu0
    %v1174 = vpop.f32.mrb[0].mxu0
    %v1175 = vpop.f32.mrb[0].mxu0
    %1176 = vdwg.mxu0
    %1177 = vmax.xlane.f32.xlu0 %v1172
    %v1178 = vpop.xlane.xlu0 %1177
    %v1179 = vsub.f32 %v1172, %v1178
    %v1180 = vmul.f32 %v1179, 1.442695
    %v1181 = vpow.pop %v1180
    %1182 = vadd.xlane.f32.xlu0 %v1181
    %v1183 = vpop.xlane.xlu0 %1182
    %v1184 = vrcp.pop %v1183
    %v1185 = vmul.f32 %v1181, %v1184
    %v1186 = vpack.c.bf16 %v1185, %v1185
    %v1187 = vunpack.c.h.b16 %v211
    %v1188 = vunpack.c.h.b16 %v213
    %v1189 = vunpack.c.h.b16 %v215
    %v1190 = vunpack.c.h.b16 %v217
    %v1191 = vunpack.c.h.b16 %v219
    %v1192 = vunpack.c.h.b16 %v221
    %v1193 = vunpack.c.h.b16 %v223
    %v1194 = vunpack.c.h.b16 %v225
    %v1195 = vunpack.c.h.b16 %v227
    %v1196 = vunpack.c.h.b16 %v229
    %v1197 = vunpack.c.h.b16 %v231
    %v1198 = vunpack.c.h.b16 %v233
    %v1199 = vunpack.c.h.b16 %v235
    %v1200 = vunpack.c.h.b16 %v237
    %v1201 = vunpack.c.h.b16 %v239
    %v1202 = vunpack.c.h.b16 %v241
    %v1203 = vpack.c.b16 %v1188, %v1187
    %v1204 = vpack.c.b16 %v1190, %v1189
    %v1205 = vpack.c.b16 %v1192, %v1191
    %v1206 = vpack.c.b16 %v1194, %v1193
    %v1207 = vpack.c.b16 %v1196, %v1195
    %v1208 = vpack.c.b16 %v1198, %v1197
    %v1209 = vpack.c.b16 %v1200, %v1199
    %v1210 = vpack.c.b16 %v1202, %v1201
    %1219 = vmatprep.subr.bf16.mxu0 0
    %1220 = vmatpush1.bf16.msra.mxu0 %v1203
    %1221 = vmatprep.subr.bf16.mxu0 0
    %1222 = vmatpush1.bf16.msra.mxu0 %v1204
    %1223 = vmatprep.subr.bf16.mxu0 0
    %1224 = vmatpush1.bf16.msra.mxu0 %v1205
    %1225 = vmatprep.subr.bf16.mxu0 0
    %1226 = vmatpush1.bf16.msra.mxu0 %v1206
    %1227 = vmatprep.subr.bf16.mxu0 0
    %1228 = vmatpush1.bf16.msra.mxu0 %v1207
    %1229 = vmatprep.subr.bf16.mxu0 0
    %1230 = vmatpush1.bf16.msra.mxu0 %v1208
    %1231 = vmatprep.subr.bf16.mxu0 0
    %1232 = vmatpush1.bf16.msra.mxu0 %v1209
    %1233 = vmatprep.subr.bf16.mxu0 0
    %1234 = vmatpush1.bf16.msra.mxu0 %v1210
    %1235 = vmatprep.subr.bf16.mxu0 0
    %1236 = vmatpush1.bf16.msra.mxu0 0
    %1237 = vmatprep.subr.bf16.mxu0 0
    %1238 = vmatpush1.bf16.msra.mxu0 0
    %1239 = vmatprep.subr.bf16.mxu0 0
    %1240 = vmatpush1.bf16.msra.mxu0 0
    %1241 = vmatprep.subr.bf16.mxu0 0
    %1242 = vmatpush1.bf16.msra.mxu0 0
    %1243 = vmatprep.subr.bf16.mxu0 0
    %1244 = vmatpush1.bf16.msra.mxu0 0
    %1245 = vmatprep.subr.bf16.mxu0 0
    %1246 = vmatpush1.bf16.msra.mxu0 0
    %1247 = vmatprep.subr.bf16.mxu0 0
    %1248 = vmatpush1.bf16.msra.mxu0 0
    %1249 = vmatprep.subr.bf16.mxu0 0
    %1250 = vmatpush1.bf16.msra.mxu0 0
    %1251 = vmatprep.mubr.bf16.mxu0 0
    %1252 = vmatmul.mubr.bf16.gmra.mrb[0].mxu0 %v1186
    %v1253 = vpop.f32.mrb[0].mxu0
    %v1254 = vadd.f32 0.0, %v1253
    %v1255 = vpop.f32.mrb[0].mxu0
    %v1256 = vpop.f32.mrb[0].mxu0
    %v1257 = vpop.f32.mrb[0].mxu0
    %1258 = vdwg.mxu0
    %v1259 = vpack.c.bf16 %v728, %v728
    %v1260 = vpack.c.bf16 %v898, %v898
    %v1261 = vpack.c.bf16 %v1084, %v1084
    %v1262 = vpack.c.bf16 %v1254, %v1254
    %v1263 = vld [vmem:[#allocation10] sm:$0xf]
    %v1264 = vld [vmem:[#allocation10 + $0x4] sm:$0xf]
    %v1265 = vld [vmem:[#allocation10 + $0x8] sm:$0xf]
    %v1266 = vld [vmem:[#allocation10 + $0xc] sm:$0xf]
    %v1267 = vld [vmem:[#allocation10 + $0x10] sm:$0xf]
    %v1268 = vld [vmem:[#allocation10 + $0x14] sm:$0xf]
    %v1269 = vld [vmem:[#allocation10 + $0x18] sm:$0xf]
    %v1270 = vld [vmem:[#allocation10 + $0x1c] sm:$0xf]
    %v1271 = vld [vmem:[#allocation10 + $0x20] sm:$0xf]
    %v1272 = vld [vmem:[#allocation10 + $0x24] sm:$0xf]
    %v1273 = vld [vmem:[#allocation10 + $0x28] sm:$0xf]
    %v1274 = vld [vmem:[#allocation10 + $0x2c] sm:$0xf]
    %v1275 = vld [vmem:[#allocation10 + $0x30] sm:$0xf]
    %v1276 = vld [vmem:[#allocation10 + $0x34] sm:$0xf]
    %v1277 = vld [vmem:[#allocation10 + $0x38] sm:$0xf]
    %v1278 = vld [vmem:[#allocation10 + $0x3c] sm:$0xf]
    %v1279 = vld [vmem:[#allocation10 + $0x40] sm:$0xf]
    %v1280 = vld [vmem:[#allocation10 + $0x44] sm:$0xf]
    %v1281 = vld [vmem:[#allocation10 + $0x48] sm:$0xf]
    %v1282 = vld [vmem:[#allocation10 + $0x4c] sm:$0xf]
    %v1283 = vld [vmem:[#allocation10 + $0x50] sm:$0xf]
    %v1284 = vld [vmem:[#allocation10 + $0x54] sm:$0xf]
    %v1285 = vld [vmem:[#allocation10 + $0x58] sm:$0xf]
    %v1286 = vld [vmem:[#allocation10 + $0x5c] sm:$0xf]
    %v1287 = vld [vmem:[#allocation10 + $0x60] sm:$0xf]
    %v1288 = vld [vmem:[#allocation10 + $0x64] sm:$0xf]
    %v1289 = vld [vmem:[#allocation10 + $0x68] sm:$0xf]
    %v1290 = vld [vmem:[#allocation10 + $0x6c] sm:$0xf]
    %v1291 = vld [vmem:[#allocation10 + $0x70] sm:$0xf]
    %v1292 = vld [vmem:[#allocation10 + $0x74] sm:$0xf]
    %v1293 = vld [vmem:[#allocation10 + $0x78] sm:$0xf]
    %v1294 = vld [vmem:[#allocation10 + $0x7c] sm:$0xf]
    %v1295 = vld [vmem:[#allocation10 + $0x80] sm:$0xf]
    %v1296 = vld [vmem:[#allocation10 + $0x84] sm:$0xf]
    %v1297 = vld [vmem:[#allocation10 + $0x88] sm:$0xf]
    %v1298 = vld [vmem:[#allocation10 + $0x8c] sm:$0xf]
    %v1299 = vld [vmem:[#allocation10 + $0x90] sm:$0xf]
    %v1300 = vld [vmem:[#allocation10 + $0x94] sm:$0xf]
    %v1301 = vld [vmem:[#allocation10 + $0x98] sm:$0xf]
    %v1302 = vld [vmem:[#allocation10 + $0x9c] sm:$0xf]
    %v1303 = vld [vmem:[#allocation10 + $0xa0] sm:$0xf]
    %v1304 = vld [vmem:[#allocation10 + $0xa4] sm:$0xf]
    %v1305 = vld [vmem:[#allocation10 + $0xa8] sm:$0xf]
    %v1306 = vld [vmem:[#allocation10 + $0xac] sm:$0xf]
    %v1307 = vld [vmem:[#allocation10 + $0xb0] sm:$0xf]
    %v1308 = vld [vmem:[#allocation10 + $0xb4] sm:$0xf]
    %v1309 = vld [vmem:[#allocation10 + $0xb8] sm:$0xf]
    %v1310 = vld [vmem:[#allocation10 + $0xbc] sm:$0xf]
    %v1311 = vld [vmem:[#allocation10 + $0xc0] sm:$0xf]
    %v1312 = vld [vmem:[#allocation10 + $0xc4] sm:$0xf]
    %v1313 = vld [vmem:[#allocation10 + $0xc8] sm:$0xf]
    %v1314 = vld [vmem:[#allocation10 + $0xcc] sm:$0xf]
    %v1315 = vld [vmem:[#allocation10 + $0xd0] sm:$0xf]
    %v1316 = vld [vmem:[#allocation10 + $0xd4] sm:$0xf]
    %v1317 = vld [vmem:[#allocation10 + $0xd8] sm:$0xf]
    %v1318 = vld [vmem:[#allocation10 + $0xdc] sm:$0xf]
    %v1319 = vld [vmem:[#allocation10 + $0xe0] sm:$0xf]
    %v1320 = vld [vmem:[#allocation10 + $0xe4] sm:$0xf]
    %v1321 = vld [vmem:[#allocation10 + $0xe8] sm:$0xf]
    %v1322 = vld [vmem:[#allocation10 + $0xec] sm:$0xf]
    %v1323 = vld [vmem:[#allocation10 + $0xf0] sm:$0xf]
    %v1324 = vld [vmem:[#allocation10 + $0xf4] sm:$0xf]
    %v1325 = vld [vmem:[#allocation10 + $0xf8] sm:$0xf]
    %v1326 = vld [vmem:[#allocation10 + $0xfc] sm:$0xf]
    %v1327 = vld [vmem:[%s6] sm:$0x1]
    %v1329 = vlaneseq
    %v1330 = vshrl.u32 %v1329, 7
    %v1331 = vsub.s32 0, %v1330
    %v1332 = vrot.slane %v1327, %v1331
    %v1398 = vunpack.c.l.b16 %v1263
    %v1399 = vunpack.c.l.b16 %v1264
    %v1400 = vunpack.c.l.b16 %v1265
    %v1401 = vunpack.c.l.b16 %v1266
    %v1402 = vunpack.c.l.b16 %v1267
    %v1403 = vunpack.c.l.b16 %v1268
    %v1404 = vunpack.c.l.b16 %v1269
    %v1405 = vunpack.c.l.b16 %v1270
    %v1406 = vunpack.c.l.b16 %v1271
    %v1407 = vunpack.c.l.b16 %v1272
    %v1408 = vunpack.c.l.b16 %v1273
    %v1409 = vunpack.c.l.b16 %v1274
    %v1410 = vunpack.c.l.b16 %v1275
    %v1411 = vunpack.c.l.b16 %v1276
    %v1412 = vunpack.c.l.b16 %v1277
    %v1413 = vunpack.c.l.b16 %v1278
    %v1414 = vunpack.c.l.b16 %v1279
    %v1415 = vunpack.c.l.b16 %v1280
    %v1416 = vunpack.c.l.b16 %v1281
    %v1417 = vunpack.c.l.b16 %v1282
    %v1418 = vunpack.c.l.b16 %v1283
    %v1419 = vunpack.c.l.b16 %v1284
    %v1420 = vunpack.c.l.b16 %v1285
    %v1421 = vunpack.c.l.b16 %v1286
    %v1422 = vunpack.c.l.b16 %v1287
    %v1423 = vunpack.c.l.b16 %v1288
    %v1424 = vunpack.c.l.b16 %v1289
    %v1425 = vunpack.c.l.b16 %v1290
    %v1426 = vunpack.c.l.b16 %v1291
    %v1427 = vunpack.c.l.b16 %v1292
    %v1428 = vunpack.c.l.b16 %v1293
    %v1429 = vunpack.c.l.b16 %v1294
    %v1430 = vunpack.c.l.b16 %v1295
    %v1431 = vunpack.c.l.b16 %v1296
    %v1432 = vunpack.c.l.b16 %v1297
    %v1433 = vunpack.c.l.b16 %v1298
    %v1434 = vunpack.c.l.b16 %v1299
    %v1435 = vunpack.c.l.b16 %v1300
    %v1436 = vunpack.c.l.b16 %v1301
    %v1437 = vunpack.c.l.b16 %v1302
    %v1438 = vunpack.c.l.b16 %v1303
    %v1439 = vunpack.c.l.b16 %v1304
    %v1440 = vunpack.c.l.b16 %v1305
    %v1441 = vunpack.c.l.b16 %v1306
    %v1442 = vunpack.c.l.b16 %v1307
    %v1443 = vunpack.c.l.b16 %v1308
    %v1444 = vunpack.c.l.b16 %v1309
    %v1445 = vunpack.c.l.b16 %v1310
    %v1446 = vunpack.c.l.b16 %v1311
    %v1447 = vunpack.c.l.b16 %v1312
    %v1448 = vunpack.c.l.b16 %v1313
    %v1449 = vunpack.c.l.b16 %v1314
    %v1450 = vunpack.c.l.b16 %v1315
    %v1451 = vunpack.c.l.b16 %v1316
    %v1452 = vunpack.c.l.b16 %v1317
    %v1453 = vunpack.c.l.b16 %v1318
    %v1454 = vunpack.c.l.b16 %v1319
    %v1455 = vunpack.c.l.b16 %v1320
    %v1456 = vunpack.c.l.b16 %v1321
    %v1457 = vunpack.c.l.b16 %v1322
    %v1458 = vunpack.c.l.b16 %v1323
    %v1459 = vunpack.c.l.b16 %v1324
    %v1460 = vunpack.c.l.b16 %v1325
    %v1461 = vunpack.c.l.b16 %v1326
    %v1462 = vpack.c.b16 %v1399, %v1398
    %v1463 = vpack.c.b16 %v1401, %v1400
    %v1464 = vpack.c.b16 %v1403, %v1402
    %v1465 = vpack.c.b16 %v1405, %v1404
    %v1466 = vpack.c.b16 %v1407, %v1406
    %v1467 = vpack.c.b16 %v1409, %v1408
    %v1468 = vpack.c.b16 %v1411, %v1410
    %v1469 = vpack.c.b16 %v1413, %v1412
    %v1470 = vpack.c.b16 %v1415, %v1414
    %v1471 = vpack.c.b16 %v1417, %v1416
    %v1472 = vpack.c.b16 %v1419, %v1418
    %v1473 = vpack.c.b16 %v1421, %v1420
    %v1474 = vpack.c.b16 %v1423, %v1422
    %v1475 = vpack.c.b16 %v1425, %v1424
    %v1476 = vpack.c.b16 %v1427, %v1426
    %v1477 = vpack.c.b16 %v1429, %v1428
    %v1478 = vpack.c.b16 %v1431, %v1430
    %v1479 = vpack.c.b16 %v1433, %v1432
    %v1480 = vpack.c.b16 %v1435, %v1434
    %v1481 = vpack.c.b16 %v1437, %v1436
    %v1482 = vpack.c.b16 %v1439, %v1438
    %v1483 = vpack.c.b16 %v1441, %v1440
    %v1484 = vpack.c.b16 %v1443, %v1442
    %v1485 = vpack.c.b16 %v1445, %v1444
    %v1486 = vpack.c.b16 %v1447, %v1446
    %v1487 = vpack.c.b16 %v1449, %v1448
    %v1488 = vpack.c.b16 %v1451, %v1450
    %v1489 = vpack.c.b16 %v1453, %v1452
    %v1490 = vpack.c.b16 %v1455, %v1454
    %v1491 = vpack.c.b16 %v1457, %v1456
    %v1492 = vpack.c.b16 %v1459, %v1458
    %v1493 = vpack.c.b16 %v1461, %v1460
    %1526 = vmatprep.subr.bf16.mxu0 0
    %1527 = vmatpush1.bf16.msra.mxu0 %v1462
    %1528 = vmatprep.subr.bf16.mxu0 0
    %1529 = vmatpush1.bf16.msra.mxu0 %v1463
    %1530 = vmatprep.subr.bf16.mxu0 0
    %1531 = vmatpush1.bf16.msra.mxu0 %v1464
    %1532 = vmatprep.subr.bf16.mxu0 0
    %1533 = vmatpush1.bf16.msra.mxu0 %v1465
    %1534 = vmatprep.subr.bf16.mxu0 0
    %1535 = vmatpush1.bf16.msra.mxu0 %v1466
    %1536 = vmatprep.subr.bf16.mxu0 0
    %1537 = vmatpush1.bf16.msra.mxu0 %v1467
    %1538 = vmatprep.subr.bf16.mxu0 0
    %1539 = vmatpush1.bf16.msra.mxu0 %v1468
    %1540 = vmatprep.subr.bf16.mxu0 0
    %1541 = vmatpush1.bf16.msra.mxu0 %v1469
    %1542 = vmatprep.subr.bf16.mxu0 0
    %1543 = vmatpush1.bf16.msra.mxu0 %v1470
    %1544 = vmatprep.subr.bf16.mxu0 0
    %1545 = vmatpush1.bf16.msra.mxu0 %v1471
    %1546 = vmatprep.subr.bf16.mxu0 0
    %1547 = vmatpush1.bf16.msra.mxu0 %v1472
    %1548 = vmatprep.subr.bf16.mxu0 0
    %1549 = vmatpush1.bf16.msra.mxu0 %v1473
    %1550 = vmatprep.subr.bf16.mxu0 0
    %1551 = vmatpush1.bf16.msra.mxu0 %v1474
    %1552 = vmatprep.subr.bf16.mxu0 0
    %1553 = vmatpush1.bf16.msra.mxu0 %v1475
    %1554 = vmatprep.subr.bf16.mxu0 0
    %1555 = vmatpush1.bf16.msra.mxu0 %v1476
    %1556 = vmatprep.subr.bf16.mxu0 0
    %1557 = vmatpush1.bf16.msra.mxu0 %v1477
    %1558 = vmatprep.mubr.bf16.mxu0 %v1260
    %1559 = vmatmul.mubr.bf16.gmra.mrb[0].mxu0 %v1259
    %v1560 = vpop.f32.mrb[0].mxu0
    %v1561 = vadd.f32 %v1332, %v1560
    %v1562 = vpop.f32.mrb[0].mxu0
    %v1563 = vpop.f32.mrb[0].mxu0
    %v1564 = vpop.f32.mrb[0].mxu0
    %1565 = vdwg.mxu0
    %1566 = vmatprep.subr.bf16.mxu0 0
    %1567 = vmatpush1.bf16.msra.mxu0 %v1478
    %1568 = vmatprep.subr.bf16.mxu0 0
    %1569 = vmatpush1.bf16.msra.mxu0 %v1479
    %1570 = vmatprep.subr.bf16.mxu0 0
    %1571 = vmatpush1.bf16.msra.mxu0 %v1480
    %1572 = vmatprep.subr.bf16.mxu0 0
    %1573 = vmatpush1.bf16.msra.mxu0 %v1481
    %1574 = vmatprep.subr.bf16.mxu0 0
    %1575 = vmatpush1.bf16.msra.mxu0 %v1482
    %1576 = vmatprep.subr.bf16.mxu0 0
    %1577 = vmatpush1.bf16.msra.mxu0 %v1483
    %1578 = vmatprep.subr.bf16.mxu0 0
    %1579 = vmatpush1.bf16.msra.mxu0 %v1484
    %1580 = vmatprep.subr.bf16.mxu0 0
    %1581 = vmatpush1.bf16.msra.mxu0 %v1485
    %1582 = vmatprep.subr.bf16.mxu0 0
    %1583 = vmatpush1.bf16.msra.mxu0 %v1486
    %1584 = vmatprep.subr.bf16.mxu0 0
    %1585 = vmatpush1.bf16.msra.mxu0 %v1487
    %1586 = vmatprep.subr.bf16.mxu0 0
    %1587 = vmatpush1.bf16.msra.mxu0 %v1488
    %1588 = vmatprep.subr.bf16.mxu0 0
    %1589 = vmatpush1.bf16.msra.mxu0 %v1489
    %1590 = vmatprep.subr.bf16.mxu0 0
    %1591 = vmatpush1.bf16.msra.mxu0 %v1490
    %1592 = vmatprep.subr.bf16.mxu0 0
    %1593 = vmatpush1.bf16.msra.mxu0 %v1491
    %1594 = vmatprep.subr.bf16.mxu0 0
    %1595 = vmatpush1.bf16.msra.mxu0 %v1492
    %1596 = vmatprep.subr.bf16.mxu0 0
    %1597 = vmatpush1.bf16.msra.mxu0 %v1493
    %1598 = vmatprep.mubr.bf16.mxu0 %v1262
    %1599 = vmatmul.mubr.bf16.gmra.mrb[0].mxu0 %v1261
    %v1600 = vpop.f32.mrb[0].mxu0
    %v1601 = vadd.f32 %v1561, %v1600
    %v1602 = vpop.f32.mrb[0].mxu0
    %v1603 = vpop.f32.mrb[0].mxu0
    %v1604 = vpop.f32.mrb[0].mxu0
    %1605 = vdwg.mxu0
    %vm1606 = vcmp.lt.s32.totalorder %v544, 32
    %v1607 = vsel %vm1606, 1, 0
    %v1608 = vcvt.s32.f32 %v1607
    %v1609 = vadd.f32 %v145, %v1601
    %v1610 = vld [vmem:[%s7] sm:$0x1]
    %v1611 = vld [vmem:[%s8] sm:$0x1]
    %1612 = vadd.xlane.f32.xlu0 %v1609
    %v1613 = vpop.xlane.xlu0 %1612
    %v1614 = vmul.f32 %v1613, 0.03125
    %v1615 = vsub.f32 %v1609, %v1614
    %v1616 = vmul.f32 %v1615, %v1608
    %v1617 = vmul.f32 %v1616, %v1616
    %1618 = vadd.xlane.f32.xlu0 %v1617
    %v1619 = vpop.xlane.xlu0 %1618
    %v1620 = vmul.f32 %v1619, 0.03125
    %v1621 = vadd.f32 %v1620, 1e-05
    %v1622 = vrsqrt.pop %v1621
    %v1623 = vmul.f32 %v1616, %v1622
    %v1625 = vlaneseq
    %v1626 = vshrl.u32 %v1625, 7
    %v1627 = vsub.s32 0, %v1626
    %v1628 = vrot.slane %v1610, %v1627
    %v1630 = vmul.f32 %v1623, %v1628
    %v1632 = vlaneseq
    %v1633 = vshrl.u32 %v1632, 7
    %v1634 = vsub.s32 0, %v1633
    %v1635 = vrot.slane %v1611, %v1634
    %v1637 = vadd.f32 %v1630, %v1635
    %v1638 = vpack.c.bf16 %v1637, %v1637
    %v1639 = vld [vmem:[#allocation11] sm:$0xf]
    %v1640 = vld [vmem:[#allocation11 + $0x4] sm:$0xf]
    %v1641 = vld [vmem:[#allocation11 + $0x8] sm:$0xf]
    %v1642 = vld [vmem:[#allocation11 + $0xc] sm:$0xf]
    %v1643 = vld [vmem:[#allocation11 + $0x10] sm:$0xf]
    %v1644 = vld [vmem:[#allocation11 + $0x14] sm:$0xf]
    %v1645 = vld [vmem:[#allocation11 + $0x18] sm:$0xf]
    %v1646 = vld [vmem:[#allocation11 + $0x1c] sm:$0xf]
    %v1647 = vld [vmem:[#allocation11 + $0x20] sm:$0xf]
    %v1648 = vld [vmem:[#allocation11 + $0x24] sm:$0xf]
    %v1649 = vld [vmem:[#allocation11 + $0x28] sm:$0xf]
    %v1650 = vld [vmem:[#allocation11 + $0x2c] sm:$0xf]
    %v1651 = vld [vmem:[#allocation11 + $0x30] sm:$0xf]
    %v1652 = vld [vmem:[#allocation11 + $0x34] sm:$0xf]
    %v1653 = vld [vmem:[#allocation11 + $0x38] sm:$0xf]
    %v1654 = vld [vmem:[#allocation11 + $0x3c] sm:$0xf]
    %v1655 = vld [vmem:[%s10] sm:$0x1]
    %v1657 = vlaneseq
    %v1658 = vshrl.u32 %v1657, 7
    %v1659 = vsub.s32 0, %v1658
    %v1660 = vrot.slane %v1655, %v1659
    %v1678 = vunpack.c.l.b16 %v1639
    %v1679 = vunpack.c.l.b16 %v1640
    %v1680 = vunpack.c.l.b16 %v1641
    %v1681 = vunpack.c.l.b16 %v1642
    %v1682 = vunpack.c.l.b16 %v1643
    %v1683 = vunpack.c.l.b16 %v1644
    %v1684 = vunpack.c.l.b16 %v1645
    %v1685 = vunpack.c.l.b16 %v1646
    %v1686 = vunpack.c.l.b16 %v1647
    %v1687 = vunpack.c.l.b16 %v1648
    %v1688 = vunpack.c.l.b16 %v1649
    %v1689 = vunpack.c.l.b16 %v1650
    %v1690 = vunpack.c.l.b16 %v1651
    %v1691 = vunpack.c.l.b16 %v1652
    %v1692 = vunpack.c.l.b16 %v1653
    %v1693 = vunpack.c.l.b16 %v1654
    %v1694 = vpack.c.b16 %v1679, %v1678
    %v1695 = vpack.c.b16 %v1681, %v1680
    %v1696 = vpack.c.b16 %v1683, %v1682
    %v1697 = vpack.c.b16 %v1685, %v1684
    %v1698 = vpack.c.b16 %v1687, %v1686
    %v1699 = vpack.c.b16 %v1689, %v1688
    %v1700 = vpack.c.b16 %v1691, %v1690
    %v1701 = vpack.c.b16 %v1693, %v1692
    %1710 = vmatprep.subr.bf16.mxu0 0
    %1711 = vmatpush1.bf16.msra.mxu0 %v1694
    %1712 = vmatprep.subr.bf16.mxu0 0
    %1713 = vmatpush1.bf16.msra.mxu0 %v1695
    %1714 = vmatprep.subr.bf16.mxu0 0
    %1715 = vmatpush1.bf16.msra.mxu0 %v1696
    %1716 = vmatprep.subr.bf16.mxu0 0
    %1717 = vmatpush1.bf16.msra.mxu0 %v1697
    %1718 = vmatprep.subr.bf16.mxu0 0
    %1719 = vmatpush1.bf16.msra.mxu0 %v1698
    %1720 = vmatprep.subr.bf16.mxu0 0
    %1721 = vmatpush1.bf16.msra.mxu0 %v1699
    %1722 = vmatprep.subr.bf16.mxu0 0
    %1723 = vmatpush1.bf16.msra.mxu0 %v1700
    %1724 = vmatprep.subr.bf16.mxu0 0
    %1725 = vmatpush1.bf16.msra.mxu0 %v1701
    %1726 = vmatprep.subr.bf16.mxu0 0
    %1727 = vmatpush1.bf16.msra.mxu0 0
    %1728 = vmatprep.subr.bf16.mxu0 0
    %1729 = vmatpush1.bf16.msra.mxu0 0
    %1730 = vmatprep.subr.bf16.mxu0 0
    %1731 = vmatpush1.bf16.msra.mxu0 0
    %1732 = vmatprep.subr.bf16.mxu0 0
    %1733 = vmatpush1.bf16.msra.mxu0 0
    %1734 = vmatprep.subr.bf16.mxu0 0
    %1735 = vmatpush1.bf16.msra.mxu0 0
    %1736 = vmatprep.subr.bf16.mxu0 0
    %1737 = vmatpush1.bf16.msra.mxu0 0
    %1738 = vmatprep.subr.bf16.mxu0 0
    %1739 = vmatpush1.bf16.msra.mxu0 0
    %1740 = vmatprep.subr.bf16.mxu0 0
    %1741 = vmatpush1.bf16.msra.mxu0 0
    %1742 = vmatprep.mubr.bf16.mxu0 0
    %1743 = vmatmul.mubr.bf16.gmra.mrb[0].mxu0 %v1638
    %v1744 = vpop.f32.mrb[0].mxu0
    %v1745 = vadd.f32 %v1660, %v1744
    %v1746 = vpop.f32.mrb[0].mxu0
    %v1747 = vpop.f32.mrb[0].mxu0
    %v1748 = vpop.f32.mrb[0].mxu0
    %1749 = vdwg.mxu0
    %v1750 = vmax.f32 %v1745, 0.0
    %v1751 = vpack.c.bf16 %v1750, %v1750
    %v1752 = vld [vmem:[#allocation13] sm:$0xf]
    %v1753 = vld [vmem:[#allocation13 + $0x4] sm:$0xf]
    %v1754 = vld [vmem:[#allocation13 + $0x8] sm:$0xf]
    %v1755 = vld [vmem:[#allocation13 + $0xc] sm:$0xf]
    %v1756 = vld [vmem:[#allocation13 + $0x10] sm:$0xf]
    %v1757 = vld [vmem:[#allocation13 + $0x14] sm:$0xf]
    %v1758 = vld [vmem:[#allocation13 + $0x18] sm:$0xf]
    %v1759 = vld [vmem:[#allocation13 + $0x1c] sm:$0xf]
    %v1760 = vld [vmem:[#allocation13 + $0x20] sm:$0xf]
    %v1761 = vld [vmem:[#allocation13 + $0x24] sm:$0xf]
    %v1762 = vld [vmem:[#allocation13 + $0x28] sm:$0xf]
    %v1763 = vld [vmem:[#allocation13 + $0x2c] sm:$0xf]
    %v1764 = vld [vmem:[#allocation13 + $0x30] sm:$0xf]
    %v1765 = vld [vmem:[#allocation13 + $0x34] sm:$0xf]
    %v1766 = vld [vmem:[#allocation13 + $0x38] sm:$0xf]
    %v1767 = vld [vmem:[#allocation13 + $0x3c] sm:$0xf]
    %v1768 = vld [vmem:[%s12] sm:$0x1]
    %v1770 = vlaneseq
    %v1771 = vshrl.u32 %v1770, 7
    %v1772 = vsub.s32 0, %v1771
    %v1773 = vrot.slane %v1768, %v1772
    %v1791 = vunpack.c.l.b16 %v1752
    %v1792 = vunpack.c.l.b16 %v1753
    %v1793 = vunpack.c.l.b16 %v1754
    %v1794 = vunpack.c.l.b16 %v1755
    %v1795 = vunpack.c.l.b16 %v1756
    %v1796 = vunpack.c.l.b16 %v1757
    %v1797 = vunpack.c.l.b16 %v1758
    %v1798 = vunpack.c.l.b16 %v1759
    %v1799 = vunpack.c.l.b16 %v1760
    %v1800 = vunpack.c.l.b16 %v1761
    %v1801 = vunpack.c.l.b16 %v1762
    %v1802 = vunpack.c.l.b16 %v1763
    %v1803 = vunpack.c.l.b16 %v1764
    %v1804 = vunpack.c.l.b16 %v1765
    %v1805 = vunpack.c.l.b16 %v1766
    %v1806 = vunpack.c.l.b16 %v1767
    %v1807 = vpack.c.b16 %v1792, %v1791
    %v1808 = vpack.c.b16 %v1794, %v1793
    %v1809 = vpack.c.b16 %v1796, %v1795
    %v1810 = vpack.c.b16 %v1798, %v1797
    %v1811 = vpack.c.b16 %v1800, %v1799
    %v1812 = vpack.c.b16 %v1802, %v1801
    %v1813 = vpack.c.b16 %v1804, %v1803
    %v1814 = vpack.c.b16 %v1806, %v1805
    %1823 = vmatprep.subr.bf16.mxu0 0
    %1824 = vmatpush1.bf16.msra.mxu0 %v1807
    %1825 = vmatprep.subr.bf16.mxu0 0
    %1826 = vmatpush1.bf16.msra.mxu0 %v1808
    %1827 = vmatprep.subr.bf16.mxu0 0
    %1828 = vmatpush1.bf16.msra.mxu0 %v1809
    %1829 = vmatprep.subr.bf16.mxu0 0
    %1830 = vmatpush1.bf16.msra.mxu0 %v1810
    %1831 = vmatprep.subr.bf16.mxu0 0
    %1832 = vmatpush1.bf16.msra.mxu0 %v1811
    %1833 = vmatprep.subr.bf16.mxu0 0
    %1834 = vmatpush1.bf16.msra.mxu0 %v1812
    %1835 = vmatprep.subr.bf16.mxu0 0
    %1836 = vmatpush1.bf16.msra.mxu0 %v1813
    %1837 = vmatprep.subr.bf16.mxu0 0
    %1838 = vmatpush1.bf16.msra.mxu0 %v1814
    %1839 = vmatprep.subr.bf16.mxu0 0
    %1840 = vmatpush1.bf16.msra.mxu0 0
    %1841 = vmatprep.subr.bf16.mxu0 0
    %1842 = vmatpush1.bf16.msra.mxu0 0
    %1843 = vmatprep.subr.bf16.mxu0 0
    %1844 = vmatpush1.bf16.msra.mxu0 0
    %1845 = vmatprep.subr.bf16.mxu0 0
    %1846 = vmatpush1.bf16.msra.mxu0 0
    %1847 = vmatprep.subr.bf16.mxu0 0
    %1848 = vmatpush1.bf16.msra.mxu0 0
    %1849 = vmatprep.subr.bf16.mxu0 0
    %1850 = vmatpush1.bf16.msra.mxu0 0
    %1851 = vmatprep.subr.bf16.mxu0 0
    %1852 = vmatpush1.bf16.msra.mxu0 0
    %1853 = vmatprep.subr.bf16.mxu0 0
    %1854 = vmatpush1.bf16.msra.mxu0 0
    %1855 = vmatprep.mubr.bf16.mxu0 0
    %1856 = vmatmul.mubr.bf16.gmra.mrb[0].mxu0 %v1751
    %v1857 = vpop.f32.mrb[0].mxu0
    %v1858 = vadd.f32 %v1773, %v1857
    %v1859 = vpop.f32.mrb[0].mxu0
    %v1860 = vpop.f32.mrb[0].mxu0
    %v1861 = vpop.f32.mrb[0].mxu0
    %1862 = vdwg.mxu0
    %v1863 = vadd.f32 %v1637, %v1858
    %v1864 = vld [vmem:[%s13] sm:$0x1]
    %v1865 = vld [vmem:[%s14] sm:$0x1]
    %1866 = vadd.xlane.f32.xlu0 %v1863
    %v1867 = vpop.xlane.xlu0 %1866
    %v1868 = vmul.f32 %v1867, 0.03125
    %v1869 = vsub.f32 %v1863, %v1868
    %v1870 = vmul.f32 %v1869, %v1608
    %v1871 = vmul.f32 %v1870, %v1870
    %1872 = vadd.xlane.f32.xlu0 %v1871
    %v1873 = vpop.xlane.xlu0 %1872
    %v1874 = vmul.f32 %v1873, 0.03125
    %v1875 = vadd.f32 %v1874, 1e-05
    %v1876 = vrsqrt.pop %v1875
    %v1877 = vmul.f32 %v1870, %v1876
    %v1879 = vlaneseq
    %v1880 = vshrl.u32 %v1879, 7
    %v1881 = vsub.s32 0, %v1880
    %v1882 = vrot.slane %v1864, %v1881
    %v1884 = vmul.f32 %v1877, %v1882
    %v1886 = vlaneseq
    %v1887 = vshrl.u32 %v1886, 7
    %v1888 = vsub.s32 0, %v1887
    %v1889 = vrot.slane %v1865, %v1888
    %v1891 = vadd.f32 %v1884, %v1889
    %1892 = vst [vmem:[#allocation14] sm:$0xff] %v1891
    // Predicated region
    $region90: #{tpu_custom_call.1} parent=1 // pred_check
      _
    $region91: #{tpu_custom_call.1} parent=1 // pred_check_branch
      %1894 = sbr.rel (0) target = $region93
    $region92: #{tpu_custom_call.1} parent=1 // pred_region
      %s1896 = ssub.s32 128, 128
      %1897 = vsyncadd [#allocation4], %s1896
      %s1899 = sshll.u32 [#allocation14], 4
      %s1900 = int_to_ptr.vmem [resolvable:$true] %s1899
      %1902 = dma.vmem_to_hbm [thread:$0]  %s1900, 128, %s15, [#allocation4]
    $region93: #{tpu_custom_call.1} parent=1 // pred_fallthru
      _
    // Predicated region
    $region94: #{tpu_custom_call.1} parent=1 // pred_check
      _
    $region95: #{tpu_custom_call.1} parent=1 // pred_check_branch
      %1904 = sbr.rel (0) target = $region97
    $region96: #{tpu_custom_call.1} parent=1 // pred_region
      %1905 = dma.done [#allocation4], 128
    $region97: #{tpu_custom_call.1} parent=1 // pred_fallthru
      _
    %1906 = vsyncpa [#allocation3], 1
    %1907 = vsyncpa [#allocation6], 1
    %1908 = vsyncpa [#allocation9], 1
    %1909 = vsyncpa [#allocation12], 1
    %1910 = vsyncpa [#allocation4], 1

</llo_original>
